<compile_context>
chip_gen: v7x
topology: tpu7x:2x2x1
jax: 0.10.0
libtpu: 0.0.40
codegen_flags: <defaults>
</compile_context>

<pallas_src>
import math

import jax
import jax.numpy as jnp
from jax import lax
from jax.experimental import pallas as pl
from jax.experimental.pallas import tpu as pltpu

HIDDEN = 640


def mlp_kernel(x_ref, w1_ref, b1_ref, w2_ref, b2_ref, w3_ref, b3_ref, o_ref):
    # x_ref: (1, TB) f32, lane-dense batch row.
    x_row = x_ref[...]

    # Layer 1 (VPU only): (H,1) * (1,TB) + (H,1) -> (H,TB).
    # A (B,1)@(1,H) matmul would pad K=1 up to 128/256 on the MXU for nothing.
    h1 = jnp.maximum(w1_ref[...] * x_row + b1_ref[...], 0.0)

    # Layer 2 (MXU): bf16 weights x bf16 activations, f32 accumulate.
    h2 = jnp.dot(w2_ref[...], h1.astype(jnp.bfloat16),
                 preferred_element_type=jnp.float32)
    h2 = jnp.maximum(h2 + b2_ref[...], 0.0)

    # Layer 3 (VPU mul + XLU reduce): avoids an N=1 MXU matmul and writes a
    # lane-dense (1, TB) output row.
    out = jnp.sum(w3_ref[...] * h2, axis=0, keepdims=True) + b3_ref[0]
    o_ref[...] = out.astype(o_ref.dtype)


def simple_net_forward(x, params, *, max_batch_tile=1024):
    """x: (B, 1) float32 -> (B, 1) float32."""
    w1, b1, w2, b2, w3, b3 = params
    H = w2.shape[0]
    B = x.shape[0]

    # Put the batch on the lane axis and pad to whole lane-dense tiles.
    lane = 128
    Bp = ((B + lane - 1) // lane) * lane
    TB = min(Bp, max_batch_tile)
    Bp = ((Bp + TB - 1) // TB) * TB
    x_row = jnp.pad(x.reshape(1, B).astype(jnp.float32), ((0, 0), (0, Bp - B)))

    const = lambda i: (0, 0)
    out_row = pl.pallas_call(
        mlp_kernel,
        out_shape=jax.ShapeDtypeStruct((1, Bp), jnp.float32),
        grid=(Bp // TB,),
        in_specs=[
            pl.BlockSpec((1, TB), lambda i: (0, i)),            # x (lane-dense)
            pl.BlockSpec((H, 1), const),                        # fc1.weight (H,1)
            pl.BlockSpec((H, 1), const),                        # fc1.bias   (H,1)
            pl.BlockSpec((H, H), const),                        # fc2.weight bf16
            pl.BlockSpec((H, 1), const),                        # fc2.bias   (H,1)
            pl.BlockSpec((H, 1), const),                        # fc3.weight (H,1)
            pl.BlockSpec(memory_space=pltpu.MemorySpace.SMEM),  # fc3.bias   (1,)
        ],
        out_specs=pl.BlockSpec((1, TB), lambda i: (0, i)),
        compiler_params=pltpu.CompilerParams(
            dimension_semantics=("parallel",)),
    )(x_row, w1, b1, w2, b2, w3, b3)

    return out_row[:, :B].reshape(B, 1)


def init_params(key):
    """Deterministic init mimicking torch.nn.Linear's default
    U(-1/sqrt(fan_in), 1/sqrt(fan_in)).  Layouts used by the kernel:
    w1/b1/b2: (H,1) f32, w2: (H,H) bf16 (out,in), w3: (H,1) f32, b3: (1,) f32."""
    H = HIDDEN
    k1w, k1b, k2w, k2b, k3w, k3b = jax.random.split(key, 6)

    def u(k, shape, bound):
        return jax.random.uniform(k, shape, jnp.float32, -bound, bound)

    bound1 = 1.0                    # fan_in = 1
    bound2 = 1.0 / math.sqrt(H)     # fan_in = 640
    w1 = u(k1w, (H, 1), bound1)                        # fc1.weight (out, in)
    b1 = u(k1b, (H, 1), bound1)                        # fc1.bias as column
    w2 = u(k2w, (H, H), bound2).astype(jnp.bfloat16)   # fc2.weight (out, in), bf16
    b2 = u(k2b, (H, 1), bound2)                        # fc2.bias as column
    w3 = u(k3w, (H, 1), bound2)                        # fc3.weight stored (in, out=1)
    b3 = u(k3b, (1,), bound2)                          # fc3.bias (scalar)
    return w1, b1, w2, b2, w3, b3


def reference_forward(x, params):
    """Pure-JAX reference in standard (batch, features) orientation, applying
    the same bf16 quantization of the fc2 weight / layer-1 activation."""
    w1, b1, w2, b2, w3, b3 = params
    h1 = jnp.maximum(x * w1.T + b1.T, 0.0)                        # (B, H)
    h1 = h1.astype(jnp.bfloat16).astype(jnp.float32)
    h2 = jnp.maximum(
        jnp.dot(h1, w2.astype(jnp.float32).T,
                precision=lax.Precision.HIGHEST) + b2.T, 0.0)     # (B, H)
    return jnp.dot(h2, w3, precision=lax.Precision.HIGHEST) + b3  # (B, 1)


if __name__ == "__main__":
    key = jax.random.PRNGKey(0)
    k_params, k_x = jax.random.split(key)
    params = init_params(k_params)

    # Small batch of scalar inputs in [0, 2*pi), like the sin-fitting task.
    B = 128
    x = jax.random.uniform(k_x, (B, 1), jnp.float32, 0.0, 2.0 * math.pi)

    out = jax.block_until_ready(simple_net_forward(x, params))
    ref = reference_forward(x, params)

    assert out.shape == (B, 1)
    max_err = float(jnp.max(jnp.abs(out - ref)))
    assert jnp.allclose(out, ref, atol=1e-3, rtol=1e-3), f"max abs err {max_err}"

    print("KERNEL_OK")
</pallas_src>

<mosaic_0001>
module attributes {stable_mosaic.version = 11 : i64} {
  func.func @mlp_kernel(%arg0: i32, %arg1: memref<1x128xf32, #tpu.memory_space<vmem>>, %arg2: memref<640x1xf32, #tpu.memory_space<vmem>>, %arg3: memref<640x1xf32, #tpu.memory_space<vmem>>, %arg4: memref<640x640xbf16, #tpu.memory_space<vmem>>, %arg5: memref<640x1xf32, #tpu.memory_space<vmem>>, %arg6: memref<640x1xf32, #tpu.memory_space<vmem>>, %arg7: memref<1xf32, #tpu.memory_space<smem>>, %arg8: memref<1x128xf32, #tpu.memory_space<vmem>>) attributes {dimension_semantics = [#tpu.dimension_semantics<parallel>], iteration_bounds = array<i64: 1>, scalar_prefetch = 0 : i64, scratch_operands = 0 : i64, tpu.core_type = #tpu.core_type<tc>, window_params = [{transform_indices = @transform_0, window_bounds = array<i64: 1, 128>}, {pipeline_mode = #tpu.pipeline_mode<synchronous>, transform_indices = @transform_1, window_bounds = array<i64: 640, 1>}, {pipeline_mode = #tpu.pipeline_mode<synchronous>, transform_indices = @transform_2, window_bounds = array<i64: 640, 1>}, {pipeline_mode = #tpu.pipeline_mode<synchronous>, transform_indices = @transform_3, window_bounds = array<i64: 640, 640>}, {pipeline_mode = #tpu.pipeline_mode<synchronous>, transform_indices = @transform_4, window_bounds = array<i64: 640, 1>}, {pipeline_mode = #tpu.pipeline_mode<synchronous>, transform_indices = @transform_5, window_bounds = array<i64: 640, 1>}, {transform_indices = @transform_6, window_bounds = array<i64: 1>}, {transform_indices = @transform_7, window_bounds = array<i64: 1, 128>}]} {
    %c0 = arith.constant 0 : index
    %c0_0 = arith.constant 0 : index
    %0 = vector.load %arg1[%c0, %c0_0] : memref<1x128xf32, #tpu.memory_space<vmem>>, vector<1x128xf32>
    %c0_1 = arith.constant 0 : index
    %c0_2 = arith.constant 0 : index
    %1 = vector.load %arg2[%c0_1, %c0_2] : memref<640x1xf32, #tpu.memory_space<vmem>>, vector<640x1xf32>
    %2 = vector.broadcast %1 : vector<640x1xf32> to vector<640x128xf32>
    %3 = vector.broadcast %0 : vector<1x128xf32> to vector<640x128xf32>
    %4 = arith.mulf %2, %3 : vector<640x128xf32>
    %c0_3 = arith.constant 0 : index
    %c0_4 = arith.constant 0 : index
    %5 = vector.load %arg3[%c0_3, %c0_4] : memref<640x1xf32, #tpu.memory_space<vmem>>, vector<640x1xf32>
    %6 = vector.broadcast %5 : vector<640x1xf32> to vector<640x128xf32>
    %7 = arith.addf %4, %6 : vector<640x128xf32>
    %cst = arith.constant 0.000000e+00 : f32
    %8 = vector.broadcast %cst : f32 to vector<640x128xf32>
    %9 = arith.maximumf %7, %8 : vector<640x128xf32>
    %c0_5 = arith.constant 0 : index
    %c0_6 = arith.constant 0 : index
    %10 = vector.load %arg4[%c0_5, %c0_6] : memref<640x640xbf16, #tpu.memory_space<vmem>>, vector<640x640xbf16>
    %11 = arith.truncf %9 : vector<640x128xf32> to vector<640x128xbf16>
    %cst_7 = arith.constant dense<0.000000e+00> : vector<640x128xf32>
    %12 = tpu.matmul %10, %11, %cst_7 {dimension_numbers = #tpu.dot_dimension_numbers<[1], [0], [0], [1], [0, 0, 1, 1], [], []>} : vector<640x640xbf16>, vector<640x128xbf16>, vector<640x128xf32> -> vector<640x128xf32>
    %c0_8 = arith.constant 0 : index
    %c0_9 = arith.constant 0 : index
    %13 = vector.load %arg5[%c0_8, %c0_9] : memref<640x1xf32, #tpu.memory_space<vmem>>, vector<640x1xf32>
    %14 = vector.broadcast %13 : vector<640x1xf32> to vector<640x128xf32>
    %15 = arith.addf %12, %14 : vector<640x128xf32>
    %cst_10 = arith.constant 0.000000e+00 : f32
    %16 = vector.broadcast %cst_10 : f32 to vector<640x128xf32>
    %17 = arith.maximumf %15, %16 : vector<640x128xf32>
    %c0_11 = arith.constant 0 : index
    %c0_12 = arith.constant 0 : index
    %18 = vector.load %arg6[%c0_11, %c0_12] : memref<640x1xf32, #tpu.memory_space<vmem>>, vector<640x1xf32>
    %19 = vector.broadcast %18 : vector<640x1xf32> to vector<640x128xf32>
    %20 = arith.mulf %19, %17 : vector<640x128xf32>
    %cst_13 = arith.constant dense<0.000000e+00> : vector<128xf32>
    %21 = vector.multi_reduction <add>, %20, %cst_13 [0] : vector<640x128xf32> to vector<128xf32>
    %22 = vector.shape_cast %21 : vector<128xf32> to vector<1x128xf32>
    %c0_14 = arith.constant 0 : index
    %23 = memref.load %arg7[%c0_14] : memref<1xf32, #tpu.memory_space<smem>>
    %24 = vector.broadcast %23 : f32 to vector<1x128xf32>
    %25 = arith.addf %22, %24 : vector<1x128xf32>
    %c0_15 = arith.constant 0 : index
    %c0_16 = arith.constant 0 : index
    %26 = vector.load %arg8[%c0_15, %c0_16] : memref<1x128xf32, #tpu.memory_space<vmem>>, vector<1x128xf32>
    tpu.vector_store %arg8[%c0_15, %c0_16], %25 {strides = array<i32>} : memref<1x128xf32, #tpu.memory_space<vmem>>, vector<1x128xf32>,
    return
  }
  func.func @transform_0(%arg0: i32) -> (i32, i32) {
    %c0_i32 = arith.constant 0 : i32
    %c0_i32_0 = arith.constant 0 : i32
    return %c0_i32, %arg0 : i32, i32
  }
  func.func @transform_1(%arg0: i32) -> (i32, i32) {
    %c0_i32 = arith.constant 0 : i32
    %c0_i32_0 = arith.constant 0 : i32
    %c0_i32_1 = arith.constant 0 : i32
    return %c0_i32, %c0_i32_0 : i32, i32
  }
  func.func @transform_2(%arg0: i32) -> (i32, i32) {
    %c0_i32 = arith.constant 0 : i32
    %c0_i32_0 = arith.constant 0 : i32
    %c0_i32_1 = arith.constant 0 : i32
    return %c0_i32, %c0_i32_0 : i32, i32
  }
  func.func @transform_3(%arg0: i32) -> (i32, i32) {
    %c0_i32 = arith.constant 0 : i32
    %c0_i32_0 = arith.constant 0 : i32
    %c0_i32_1 = arith.constant 0 : i32
    return %c0_i32, %c0_i32_0 : i32, i32
  }
  func.func @transform_4(%arg0: i32) -> (i32, i32) {
    %c0_i32 = arith.constant 0 : i32
    %c0_i32_0 = arith.constant 0 : i32
    %c0_i32_1 = arith.constant 0 : i32
    return %c0_i32, %c0_i32_0 : i32, i32
  }
  func.func @transform_5(%arg0: i32) -> (i32, i32) {
    %c0_i32 = arith.constant 0 : i32
    %c0_i32_0 = arith.constant 0 : i32
    %c0_i32_1 = arith.constant 0 : i32
    return %c0_i32, %c0_i32_0 : i32, i32
  }
  func.func @transform_6(%arg0: i32) -> i32 {
    %c0_i32 = arith.constant 0 : i32
    %c0_i32_0 = arith.constant 0 : i32
    return %c0_i32 : i32
  }
  func.func @transform_7(%arg0: i32) -> (i32, i32) {
    %c0_i32 = arith.constant 0 : i32
    %c0_i32_0 = arith.constant 0 : i32
    return %c0_i32, %arg0 : i32, i32
  }
}

</mosaic_0001>

<llo_original>
// kernel: tpu_custom_call.1
$region0: #{tpu_custom_call.1}
  #allocation0 [shape = 'u32[]', space=smem, size = 0x4, offset = 0x4, fixed_abs, tag = 'smem constant byte address 0x4 - core index']
  #allocation1 [shape = 'u32[144,128]{1,0:T(1,128)}', space=vmem, size = 0x12000, scoped, tag = 'internal scratch']
  #allocation2 [shape = 'f32[1]{0:T(128)S(6)}', space=smem, size = 0x200, scoped, tag = 'scoped memory for tpu_custom_call.1']
  %s0 = inlined_call_operand.vmem [shape: f32[1,128], index: 0, kind: input, shape index: {}]
  %s1 = inlined_call_operand.vmem [shape: f32[640,1], index: 1, kind: input, shape index: {}]
  %s2 = inlined_call_operand.vmem [shape: f32[640,1], index: 2, kind: input, shape index: {}]
  %s3 = inlined_call_operand.vmem [shape: bf16[640,640], index: 3, kind: input, shape index: {}]
  %s4 = inlined_call_operand.vmem [shape: f32[640,1], index: 4, kind: input, shape index: {}]
  %s5 = inlined_call_operand.vmem [shape: f32[640,1], index: 5, kind: input, shape index: {}]
  %s6 = inlined_call_operand.<no memory space> [shape: f32[1], index: 6, kind: input, shape index: {}]
  %s7 = inlined_call_operand.hbm [shape: f32[1,128], index: 7, kind: output, shape index: {}]
  %s8 = sld [smem:[#allocation0]]
  $region38: #{tpu_custom_call.1} parent=0
    _
  %s10 = ssub.s32 1, %s8
  %s11 = scalar_select 0, %s10, %s8
  %12 = sst [smem:[#allocation2]] %s6
  $region1: #{tpu_custom_call.1} parent=0
    #allocation3 [shape = 'u8[512]{0}', space=vmem, size = 0x400, scoped, tag = 'output window, operand 0, single buffered']
    #allocation4 [shape = 's32[1]{0}', space=sflag, size = 0x4, scoped, tag = 'scoped memory for tpu_custom_call.1']
    %13 = vsyncpa [#allocation4], 0
    // Predicated region
    $region2: #{tpu_custom_call.1} parent=1 // pred_check
      _
    $region3: #{tpu_custom_call.1} parent=1 // pred_check_branch
      %15 = sbr.rel (0) target = $region5
    $region4: #{tpu_custom_call.1} parent=1 // pred_region
      _
    $region5: #{tpu_custom_call.1} parent=1 // pred_fallthru
      _
    // Predicated region
    $region6: #{tpu_custom_call.1} parent=1 // pred_check
      _
    $region7: #{tpu_custom_call.1} parent=1 // pred_check_branch
      %17 = sbr.rel (0) target = $region9
    $region8: #{tpu_custom_call.1} parent=1 // pred_region
      _
    $region9: #{tpu_custom_call.1} parent=1 // pred_fallthru
      _
    // Predicated region
    $region10: #{tpu_custom_call.1} parent=1 // pred_check
      _
    $region11: #{tpu_custom_call.1} parent=1 // pred_check_branch
      %19 = sbr.rel (0) target = $region13
    $region12: #{tpu_custom_call.1} parent=1 // pred_region
      _
    $region13: #{tpu_custom_call.1} parent=1 // pred_fallthru
      _
    // Predicated region
    $region14: #{tpu_custom_call.1} parent=1 // pred_check
      _
    $region15: #{tpu_custom_call.1} parent=1 // pred_check_branch
      %21 = sbr.rel (0) target = $region17
    $region16: #{tpu_custom_call.1} parent=1 // pred_region
      _
    $region17: #{tpu_custom_call.1} parent=1 // pred_fallthru
      _
    // Predicated region
    $region18: #{tpu_custom_call.1} parent=1 // pred_check
      _
    $region19: #{tpu_custom_call.1} parent=1 // pred_check_branch
      %23 = sbr.rel (0) target = $region21
    $region20: #{tpu_custom_call.1} parent=1 // pred_region
      _
    $region21: #{tpu_custom_call.1} parent=1 // pred_fallthru
      _
    // Predicated region
    $region22: #{tpu_custom_call.1} parent=1 // pred_check
      _
    $region23: #{tpu_custom_call.1} parent=1 // pred_check_branch
      %25 = sbr.rel (0) target = $region25
    $region24: #{tpu_custom_call.1} parent=1 // pred_region
      _
    $region25: #{tpu_custom_call.1} parent=1 // pred_fallthru
      _
    // Predicated region
    $region26: #{tpu_custom_call.1} parent=1 // pred_check
      _
    $region27: #{tpu_custom_call.1} parent=1 // pred_check_branch
      %27 = sbr.rel (0) target = $region29
    $region28: #{tpu_custom_call.1} parent=1 // pred_region
      _
    $region29: #{tpu_custom_call.1} parent=1 // pred_fallthru
      _
    %v29 = vld [vmem:[%s0] sm:$0x1]
    %v30 = vld [vmem:[%s1] sm:$0xff]
    %v31 = vld [vmem:[%s1 + $0x8] sm:$0xff]
    %v32 = vld [vmem:[%s1 + $0x10] sm:$0xff]
    %v33 = vld [vmem:[%s1 + $0x18] sm:$0xff]
    %v34 = vld [vmem:[%s1 + $0x20] sm:$0xff]
    %v35 = vld [vmem:[%s1 + $0x28] sm:$0xff]
    %v36 = vld [vmem:[%s1 + $0x30] sm:$0xff]
    %v37 = vld [vmem:[%s1 + $0x38] sm:$0xff]
    %v38 = vld [vmem:[%s1 + $0x40] sm:$0xff]
    %v39 = vld [vmem:[%s1 + $0x48] sm:$0xff]
    %v40 = vld [vmem:[%s1 + $0x50] sm:$0xff]
    %v41 = vld [vmem:[%s1 + $0x58] sm:$0xff]
    %v42 = vld [vmem:[%s1 + $0x60] sm:$0xff]
    %v43 = vld [vmem:[%s1 + $0x68] sm:$0xff]
    %v44 = vld [vmem:[%s1 + $0x70] sm:$0xff]
    %v45 = vld [vmem:[%s1 + $0x78] sm:$0xff]
    %v46 = vld [vmem:[%s1 + $0x80] sm:$0xff]
    %v47 = vld [vmem:[%s1 + $0x88] sm:$0xff]
    %v48 = vld [vmem:[%s1 + $0x90] sm:$0xff]
    %v49 = vld [vmem:[%s1 + $0x98] sm:$0xff]
    %v50 = vld [vmem:[%s1 + $0xa0] sm:$0xff]
    %v51 = vld [vmem:[%s1 + $0xa8] sm:$0xff]
    %v52 = vld [vmem:[%s1 + $0xb0] sm:$0xff]
    %v53 = vld [vmem:[%s1 + $0xb8] sm:$0xff]
    %v54 = vld [vmem:[%s1 + $0xc0] sm:$0xff]
    %v55 = vld [vmem:[%s1 + $0xc8] sm:$0xff]
    %v56 = vld [vmem:[%s1 + $0xd0] sm:$0xff]
    %v57 = vld [vmem:[%s1 + $0xd8] sm:$0xff]
    %v58 = vld [vmem:[%s1 + $0xe0] sm:$0xff]
    %v59 = vld [vmem:[%s1 + $0xe8] sm:$0xff]
    %v60 = vld [vmem:[%s1 + $0xf0] sm:$0xff]
    %v61 = vld [vmem:[%s1 + $0xf8] sm:$0xff]
    %v62 = vld [vmem:[%s1 + $0x100] sm:$0xff]
    %v63 = vld [vmem:[%s1 + $0x108] sm:$0xff]
    %v64 = vld [vmem:[%s1 + $0x110] sm:$0xff]
    %v65 = vld [vmem:[%s1 + $0x118] sm:$0xff]
    %v66 = vld [vmem:[%s1 + $0x120] sm:$0xff]
    %v67 = vld [vmem:[%s1 + $0x128] sm:$0xff]
    %v68 = vld [vmem:[%s1 + $0x130] sm:$0xff]
    %v69 = vld [vmem:[%s1 + $0x138] sm:$0xff]
    %v70 = vld [vmem:[%s1 + $0x140] sm:$0xff]
    %v71 = vld [vmem:[%s1 + $0x148] sm:$0xff]
    %v72 = vld [vmem:[%s1 + $0x150] sm:$0xff]
    %v73 = vld [vmem:[%s1 + $0x158] sm:$0xff]
    %v74 = vld [vmem:[%s1 + $0x160] sm:$0xff]
    %v75 = vld [vmem:[%s1 + $0x168] sm:$0xff]
    %v76 = vld [vmem:[%s1 + $0x170] sm:$0xff]
    %v77 = vld [vmem:[%s1 + $0x178] sm:$0xff]
    %v78 = vld [vmem:[%s1 + $0x180] sm:$0xff]
    %v79 = vld [vmem:[%s1 + $0x188] sm:$0xff]
    %v80 = vld [vmem:[%s1 + $0x190] sm:$0xff]
    %v81 = vld [vmem:[%s1 + $0x198] sm:$0xff]
    %v82 = vld [vmem:[%s1 + $0x1a0] sm:$0xff]
    %v83 = vld [vmem:[%s1 + $0x1a8] sm:$0xff]
    %v84 = vld [vmem:[%s1 + $0x1b0] sm:$0xff]
    %v85 = vld [vmem:[%s1 + $0x1b8] sm:$0xff]
    %v86 = vld [vmem:[%s1 + $0x1c0] sm:$0xff]
    %v87 = vld [vmem:[%s1 + $0x1c8] sm:$0xff]
    %v88 = vld [vmem:[%s1 + $0x1d0] sm:$0xff]
    %v89 = vld [vmem:[%s1 + $0x1d8] sm:$0xff]
    %v90 = vld [vmem:[%s1 + $0x1e0] sm:$0xff]
    %v91 = vld [vmem:[%s1 + $0x1e8] sm:$0xff]
    %v92 = vld [vmem:[%s1 + $0x1f0] sm:$0xff]
    %v93 = vld [vmem:[%s1 + $0x1f8] sm:$0xff]
    %v94 = vld [vmem:[%s1 + $0x200] sm:$0xff]
    %v95 = vld [vmem:[%s1 + $0x208] sm:$0xff]
    %v96 = vld [vmem:[%s1 + $0x210] sm:$0xff]
    %v97 = vld [vmem:[%s1 + $0x218] sm:$0xff]
    %v98 = vld [vmem:[%s1 + $0x220] sm:$0xff]
    %v99 = vld [vmem:[%s1 + $0x228] sm:$0xff]
    %v100 = vld [vmem:[%s1 + $0x230] sm:$0xff]
    %v101 = vld [vmem:[%s1 + $0x238] sm:$0xff]
    %v102 = vld [vmem:[%s1 + $0x240] sm:$0xff]
    %v103 = vld [vmem:[%s1 + $0x248] sm:$0xff]
    %v104 = vld [vmem:[%s1 + $0x250] sm:$0xff]
    %v105 = vld [vmem:[%s1 + $0x258] sm:$0xff]
    %v106 = vld [vmem:[%s1 + $0x260] sm:$0xff]
    %v107 = vld [vmem:[%s1 + $0x268] sm:$0xff]
    %v108 = vld [vmem:[%s1 + $0x270] sm:$0xff]
    %v109 = vld [vmem:[%s1 + $0x278] sm:$0xff]
    %111 = vset.pattern.permute.xlu0 0
    %112 = vperm.xlu0 %111, %v30
    %v113 = vpop.permute.xlu0 %112
    %116 = vset.pattern.permute.xlu0 0
    %117 = vperm.xlu0 %116, %v31
    %v118 = vpop.permute.xlu0 %117
    %121 = vset.pattern.permute.xlu0 0
    %122 = vperm.xlu0 %121, %v32
    %v123 = vpop.permute.xlu0 %122
    %126 = vset.pattern.permute.xlu0 0
    %127 = vperm.xlu0 %126, %v33
    %v128 = vpop.permute.xlu0 %127
    %131 = vset.pattern.permute.xlu0 0
    %132 = vperm.xlu0 %131, %v34
    %v133 = vpop.permute.xlu0 %132
    %136 = vset.pattern.permute.xlu0 0
    %137 = vperm.xlu0 %136, %v35
    %v138 = vpop.permute.xlu0 %137
    %141 = vset.pattern.permute.xlu0 0
    %142 = vperm.xlu0 %141, %v36
    %v143 = vpop.permute.xlu0 %142
    %146 = vset.pattern.permute.xlu0 0
    %147 = vperm.xlu0 %146, %v37
    %v148 = vpop.permute.xlu0 %147
    %151 = vset.pattern.permute.xlu0 0
    %152 = vperm.xlu0 %151, %v38
    %v153 = vpop.permute.xlu0 %152
    %156 = vset.pattern.permute.xlu0 0
    %157 = vperm.xlu0 %156, %v39
    %v158 = vpop.permute.xlu0 %157
    %161 = vset.pattern.permute.xlu0 0
    %162 = vperm.xlu0 %161, %v40
    %v163 = vpop.permute.xlu0 %162
    %166 = vset.pattern.permute.xlu0 0
    %167 = vperm.xlu0 %166, %v41
    %v168 = vpop.permute.xlu0 %167
    %171 = vset.pattern.permute.xlu0 0
    %172 = vperm.xlu0 %171, %v42
    %v173 = vpop.permute.xlu0 %172
    %176 = vset.pattern.permute.xlu0 0
    %177 = vperm.xlu0 %176, %v43
    %v178 = vpop.permute.xlu0 %177
    %181 = vset.pattern.permute.xlu0 0
    %182 = vperm.xlu0 %181, %v44
    %v183 = vpop.permute.xlu0 %182
    %186 = vset.pattern.permute.xlu0 0
    %187 = vperm.xlu0 %186, %v45
    %v188 = vpop.permute.xlu0 %187
    %191 = vset.pattern.permute.xlu0 0
    %192 = vperm.xlu0 %191, %v46
    %v193 = vpop.permute.xlu0 %192
    %196 = vset.pattern.permute.xlu0 0
    %197 = vperm.xlu0 %196, %v47
    %v198 = vpop.permute.xlu0 %197
    %201 = vset.pattern.permute.xlu0 0
    %202 = vperm.xlu0 %201, %v48
    %v203 = vpop.permute.xlu0 %202
    %206 = vset.pattern.permute.xlu0 0
    %207 = vperm.xlu0 %206, %v49
    %v208 = vpop.permute.xlu0 %207
    %211 = vset.pattern.permute.xlu0 0
    %212 = vperm.xlu0 %211, %v50
    %v213 = vpop.permute.xlu0 %212
    %216 = vset.pattern.permute.xlu0 0
    %217 = vperm.xlu0 %216, %v51
    %v218 = vpop.permute.xlu0 %217
    %221 = vset.pattern.permute.xlu0 0
    %222 = vperm.xlu0 %221, %v52
    %v223 = vpop.permute.xlu0 %222
    %226 = vset.pattern.permute.xlu0 0
    %227 = vperm.xlu0 %226, %v53
    %v228 = vpop.permute.xlu0 %227
    %231 = vset.pattern.permute.xlu0 0
    %232 = vperm.xlu0 %231, %v54
    %v233 = vpop.permute.xlu0 %232
    %236 = vset.pattern.permute.xlu0 0
    %237 = vperm.xlu0 %236, %v55
    %v238 = vpop.permute.xlu0 %237
    %241 = vset.pattern.permute.xlu0 0
    %242 = vperm.xlu0 %241, %v56
    %v243 = vpop.permute.xlu0 %242
    %246 = vset.pattern.permute.xlu0 0
    %247 = vperm.xlu0 %246, %v57
    %v248 = vpop.permute.xlu0 %247
    %251 = vset.pattern.permute.xlu0 0
    %252 = vperm.xlu0 %251, %v58
    %v253 = vpop.permute.xlu0 %252
    %256 = vset.pattern.permute.xlu0 0
    %257 = vperm.xlu0 %256, %v59
    %v258 = vpop.permute.xlu0 %257
    %261 = vset.pattern.permute.xlu0 0
    %262 = vperm.xlu0 %261, %v60
    %v263 = vpop.permute.xlu0 %262
    %266 = vset.pattern.permute.xlu0 0
    %267 = vperm.xlu0 %266, %v61
    %v268 = vpop.permute.xlu0 %267
    %271 = vset.pattern.permute.xlu0 0
    %272 = vperm.xlu0 %271, %v62
    %v273 = vpop.permute.xlu0 %272
    %276 = vset.pattern.permute.xlu0 0
    %277 = vperm.xlu0 %276, %v63
    %v278 = vpop.permute.xlu0 %277
    %281 = vset.pattern.permute.xlu0 0
    %282 = vperm.xlu0 %281, %v64
    %v283 = vpop.permute.xlu0 %282
    %286 = vset.pattern.permute.xlu0 0
    %287 = vperm.xlu0 %286, %v65
    %v288 = vpop.permute.xlu0 %287
    %291 = vset.pattern.permute.xlu0 0
    %292 = vperm.xlu0 %291, %v66
    %v293 = vpop.permute.xlu0 %292
    %296 = vset.pattern.permute.xlu0 0
    %297 = vperm.xlu0 %296, %v67
    %v298 = vpop.permute.xlu0 %297
    %301 = vset.pattern.permute.xlu0 0
    %302 = vperm.xlu0 %301, %v68
    %v303 = vpop.permute.xlu0 %302
    %306 = vset.pattern.permute.xlu0 0
    %307 = vperm.xlu0 %306, %v69
    %v308 = vpop.permute.xlu0 %307
    %311 = vset.pattern.permute.xlu0 0
    %312 = vperm.xlu0 %311, %v70
    %v313 = vpop.permute.xlu0 %312
    %316 = vset.pattern.permute.xlu0 0
    %317 = vperm.xlu0 %316, %v71
    %v318 = vpop.permute.xlu0 %317
    %321 = vset.pattern.permute.xlu0 0
    %322 = vperm.xlu0 %321, %v72
    %v323 = vpop.permute.xlu0 %322
    %326 = vset.pattern.permute.xlu0 0
    %327 = vperm.xlu0 %326, %v73
    %v328 = vpop.permute.xlu0 %327
    %331 = vset.pattern.permute.xlu0 0
    %332 = vperm.xlu0 %331, %v74
    %v333 = vpop.permute.xlu0 %332
    %336 = vset.pattern.permute.xlu0 0
    %337 = vperm.xlu0 %336, %v75
    %v338 = vpop.permute.xlu0 %337
    %341 = vset.pattern.permute.xlu0 0
    %342 = vperm.xlu0 %341, %v76
    %v343 = vpop.permute.xlu0 %342
    %346 = vset.pattern.permute.xlu0 0
    %347 = vperm.xlu0 %346, %v77
    %v348 = vpop.permute.xlu0 %347
    %351 = vset.pattern.permute.xlu0 0
    %352 = vperm.xlu0 %351, %v78
    %v353 = vpop.permute.xlu0 %352
    %356 = vset.pattern.permute.xlu0 0
    %357 = vperm.xlu0 %356, %v79
    %v358 = vpop.permute.xlu0 %357
    %361 = vset.pattern.permute.xlu0 0
    %362 = vperm.xlu0 %361, %v80
    %v363 = vpop.permute.xlu0 %362
    %366 = vset.pattern.permute.xlu0 0
    %367 = vperm.xlu0 %366, %v81
    %v368 = vpop.permute.xlu0 %367
    %371 = vset.pattern.permute.xlu0 0
    %372 = vperm.xlu0 %371, %v82
    %v373 = vpop.permute.xlu0 %372
    %376 = vset.pattern.permute.xlu0 0
    %377 = vperm.xlu0 %376, %v83
    %v378 = vpop.permute.xlu0 %377
    %381 = vset.pattern.permute.xlu0 0
    %382 = vperm.xlu0 %381, %v84
    %v383 = vpop.permute.xlu0 %382
    %386 = vset.pattern.permute.xlu0 0
    %387 = vperm.xlu0 %386, %v85
    %v388 = vpop.permute.xlu0 %387
    %391 = vset.pattern.permute.xlu0 0
    %392 = vperm.xlu0 %391, %v86
    %v393 = vpop.permute.xlu0 %392
    %396 = vset.pattern.permute.xlu0 0
    %397 = vperm.xlu0 %396, %v87
    %v398 = vpop.permute.xlu0 %397
    %401 = vset.pattern.permute.xlu0 0
    %402 = vperm.xlu0 %401, %v88
    %v403 = vpop.permute.xlu0 %402
    %406 = vset.pattern.permute.xlu0 0
    %407 = vperm.xlu0 %406, %v89
    %v408 = vpop.permute.xlu0 %407
    %411 = vset.pattern.permute.xlu0 0
    %412 = vperm.xlu0 %411, %v90
    %v413 = vpop.permute.xlu0 %412
    %416 = vset.pattern.permute.xlu0 0
    %417 = vperm.xlu0 %416, %v91
    %v418 = vpop.permute.xlu0 %417
    %421 = vset.pattern.permute.xlu0 0
    %422 = vperm.xlu0 %421, %v92
    %v423 = vpop.permute.xlu0 %422
    %426 = vset.pattern.permute.xlu0 0
    %427 = vperm.xlu0 %426, %v93
    %v428 = vpop.permute.xlu0 %427
    %431 = vset.pattern.permute.xlu0 0
    %432 = vperm.xlu0 %431, %v94
    %v433 = vpop.permute.xlu0 %432
    %436 = vset.pattern.permute.xlu0 0
    %437 = vperm.xlu0 %436, %v95
    %v438 = vpop.permute.xlu0 %437
    %441 = vset.pattern.permute.xlu0 0
    %442 = vperm.xlu0 %441, %v96
    %v443 = vpop.permute.xlu0 %442
    %446 = vset.pattern.permute.xlu0 0
    %447 = vperm.xlu0 %446, %v97
    %v448 = vpop.permute.xlu0 %447
    %451 = vset.pattern.permute.xlu0 0
    %452 = vperm.xlu0 %451, %v98
    %v453 = vpop.permute.xlu0 %452
    %456 = vset.pattern.permute.xlu0 0
    %457 = vperm.xlu0 %456, %v99
    %v458 = vpop.permute.xlu0 %457
    %461 = vset.pattern.permute.xlu0 0
    %462 = vperm.xlu0 %461, %v100
    %v463 = vpop.permute.xlu0 %462
    %466 = vset.pattern.permute.xlu0 0
    %467 = vperm.xlu0 %466, %v101
    %v468 = vpop.permute.xlu0 %467
    %471 = vset.pattern.permute.xlu0 0
    %472 = vperm.xlu0 %471, %v102
    %v473 = vpop.permute.xlu0 %472
    %476 = vset.pattern.permute.xlu0 0
    %477 = vperm.xlu0 %476, %v103
    %v478 = vpop.permute.xlu0 %477
    %481 = vset.pattern.permute.xlu0 0
    %482 = vperm.xlu0 %481, %v104
    %v483 = vpop.permute.xlu0 %482
    %486 = vset.pattern.permute.xlu0 0
    %487 = vperm.xlu0 %486, %v105
    %v488 = vpop.permute.xlu0 %487
    %491 = vset.pattern.permute.xlu0 0
    %492 = vperm.xlu0 %491, %v106
    %v493 = vpop.permute.xlu0 %492
    %496 = vset.pattern.permute.xlu0 0
    %497 = vperm.xlu0 %496, %v107
    %v498 = vpop.permute.xlu0 %497
    %501 = vset.pattern.permute.xlu0 0
    %502 = vperm.xlu0 %501, %v108
    %v503 = vpop.permute.xlu0 %502
    %506 = vset.pattern.permute.xlu0 0
    %507 = vperm.xlu0 %506, %v109
    %v508 = vpop.permute.xlu0 %507
    %v511 = vlaneseq
    %v512 = vshrl.u32 %v511, 7
    %v513 = vsub.s32 0, %v512
    %v514 = vrot.slane %v29, %v513
    %v516 = vmul.f32 %v113, %v514
    %v517 = vmul.f32 %v118, %v514
    %v518 = vmul.f32 %v123, %v514
    %v519 = vmul.f32 %v128, %v514
    %v520 = vmul.f32 %v133, %v514
    %v521 = vmul.f32 %v138, %v514
    %v522 = vmul.f32 %v143, %v514
    %v523 = vmul.f32 %v148, %v514
    %v524 = vmul.f32 %v153, %v514
    %v525 = vmul.f32 %v158, %v514
    %v526 = vmul.f32 %v163, %v514
    %v527 = vmul.f32 %v168, %v514
    %v528 = vmul.f32 %v173, %v514
    %v529 = vmul.f32 %v178, %v514
    %v530 = vmul.f32 %v183, %v514
    %v531 = vmul.f32 %v188, %v514
    %v532 = vmul.f32 %v193, %v514
    %v533 = vmul.f32 %v198, %v514
    %v534 = vmul.f32 %v203, %v514
    %v535 = vmul.f32 %v208, %v514
    %v536 = vmul.f32 %v213, %v514
    %v537 = vmul.f32 %v218, %v514
    %v538 = vmul.f32 %v223, %v514
    %v539 = vmul.f32 %v228, %v514
    %v540 = vmul.f32 %v233, %v514
    %v541 = vmul.f32 %v238, %v514
    %v542 = vmul.f32 %v243, %v514
    %v543 = vmul.f32 %v248, %v514
    %v544 = vmul.f32 %v253, %v514
    %v545 = vmul.f32 %v258, %v514
    %v546 = vmul.f32 %v263, %v514
    %v547 = vmul.f32 %v268, %v514
    %v548 = vmul.f32 %v273, %v514
    %v549 = vmul.f32 %v278, %v514
    %v550 = vmul.f32 %v283, %v514
    %v551 = vmul.f32 %v288, %v514
    %v552 = vmul.f32 %v293, %v514
    %v553 = vmul.f32 %v298, %v514
    %v554 = vmul.f32 %v303, %v514
    %v555 = vmul.f32 %v308, %v514
    %v556 = vmul.f32 %v313, %v514
    %v557 = vmul.f32 %v318, %v514
    %v558 = vmul.f32 %v323, %v514
    %v559 = vmul.f32 %v328, %v514
    %v560 = vmul.f32 %v333, %v514
    %v561 = vmul.f32 %v338, %v514
    %v562 = vmul.f32 %v343, %v514
    %v563 = vmul.f32 %v348, %v514
    %v564 = vmul.f32 %v353, %v514
    %v565 = vmul.f32 %v358, %v514
    %v566 = vmul.f32 %v363, %v514
    %v567 = vmul.f32 %v368, %v514
    %v568 = vmul.f32 %v373, %v514
    %v569 = vmul.f32 %v378, %v514
    %v570 = vmul.f32 %v383, %v514
    %v571 = vmul.f32 %v388, %v514
    %v572 = vmul.f32 %v393, %v514
    %v573 = vmul.f32 %v398, %v514
    %v574 = vmul.f32 %v403, %v514
    %v575 = vmul.f32 %v408, %v514
    %v576 = vmul.f32 %v413, %v514
    %v577 = vmul.f32 %v418, %v514
    %v578 = vmul.f32 %v423, %v514
    %v579 = vmul.f32 %v428, %v514
    %v580 = vmul.f32 %v433, %v514
    %v581 = vmul.f32 %v438, %v514
    %v582 = vmul.f32 %v443, %v514
    %v583 = vmul.f32 %v448, %v514
    %v584 = vmul.f32 %v453, %v514
    %v585 = vmul.f32 %v458, %v514
    %v586 = vmul.f32 %v463, %v514
    %v587 = vmul.f32 %v468, %v514
    %v588 = vmul.f32 %v473, %v514
    %v589 = vmul.f32 %v478, %v514
    %v590 = vmul.f32 %v483, %v514
    %v591 = vmul.f32 %v488, %v514
    %v592 = vmul.f32 %v493, %v514
    %v593 = vmul.f32 %v498, %v514
    %v594 = vmul.f32 %v503, %v514
    %v595 = vmul.f32 %v508, %v514
    %v596 = vld [vmem:[%s2] sm:$0xff]
    %v597 = vld [vmem:[%s2 + $0x8] sm:$0xff]
    %v598 = vld [vmem:[%s2 + $0x10] sm:$0xff]
    %v599 = vld [vmem:[%s2 + $0x18] sm:$0xff]
    %v600 = vld [vmem:[%s2 + $0x20] sm:$0xff]
    %v601 = vld [vmem:[%s2 + $0x28] sm:$0xff]
    %v602 = vld [vmem:[%s2 + $0x30] sm:$0xff]
    %v603 = vld [vmem:[%s2 + $0x38] sm:$0xff]
    %v604 = vld [vmem:[%s2 + $0x40] sm:$0xff]
    %v605 = vld [vmem:[%s2 + $0x48] sm:$0xff]
    %v606 = vld [vmem:[%s2 + $0x50] sm:$0xff]
    %v607 = vld [vmem:[%s2 + $0x58] sm:$0xff]
    %v608 = vld [vmem:[%s2 + $0x60] sm:$0xff]
    %v609 = vld [vmem:[%s2 + $0x68] sm:$0xff]
    %v610 = vld [vmem:[%s2 + $0x70] sm:$0xff]
    %v611 = vld [vmem:[%s2 + $0x78] sm:$0xff]
    %v612 = vld [vmem:[%s2 + $0x80] sm:$0xff]
    %v613 = vld [vmem:[%s2 + $0x88] sm:$0xff]
    %v614 = vld [vmem:[%s2 + $0x90] sm:$0xff]
    %v615 = vld [vmem:[%s2 + $0x98] sm:$0xff]
    %v616 = vld [vmem:[%s2 + $0xa0] sm:$0xff]
    %v617 = vld [vmem:[%s2 + $0xa8] sm:$0xff]
    %v618 = vld [vmem:[%s2 + $0xb0] sm:$0xff]
    %v619 = vld [vmem:[%s2 + $0xb8] sm:$0xff]
    %v620 = vld [vmem:[%s2 + $0xc0] sm:$0xff]
    %v621 = vld [vmem:[%s2 + $0xc8] sm:$0xff]
    %v622 = vld [vmem:[%s2 + $0xd0] sm:$0xff]
    %v623 = vld [vmem:[%s2 + $0xd8] sm:$0xff]
    %v624 = vld [vmem:[%s2 + $0xe0] sm:$0xff]
    %v625 = vld [vmem:[%s2 + $0xe8] sm:$0xff]
    %v626 = vld [vmem:[%s2 + $0xf0] sm:$0xff]
    %v627 = vld [vmem:[%s2 + $0xf8] sm:$0xff]
    %v628 = vld [vmem:[%s2 + $0x100] sm:$0xff]
    %v629 = vld [vmem:[%s2 + $0x108] sm:$0xff]
    %v630 = vld [vmem:[%s2 + $0x110] sm:$0xff]
    %v631 = vld [vmem:[%s2 + $0x118] sm:$0xff]
    %v632 = vld [vmem:[%s2 + $0x120] sm:$0xff]
    %v633 = vld [vmem:[%s2 + $0x128] sm:$0xff]
    %v634 = vld [vmem:[%s2 + $0x130] sm:$0xff]
    %v635 = vld [vmem:[%s2 + $0x138] sm:$0xff]
    %v636 = vld [vmem:[%s2 + $0x140] sm:$0xff]
    %v637 = vld [vmem:[%s2 + $0x148] sm:$0xff]
    %v638 = vld [vmem:[%s2 + $0x150] sm:$0xff]
    %v639 = vld [vmem:[%s2 + $0x158] sm:$0xff]
    %v640 = vld [vmem:[%s2 + $0x160] sm:$0xff]
    %v641 = vld [vmem:[%s2 + $0x168] sm:$0xff]
    %v642 = vld [vmem:[%s2 + $0x170] sm:$0xff]
    %v643 = vld [vmem:[%s2 + $0x178] sm:$0xff]
    %v644 = vld [vmem:[%s2 + $0x180] sm:$0xff]
    %v645 = vld [vmem:[%s2 + $0x188] sm:$0xff]
    %v646 = vld [vmem:[%s2 + $0x190] sm:$0xff]
    %v647 = vld [vmem:[%s2 + $0x198] sm:$0xff]
    %v648 = vld [vmem:[%s2 + $0x1a0] sm:$0xff]
    %v649 = vld [vmem:[%s2 + $0x1a8] sm:$0xff]
    %v650 = vld [vmem:[%s2 + $0x1b0] sm:$0xff]
    %v651 = vld [vmem:[%s2 + $0x1b8] sm:$0xff]
    %v652 = vld [vmem:[%s2 + $0x1c0] sm:$0xff]
    %v653 = vld [vmem:[%s2 + $0x1c8] sm:$0xff]
    %v654 = vld [vmem:[%s2 + $0x1d0] sm:$0xff]
    %v655 = vld [vmem:[%s2 + $0x1d8] sm:$0xff]
    %v656 = vld [vmem:[%s2 + $0x1e0] sm:$0xff]
    %v657 = vld [vmem:[%s2 + $0x1e8] sm:$0xff]
    %v658 = vld [vmem:[%s2 + $0x1f0] sm:$0xff]
    %v659 = vld [vmem:[%s2 + $0x1f8] sm:$0xff]
    %v660 = vld [vmem:[%s2 + $0x200] sm:$0xff]
    %v661 = vld [vmem:[%s2 + $0x208] sm:$0xff]
    %v662 = vld [vmem:[%s2 + $0x210] sm:$0xff]
    %v663 = vld [vmem:[%s2 + $0x218] sm:$0xff]
    %v664 = vld [vmem:[%s2 + $0x220] sm:$0xff]
    %v665 = vld [vmem:[%s2 + $0x228] sm:$0xff]
    %v666 = vld [vmem:[%s2 + $0x230] sm:$0xff]
    %v667 = vld [vmem:[%s2 + $0x238] sm:$0xff]
    %v668 = vld [vmem:[%s2 + $0x240] sm:$0xff]
    %v669 = vld [vmem:[%s2 + $0x248] sm:$0xff]
    %v670 = vld [vmem:[%s2 + $0x250] sm:$0xff]
    %v671 = vld [vmem:[%s2 + $0x258] sm:$0xff]
    %v672 = vld [vmem:[%s2 + $0x260] sm:$0xff]
    %v673 = vld [vmem:[%s2 + $0x268] sm:$0xff]
    %v674 = vld [vmem:[%s2 + $0x270] sm:$0xff]
    %v675 = vld [vmem:[%s2 + $0x278] sm:$0xff]
    %677 = vset.pattern.permute.xlu0 0
    %678 = vperm.xlu0 %677, %v596
    %v679 = vpop.permute.xlu0 %678
    %682 = vset.pattern.permute.xlu0 0
    %683 = vperm.xlu0 %682, %v597
    %v684 = vpop.permute.xlu0 %683
    %687 = vset.pattern.permute.xlu0 0
    %688 = vperm.xlu0 %687, %v598
    %v689 = vpop.permute.xlu0 %688
    %692 = vset.pattern.permute.xlu0 0
    %693 = vperm.xlu0 %692, %v599
    %v694 = vpop.permute.xlu0 %693
    %697 = vset.pattern.permute.xlu0 0
    %698 = vperm.xlu0 %697, %v600
    %v699 = vpop.permute.xlu0 %698
    %702 = vset.pattern.permute.xlu0 0
    %703 = vperm.xlu0 %702, %v601
    %v704 = vpop.permute.xlu0 %703
    %707 = vset.pattern.permute.xlu0 0
    %708 = vperm.xlu0 %707, %v602
    %v709 = vpop.permute.xlu0 %708
    %712 = vset.pattern.permute.xlu0 0
    %713 = vperm.xlu0 %712, %v603
    %v714 = vpop.permute.xlu0 %713
    %717 = vset.pattern.permute.xlu0 0
    %718 = vperm.xlu0 %717, %v604
    %v719 = vpop.permute.xlu0 %718
    %722 = vset.pattern.permute.xlu0 0
    %723 = vperm.xlu0 %722, %v605
    %v724 = vpop.permute.xlu0 %723
    %727 = vset.pattern.permute.xlu0 0
    %728 = vperm.xlu0 %727, %v606
    %v729 = vpop.permute.xlu0 %728
    %732 = vset.pattern.permute.xlu0 0
    %733 = vperm.xlu0 %732, %v607
    %v734 = vpop.permute.xlu0 %733
    %737 = vset.pattern.permute.xlu0 0
    %738 = vperm.xlu0 %737, %v608
    %v739 = vpop.permute.xlu0 %738
    %742 = vset.pattern.permute.xlu0 0
    %743 = vperm.xlu0 %742, %v609
    %v744 = vpop.permute.xlu0 %743
    %747 = vset.pattern.permute.xlu0 0
    %748 = vperm.xlu0 %747, %v610
    %v749 = vpop.permute.xlu0 %748
    %752 = vset.pattern.permute.xlu0 0
    %753 = vperm.xlu0 %752, %v611
    %v754 = vpop.permute.xlu0 %753
    %757 = vset.pattern.permute.xlu0 0
    %758 = vperm.xlu0 %757, %v612
    %v759 = vpop.permute.xlu0 %758
    %762 = vset.pattern.permute.xlu0 0
    %763 = vperm.xlu0 %762, %v613
    %v764 = vpop.permute.xlu0 %763
    %767 = vset.pattern.permute.xlu0 0
    %768 = vperm.xlu0 %767, %v614
    %v769 = vpop.permute.xlu0 %768
    %772 = vset.pattern.permute.xlu0 0
    %773 = vperm.xlu0 %772, %v615
    %v774 = vpop.permute.xlu0 %773
    %777 = vset.pattern.permute.xlu0 0
    %778 = vperm.xlu0 %777, %v616
    %v779 = vpop.permute.xlu0 %778
    %782 = vset.pattern.permute.xlu0 0
    %783 = vperm.xlu0 %782, %v617
    %v784 = vpop.permute.xlu0 %783
    %787 = vset.pattern.permute.xlu0 0
    %788 = vperm.xlu0 %787, %v618
    %v789 = vpop.permute.xlu0 %788
    %792 = vset.pattern.permute.xlu0 0
    %793 = vperm.xlu0 %792, %v619
    %v794 = vpop.permute.xlu0 %793
    %797 = vset.pattern.permute.xlu0 0
    %798 = vperm.xlu0 %797, %v620
    %v799 = vpop.permute.xlu0 %798
    %802 = vset.pattern.permute.xlu0 0
    %803 = vperm.xlu0 %802, %v621
    %v804 = vpop.permute.xlu0 %803
    %807 = vset.pattern.permute.xlu0 0
    %808 = vperm.xlu0 %807, %v622
    %v809 = vpop.permute.xlu0 %808
    %812 = vset.pattern.permute.xlu0 0
    %813 = vperm.xlu0 %812, %v623
    %v814 = vpop.permute.xlu0 %813
    %817 = vset.pattern.permute.xlu0 0
    %818 = vperm.xlu0 %817, %v624
    %v819 = vpop.permute.xlu0 %818
    %822 = vset.pattern.permute.xlu0 0
    %823 = vperm.xlu0 %822, %v625
    %v824 = vpop.permute.xlu0 %823
    %827 = vset.pattern.permute.xlu0 0
    %828 = vperm.xlu0 %827, %v626
    %v829 = vpop.permute.xlu0 %828
    %832 = vset.pattern.permute.xlu0 0
    %833 = vperm.xlu0 %832, %v627
    %v834 = vpop.permute.xlu0 %833
    %837 = vset.pattern.permute.xlu0 0
    %838 = vperm.xlu0 %837, %v628
    %v839 = vpop.permute.xlu0 %838
    %842 = vset.pattern.permute.xlu0 0
    %843 = vperm.xlu0 %842, %v629
    %v844 = vpop.permute.xlu0 %843
    %847 = vset.pattern.permute.xlu0 0
    %848 = vperm.xlu0 %847, %v630
    %v849 = vpop.permute.xlu0 %848
    %852 = vset.pattern.permute.xlu0 0
    %853 = vperm.xlu0 %852, %v631
    %v854 = vpop.permute.xlu0 %853
    %857 = vset.pattern.permute.xlu0 0
    %858 = vperm.xlu0 %857, %v632
    %v859 = vpop.permute.xlu0 %858
    %862 = vset.pattern.permute.xlu0 0
    %863 = vperm.xlu0 %862, %v633
    %v864 = vpop.permute.xlu0 %863
    %867 = vset.pattern.permute.xlu0 0
    %868 = vperm.xlu0 %867, %v634
    %v869 = vpop.permute.xlu0 %868
    %872 = vset.pattern.permute.xlu0 0
    %873 = vperm.xlu0 %872, %v635
    %v874 = vpop.permute.xlu0 %873
    %877 = vset.pattern.permute.xlu0 0
    %878 = vperm.xlu0 %877, %v636
    %v879 = vpop.permute.xlu0 %878
    %882 = vset.pattern.permute.xlu0 0
    %883 = vperm.xlu0 %882, %v637
    %v884 = vpop.permute.xlu0 %883
    %887 = vset.pattern.permute.xlu0 0
    %888 = vperm.xlu0 %887, %v638
    %v889 = vpop.permute.xlu0 %888
    %892 = vset.pattern.permute.xlu0 0
    %893 = vperm.xlu0 %892, %v639
    %v894 = vpop.permute.xlu0 %893
    %897 = vset.pattern.permute.xlu0 0
    %898 = vperm.xlu0 %897, %v640
    %v899 = vpop.permute.xlu0 %898
    %902 = vset.pattern.permute.xlu0 0
    %903 = vperm.xlu0 %902, %v641
    %v904 = vpop.permute.xlu0 %903
    %907 = vset.pattern.permute.xlu0 0
    %908 = vperm.xlu0 %907, %v642
    %v909 = vpop.permute.xlu0 %908
    %912 = vset.pattern.permute.xlu0 0
    %913 = vperm.xlu0 %912, %v643
    %v914 = vpop.permute.xlu0 %913
    %917 = vset.pattern.permute.xlu0 0
    %918 = vperm.xlu0 %917, %v644
    %v919 = vpop.permute.xlu0 %918
    %922 = vset.pattern.permute.xlu0 0
    %923 = vperm.xlu0 %922, %v645
    %v924 = vpop.permute.xlu0 %923
    %927 = vset.pattern.permute.xlu0 0
    %928 = vperm.xlu0 %927, %v646
    %v929 = vpop.permute.xlu0 %928
    %932 = vset.pattern.permute.xlu0 0
    %933 = vperm.xlu0 %932, %v647
    %v934 = vpop.permute.xlu0 %933
    %937 = vset.pattern.permute.xlu0 0
    %938 = vperm.xlu0 %937, %v648
    %v939 = vpop.permute.xlu0 %938
    %942 = vset.pattern.permute.xlu0 0
    %943 = vperm.xlu0 %942, %v649
    %v944 = vpop.permute.xlu0 %943
    %947 = vset.pattern.permute.xlu0 0
    %948 = vperm.xlu0 %947, %v650
    %v949 = vpop.permute.xlu0 %948
    %952 = vset.pattern.permute.xlu0 0
    %953 = vperm.xlu0 %952, %v651
    %v954 = vpop.permute.xlu0 %953
    %957 = vset.pattern.permute.xlu0 0
    %958 = vperm.xlu0 %957, %v652
    %v959 = vpop.permute.xlu0 %958
    %962 = vset.pattern.permute.xlu0 0
    %963 = vperm.xlu0 %962, %v653
    %v964 = vpop.permute.xlu0 %963
    %967 = vset.pattern.permute.xlu0 0
    %968 = vperm.xlu0 %967, %v654
    %v969 = vpop.permute.xlu0 %968
    %972 = vset.pattern.permute.xlu0 0
    %973 = vperm.xlu0 %972, %v655
    %v974 = vpop.permute.xlu0 %973
    %977 = vset.pattern.permute.xlu0 0
    %978 = vperm.xlu0 %977, %v656
    %v979 = vpop.permute.xlu0 %978
    %982 = vset.pattern.permute.xlu0 0
    %983 = vperm.xlu0 %982, %v657
    %v984 = vpop.permute.xlu0 %983
    %987 = vset.pattern.permute.xlu0 0
    %988 = vperm.xlu0 %987, %v658
    %v989 = vpop.permute.xlu0 %988
    %992 = vset.pattern.permute.xlu0 0
    %993 = vperm.xlu0 %992, %v659
    %v994 = vpop.permute.xlu0 %993
    %997 = vset.pattern.permute.xlu0 0
    %998 = vperm.xlu0 %997, %v660
    %v999 = vpop.permute.xlu0 %998
    %1002 = vset.pattern.permute.xlu0 0
    %1003 = vperm.xlu0 %1002, %v661
    %v1004 = vpop.permute.xlu0 %1003
    %1007 = vset.pattern.permute.xlu0 0
    %1008 = vperm.xlu0 %1007, %v662
    %v1009 = vpop.permute.xlu0 %1008
    %1012 = vset.pattern.permute.xlu0 0
    %1013 = vperm.xlu0 %1012, %v663
    %v1014 = vpop.permute.xlu0 %1013
    %1017 = vset.pattern.permute.xlu0 0
    %1018 = vperm.xlu0 %1017, %v664
    %v1019 = vpop.permute.xlu0 %1018
    %1022 = vset.pattern.permute.xlu0 0
    %1023 = vperm.xlu0 %1022, %v665
    %v1024 = vpop.permute.xlu0 %1023
    %1027 = vset.pattern.permute.xlu0 0
    %1028 = vperm.xlu0 %1027, %v666
    %v1029 = vpop.permute.xlu0 %1028
    %1032 = vset.pattern.permute.xlu0 0
    %1033 = vperm.xlu0 %1032, %v667
    %v1034 = vpop.permute.xlu0 %1033
    %1037 = vset.pattern.permute.xlu0 0
    %1038 = vperm.xlu0 %1037, %v668
    %v1039 = vpop.permute.xlu0 %1038
    %1042 = vset.pattern.permute.xlu0 0
    %1043 = vperm.xlu0 %1042, %v669
    %v1044 = vpop.permute.xlu0 %1043
    %1047 = vset.pattern.permute.xlu0 0
    %1048 = vperm.xlu0 %1047, %v670
    %v1049 = vpop.permute.xlu0 %1048
    %1052 = vset.pattern.permute.xlu0 0
    %1053 = vperm.xlu0 %1052, %v671
    %v1054 = vpop.permute.xlu0 %1053
    %1057 = vset.pattern.permute.xlu0 0
    %1058 = vperm.xlu0 %1057, %v672
    %v1059 = vpop.permute.xlu0 %1058
    %1062 = vset.pattern.permute.xlu0 0
    %1063 = vperm.xlu0 %1062, %v673
    %v1064 = vpop.permute.xlu0 %1063
    %1067 = vset.pattern.permute.xlu0 0
    %1068 = vperm.xlu0 %1067, %v674
    %v1069 = vpop.permute.xlu0 %1068
    %1072 = vset.pattern.permute.xlu0 0
    %1073 = vperm.xlu0 %1072, %v675
    %v1074 = vpop.permute.xlu0 %1073
    %v1076 = vadd.f32 %v516, %v679
    %v1077 = vadd.f32 %v517, %v684
    %v1078 = vadd.f32 %v518, %v689
    %v1079 = vadd.f32 %v519, %v694
    %v1080 = vadd.f32 %v520, %v699
    %v1081 = vadd.f32 %v521, %v704
    %v1082 = vadd.f32 %v522, %v709
    %v1083 = vadd.f32 %v523, %v714
    %v1084 = vadd.f32 %v524, %v719
    %v1085 = vadd.f32 %v525, %v724
    %v1086 = vadd.f32 %v526, %v729
    %v1087 = vadd.f32 %v527, %v734
    %v1088 = vadd.f32 %v528, %v739
    %v1089 = vadd.f32 %v529, %v744
    %v1090 = vadd.f32 %v530, %v749
    %v1091 = vadd.f32 %v531, %v754
    %v1092 = vadd.f32 %v532, %v759
    %v1093 = vadd.f32 %v533, %v764
    %v1094 = vadd.f32 %v534, %v769
    %v1095 = vadd.f32 %v535, %v774
    %v1096 = vadd.f32 %v536, %v779
    %v1097 = vadd.f32 %v537, %v784
    %v1098 = vadd.f32 %v538, %v789
    %v1099 = vadd.f32 %v539, %v794
    %v1100 = vadd.f32 %v540, %v799
    %v1101 = vadd.f32 %v541, %v804
    %v1102 = vadd.f32 %v542, %v809
    %v1103 = vadd.f32 %v543, %v814
    %v1104 = vadd.f32 %v544, %v819
    %v1105 = vadd.f32 %v545, %v824
    %v1106 = vadd.f32 %v546, %v829
    %v1107 = vadd.f32 %v547, %v834
    %v1108 = vadd.f32 %v548, %v839
    %v1109 = vadd.f32 %v549, %v844
    %v1110 = vadd.f32 %v550, %v849
    %v1111 = vadd.f32 %v551, %v854
    %v1112 = vadd.f32 %v552, %v859
    %v1113 = vadd.f32 %v553, %v864
    %v1114 = vadd.f32 %v554, %v869
    %v1115 = vadd.f32 %v555, %v874
    %v1116 = vadd.f32 %v556, %v879
    %v1117 = vadd.f32 %v557, %v884
    %v1118 = vadd.f32 %v558, %v889
    %v1119 = vadd.f32 %v559, %v894
    %v1120 = vadd.f32 %v560, %v899
    %v1121 = vadd.f32 %v561, %v904
    %v1122 = vadd.f32 %v562, %v909
    %v1123 = vadd.f32 %v563, %v914
    %v1124 = vadd.f32 %v564, %v919
    %v1125 = vadd.f32 %v565, %v924
    %v1126 = vadd.f32 %v566, %v929
    %v1127 = vadd.f32 %v567, %v934
    %v1128 = vadd.f32 %v568, %v939
    %v1129 = vadd.f32 %v569, %v944
    %v1130 = vadd.f32 %v570, %v949
    %v1131 = vadd.f32 %v571, %v954
    %v1132 = vadd.f32 %v572, %v959
    %v1133 = vadd.f32 %v573, %v964
    %v1134 = vadd.f32 %v574, %v969
    %v1135 = vadd.f32 %v575, %v974
    %v1136 = vadd.f32 %v576, %v979
    %v1137 = vadd.f32 %v577, %v984
    %v1138 = vadd.f32 %v578, %v989
    %v1139 = vadd.f32 %v579, %v994
    %v1140 = vadd.f32 %v580, %v999
    %v1141 = vadd.f32 %v581, %v1004
    %v1142 = vadd.f32 %v582, %v1009
    %v1143 = vadd.f32 %v583, %v1014
    %v1144 = vadd.f32 %v584, %v1019
    %v1145 = vadd.f32 %v585, %v1024
    %v1146 = vadd.f32 %v586, %v1029
    %v1147 = vadd.f32 %v587, %v1034
    %v1148 = vadd.f32 %v588, %v1039
    %v1149 = vadd.f32 %v589, %v1044
    %v1150 = vadd.f32 %v590, %v1049
    %v1151 = vadd.f32 %v591, %v1054
    %v1152 = vadd.f32 %v592, %v1059
    %v1153 = vadd.f32 %v593, %v1064
    %v1154 = vadd.f32 %v594, %v1069
    %v1155 = vadd.f32 %v595, %v1074
    %v1156 = vmax.f32 %v1076, 0.0
    %v1157 = vmax.f32 %v1077, 0.0
    %v1158 = vmax.f32 %v1078, 0.0
    %v1159 = vmax.f32 %v1079, 0.0
    %v1160 = vmax.f32 %v1080, 0.0
    %v1161 = vmax.f32 %v1081, 0.0
    %v1162 = vmax.f32 %v1082, 0.0
    %v1163 = vmax.f32 %v1083, 0.0
    %v1164 = vmax.f32 %v1084, 0.0
    %v1165 = vmax.f32 %v1085, 0.0
    %v1166 = vmax.f32 %v1086, 0.0
    %v1167 = vmax.f32 %v1087, 0.0
    %v1168 = vmax.f32 %v1088, 0.0
    %v1169 = vmax.f32 %v1089, 0.0
    %v1170 = vmax.f32 %v1090, 0.0
    %v1171 = vmax.f32 %v1091, 0.0
    %v1172 = vmax.f32 %v1092, 0.0
    %v1173 = vmax.f32 %v1093, 0.0
    %v1174 = vmax.f32 %v1094, 0.0
    %v1175 = vmax.f32 %v1095, 0.0
    %v1176 = vmax.f32 %v1096, 0.0
    %v1177 = vmax.f32 %v1097, 0.0
    %v1178 = vmax.f32 %v1098, 0.0
    %v1179 = vmax.f32 %v1099, 0.0
    %v1180 = vmax.f32 %v1100, 0.0
    %v1181 = vmax.f32 %v1101, 0.0
    %v1182 = vmax.f32 %v1102, 0.0
    %v1183 = vmax.f32 %v1103, 0.0
    %v1184 = vmax.f32 %v1104, 0.0
    %v1185 = vmax.f32 %v1105, 0.0
    %v1186 = vmax.f32 %v1106, 0.0
    %v1187 = vmax.f32 %v1107, 0.0
    %v1188 = vmax.f32 %v1108, 0.0
    %v1189 = vmax.f32 %v1109, 0.0
    %v1190 = vmax.f32 %v1110, 0.0
    %v1191 = vmax.f32 %v1111, 0.0
    %v1192 = vmax.f32 %v1112, 0.0
    %v1193 = vmax.f32 %v1113, 0.0
    %v1194 = vmax.f32 %v1114, 0.0
    %v1195 = vmax.f32 %v1115, 0.0
    %v1196 = vmax.f32 %v1116, 0.0
    %v1197 = vmax.f32 %v1117, 0.0
    %v1198 = vmax.f32 %v1118, 0.0
    %v1199 = vmax.f32 %v1119, 0.0
    %v1200 = vmax.f32 %v1120, 0.0
    %v1201 = vmax.f32 %v1121, 0.0
    %v1202 = vmax.f32 %v1122, 0.0
    %v1203 = vmax.f32 %v1123, 0.0
    %v1204 = vmax.f32 %v1124, 0.0
    %v1205 = vmax.f32 %v1125, 0.0
    %v1206 = vmax.f32 %v1126, 0.0
    %v1207 = vmax.f32 %v1127, 0.0
    %v1208 = vmax.f32 %v1128, 0.0
    %v1209 = vmax.f32 %v1129, 0.0
    %v1210 = vmax.f32 %v1130, 0.0
    %v1211 = vmax.f32 %v1131, 0.0
    %v1212 = vmax.f32 %v1132, 0.0
    %v1213 = vmax.f32 %v1133, 0.0
    %v1214 = vmax.f32 %v1134, 0.0
    %v1215 = vmax.f32 %v1135, 0.0
    %v1216 = vmax.f32 %v1136, 0.0
    %v1217 = vmax.f32 %v1137, 0.0
    %v1218 = vmax.f32 %v1138, 0.0
    %v1219 = vmax.f32 %v1139, 0.0
    %v1220 = vmax.f32 %v1140, 0.0
    %v1221 = vmax.f32 %v1141, 0.0
    %v1222 = vmax.f32 %v1142, 0.0
    %v1223 = vmax.f32 %v1143, 0.0
    %v1224 = vmax.f32 %v1144, 0.0
    %v1225 = vmax.f32 %v1145, 0.0
    %v1226 = vmax.f32 %v1146, 0.0
    %v1227 = vmax.f32 %v1147, 0.0
    %v1228 = vmax.f32 %v1148, 0.0
    %v1229 = vmax.f32 %v1149, 0.0
    %v1230 = vmax.f32 %v1150, 0.0
    %v1231 = vmax.f32 %v1151, 0.0
    %v1232 = vmax.f32 %v1152, 0.0
    %v1233 = vmax.f32 %v1153, 0.0
    %v1234 = vmax.f32 %v1154, 0.0
    %v1235 = vmax.f32 %v1155, 0.0
    %v1236 = vld [vmem:[%s3] sm:$0xff]
    %v1237 = vld [vmem:[%s3 + $0x8] sm:$0xff]
    %v1238 = vld [vmem:[%s3 + $0x10] sm:$0xf]
    %v1239 = vld [vmem:[%s3 + $0x14] sm:$0xff]
    %v1240 = vld [vmem:[%s3 + $0x1c] sm:$0xff]
    %v1241 = vld [vmem:[%s3 + $0x24] sm:$0xf]
    %v1242 = vld [vmem:[%s3 + $0x28] sm:$0xff]
    %v1243 = vld [vmem:[%s3 + $0x30] sm:$0xff]
    %v1244 = vld [vmem:[%s3 + $0x38] sm:$0xf]
    %v1245 = vld [vmem:[%s3 + $0x3c] sm:$0xff]
    %v1246 = vld [vmem:[%s3 + $0x44] sm:$0xff]
    %v1247 = vld [vmem:[%s3 + $0x4c] sm:$0xf]
    %v1248 = vld [vmem:[%s3 + $0x50] sm:$0xff]
    %v1249 = vld [vmem:[%s3 + $0x58] sm:$0xff]
    %v1250 = vld [vmem:[%s3 + $0x60] sm:$0xf]
    %v1251 = vld [vmem:[%s3 + $0x64] sm:$0xff]
    %v1252 = vld [vmem:[%s3 + $0x6c] sm:$0xff]
    %v1253 = vld [vmem:[%s3 + $0x74] sm:$0xf]
    %v1254 = vld [vmem:[%s3 + $0x78] sm:$0xff]
    %v1255 = vld [vmem:[%s3 + $0x80] sm:$0xff]
    %v1256 = vld [vmem:[%s3 + $0x88] sm:$0xf]
    %v1257 = vld [vmem:[%s3 + $0x8c] sm:$0xff]
    %v1258 = vld [vmem:[%s3 + $0x94] sm:$0xff]
    %v1259 = vld [vmem:[%s3 + $0x9c] sm:$0xf]
    %v1260 = vld [vmem:[%s3 + $0xa0] sm:$0xff]
    %v1261 = vld [vmem:[%s3 + $0xa8] sm:$0xff]
    %v1262 = vld [vmem:[%s3 + $0xb0] sm:$0xf]
    %v1263 = vld [vmem:[%s3 + $0xb4] sm:$0xff]
    %v1264 = vld [vmem:[%s3 + $0xbc] sm:$0xff]
    %v1265 = vld [vmem:[%s3 + $0xc4] sm:$0xf]
    %v1266 = vld [vmem:[%s3 + $0xc8] sm:$0xff]
    %v1267 = vld [vmem:[%s3 + $0xd0] sm:$0xff]
    %v1268 = vld [vmem:[%s3 + $0xd8] sm:$0xf]
    %v1269 = vld [vmem:[%s3 + $0xdc] sm:$0xff]
    %v1270 = vld [vmem:[%s3 + $0xe4] sm:$0xff]
    %v1271 = vld [vmem:[%s3 + $0xec] sm:$0xf]
    %v1272 = vld [vmem:[%s3 + $0xf0] sm:$0xff]
    %v1273 = vld [vmem:[%s3 + $0xf8] sm:$0xff]
    %v1274 = vld [vmem:[%s3 + $0x100] sm:$0xf]
    %v1275 = vld [vmem:[%s3 + $0x104] sm:$0xff]
    %v1276 = vld [vmem:[%s3 + $0x10c] sm:$0xff]
    %v1277 = vld [vmem:[%s3 + $0x114] sm:$0xf]
    %v1278 = vld [vmem:[%s3 + $0x118] sm:$0xff]
    %v1279 = vld [vmem:[%s3 + $0x120] sm:$0xff]
    %v1280 = vld [vmem:[%s3 + $0x128] sm:$0xf]
    %v1281 = vld [vmem:[%s3 + $0x12c] sm:$0xff]
    %v1282 = vld [vmem:[%s3 + $0x134] sm:$0xff]
    %v1283 = vld [vmem:[%s3 + $0x13c] sm:$0xf]
    %v1284 = vld [vmem:[%s3 + $0x140] sm:$0xff]
    %v1285 = vld [vmem:[%s3 + $0x148] sm:$0xff]
    %v1286 = vld [vmem:[%s3 + $0x150] sm:$0xf]
    %v1287 = vld [vmem:[%s3 + $0x154] sm:$0xff]
    %v1288 = vld [vmem:[%s3 + $0x15c] sm:$0xff]
    %v1289 = vld [vmem:[%s3 + $0x164] sm:$0xf]
    %v1290 = vld [vmem:[%s3 + $0x168] sm:$0xff]
    %v1291 = vld [vmem:[%s3 + $0x170] sm:$0xff]
    %v1292 = vld [vmem:[%s3 + $0x178] sm:$0xf]
    %v1293 = vld [vmem:[%s3 + $0x17c] sm:$0xff]
    %v1294 = vld [vmem:[%s3 + $0x184] sm:$0xff]
    %v1295 = vld [vmem:[%s3 + $0x18c] sm:$0xf]
    %v1296 = vld [vmem:[%s3 + $0x190] sm:$0xff]
    %v1297 = vld [vmem:[%s3 + $0x198] sm:$0xff]
    %v1298 = vld [vmem:[%s3 + $0x1a0] sm:$0xf]
    %v1299 = vld [vmem:[%s3 + $0x1a4] sm:$0xff]
    %v1300 = vld [vmem:[%s3 + $0x1ac] sm:$0xff]
    %v1301 = vld [vmem:[%s3 + $0x1b4] sm:$0xf]
    %v1302 = vld [vmem:[%s3 + $0x1b8] sm:$0xff]
    %v1303 = vld [vmem:[%s3 + $0x1c0] sm:$0xff]
    %v1304 = vld [vmem:[%s3 + $0x1c8] sm:$0xf]
    %v1305 = vld [vmem:[%s3 + $0x1cc] sm:$0xff]
    %v1306 = vld [vmem:[%s3 + $0x1d4] sm:$0xff]
    %v1307 = vld [vmem:[%s3 + $0x1dc] sm:$0xf]
    %v1308 = vld [vmem:[%s3 + $0x1e0] sm:$0xff]
    %v1309 = vld [vmem:[%s3 + $0x1e8] sm:$0xff]
    %v1310 = vld [vmem:[%s3 + $0x1f0] sm:$0xf]
    %v1311 = vld [vmem:[%s3 + $0x1f4] sm:$0xff]
    %v1312 = vld [vmem:[%s3 + $0x1fc] sm:$0xff]
    %v1313 = vld [vmem:[%s3 + $0x204] sm:$0xf]
    %v1314 = vld [vmem:[%s3 + $0x208] sm:$0xff]
    %v1315 = vld [vmem:[%s3 + $0x210] sm:$0xff]
    %v1316 = vld [vmem:[%s3 + $0x218] sm:$0xf]
    %v1317 = vld [vmem:[%s3 + $0x21c] sm:$0xff]
    %v1318 = vld [vmem:[%s3 + $0x224] sm:$0xff]
    %v1319 = vld [vmem:[%s3 + $0x22c] sm:$0xf]
    %v1320 = vld [vmem:[%s3 + $0x230] sm:$0xff]
    %v1321 = vld [vmem:[%s3 + $0x238] sm:$0xff]
    %v1322 = vld [vmem:[%s3 + $0x240] sm:$0xf]
    %v1323 = vld [vmem:[%s3 + $0x244] sm:$0xff]
    %v1324 = vld [vmem:[%s3 + $0x24c] sm:$0xff]
    %v1325 = vld [vmem:[%s3 + $0x254] sm:$0xf]
    %v1326 = vld [vmem:[%s3 + $0x258] sm:$0xff]
    %v1327 = vld [vmem:[%s3 + $0x260] sm:$0xff]
    %v1328 = vld [vmem:[%s3 + $0x268] sm:$0xf]
    %v1329 = vld [vmem:[%s3 + $0x26c] sm:$0xff]
    %v1330 = vld [vmem:[%s3 + $0x274] sm:$0xff]
    %v1331 = vld [vmem:[%s3 + $0x27c] sm:$0xf]
    %v1332 = vld [vmem:[%s3 + $0x280] sm:$0xff]
    %v1333 = vld [vmem:[%s3 + $0x288] sm:$0xff]
    %v1334 = vld [vmem:[%s3 + $0x290] sm:$0xf]
    %v1335 = vld [vmem:[%s3 + $0x294] sm:$0xff]
    %v1336 = vld [vmem:[%s3 + $0x29c] sm:$0xff]
    %v1337 = vld [vmem:[%s3 + $0x2a4] sm:$0xf]
    %v1338 = vld [vmem:[%s3 + $0x2a8] sm:$0xff]
    %v1339 = vld [vmem:[%s3 + $0x2b0] sm:$0xff]
    %v1340 = vld [vmem:[%s3 + $0x2b8] sm:$0xf]
    %v1341 = vld [vmem:[%s3 + $0x2bc] sm:$0xff]
    %v1342 = vld [vmem:[%s3 + $0x2c4] sm:$0xff]
    %v1343 = vld [vmem:[%s3 + $0x2cc] sm:$0xf]
    %v1344 = vld [vmem:[%s3 + $0x2d0] sm:$0xff]
    %v1345 = vld [vmem:[%s3 + $0x2d8] sm:$0xff]
    %v1346 = vld [vmem:[%s3 + $0x2e0] sm:$0xf]
    %v1347 = vld [vmem:[%s3 + $0x2e4] sm:$0xff]
    %v1348 = vld [vmem:[%s3 + $0x2ec] sm:$0xff]
    %v1349 = vld [vmem:[%s3 + $0x2f4] sm:$0xf]
    %v1350 = vld [vmem:[%s3 + $0x2f8] sm:$0xff]
    %v1351 = vld [vmem:[%s3 + $0x300] sm:$0xff]
    %v1352 = vld [vmem:[%s3 + $0x308] sm:$0xf]
    %v1353 = vld [vmem:[%s3 + $0x30c] sm:$0xff]
    %v1354 = vld [vmem:[%s3 + $0x314] sm:$0xff]
    %v1355 = vld [vmem:[%s3 + $0x31c] sm:$0xf]
    %v1356 = vld [vmem:[%s3 + $0x320] sm:$0xff]
    %v1357 = vld [vmem:[%s3 + $0x328] sm:$0xff]
    %v1358 = vld [vmem:[%s3 + $0x330] sm:$0xf]
    %v1359 = vld [vmem:[%s3 + $0x334] sm:$0xff]
    %v1360 = vld [vmem:[%s3 + $0x33c] sm:$0xff]
    %v1361 = vld [vmem:[%s3 + $0x344] sm:$0xf]
    %v1362 = vld [vmem:[%s3 + $0x348] sm:$0xff]
    %v1363 = vld [vmem:[%s3 + $0x350] sm:$0xff]
    %v1364 = vld [vmem:[%s3 + $0x358] sm:$0xf]
    %v1365 = vld [vmem:[%s3 + $0x35c] sm:$0xff]
    %v1366 = vld [vmem:[%s3 + $0x364] sm:$0xff]
    %v1367 = vld [vmem:[%s3 + $0x36c] sm:$0xf]
    %v1368 = vld [vmem:[%s3 + $0x370] sm:$0xff]
    %v1369 = vld [vmem:[%s3 + $0x378] sm:$0xff]
    %v1370 = vld [vmem:[%s3 + $0x380] sm:$0xf]
    %v1371 = vld [vmem:[%s3 + $0x384] sm:$0xff]
    %v1372 = vld [vmem:[%s3 + $0x38c] sm:$0xff]
    %v1373 = vld [vmem:[%s3 + $0x394] sm:$0xf]
    %v1374 = vld [vmem:[%s3 + $0x398] sm:$0xff]
    %v1375 = vld [vmem:[%s3 + $0x3a0] sm:$0xff]
    %v1376 = vld [vmem:[%s3 + $0x3a8] sm:$0xf]
    %v1377 = vld [vmem:[%s3 + $0x3ac] sm:$0xff]
    %v1378 = vld [vmem:[%s3 + $0x3b4] sm:$0xff]
    %v1379 = vld [vmem:[%s3 + $0x3bc] sm:$0xf]
    %v1380 = vld [vmem:[%s3 + $0x3c0] sm:$0xff]
    %v1381 = vld [vmem:[%s3 + $0x3c8] sm:$0xff]
    %v1382 = vld [vmem:[%s3 + $0x3d0] sm:$0xf]
    %v1383 = vld [vmem:[%s3 + $0x3d4] sm:$0xff]
    %v1384 = vld [vmem:[%s3 + $0x3dc] sm:$0xff]
    %v1385 = vld [vmem:[%s3 + $0x3e4] sm:$0xf]
    %v1386 = vld [vmem:[%s3 + $0x3e8] sm:$0xff]
    %v1387 = vld [vmem:[%s3 + $0x3f0] sm:$0xff]
    %v1388 = vld [vmem:[%s3 + $0x3f8] sm:$0xf]
    %v1389 = vld [vmem:[%s3 + $0x3fc] sm:$0xff]
    %v1390 = vld [vmem:[%s3 + $0x404] sm:$0xff]
    %v1391 = vld [vmem:[%s3 + $0x40c] sm:$0xf]
    %v1392 = vld [vmem:[%s3 + $0x410] sm:$0xff]
    %v1393 = vld [vmem:[%s3 + $0x418] sm:$0xff]
    %v1394 = vld [vmem:[%s3 + $0x420] sm:$0xf]
    %v1395 = vld [vmem:[%s3 + $0x424] sm:$0xff]
    %v1396 = vld [vmem:[%s3 + $0x42c] sm:$0xff]
    %v1397 = vld [vmem:[%s3 + $0x434] sm:$0xf]
    %v1398 = vld [vmem:[%s3 + $0x438] sm:$0xff]
    %v1399 = vld [vmem:[%s3 + $0x440] sm:$0xff]
    %v1400 = vld [vmem:[%s3 + $0x448] sm:$0xf]
    %v1401 = vld [vmem:[%s3 + $0x44c] sm:$0xff]
    %v1402 = vld [vmem:[%s3 + $0x454] sm:$0xff]
    %v1403 = vld [vmem:[%s3 + $0x45c] sm:$0xf]
    %v1404 = vld [vmem:[%s3 + $0x460] sm:$0xff]
    %v1405 = vld [vmem:[%s3 + $0x468] sm:$0xff]
    %v1406 = vld [vmem:[%s3 + $0x470] sm:$0xf]
    %v1407 = vld [vmem:[%s3 + $0x474] sm:$0xff]
    %v1408 = vld [vmem:[%s3 + $0x47c] sm:$0xff]
    %v1409 = vld [vmem:[%s3 + $0x484] sm:$0xf]
    %v1410 = vld [vmem:[%s3 + $0x488] sm:$0xff]
    %v1411 = vld [vmem:[%s3 + $0x490] sm:$0xff]
    %v1412 = vld [vmem:[%s3 + $0x498] sm:$0xf]
    %v1413 = vld [vmem:[%s3 + $0x49c] sm:$0xff]
    %v1414 = vld [vmem:[%s3 + $0x4a4] sm:$0xff]
    %v1415 = vld [vmem:[%s3 + $0x4ac] sm:$0xf]
    %v1416 = vld [vmem:[%s3 + $0x4b0] sm:$0xff]
    %v1417 = vld [vmem:[%s3 + $0x4b8] sm:$0xff]
    %v1418 = vld [vmem:[%s3 + $0x4c0] sm:$0xf]
    %v1419 = vld [vmem:[%s3 + $0x4c4] sm:$0xff]
    %v1420 = vld [vmem:[%s3 + $0x4cc] sm:$0xff]
    %v1421 = vld [vmem:[%s3 + $0x4d4] sm:$0xf]
    %v1422 = vld [vmem:[%s3 + $0x4d8] sm:$0xff]
    %v1423 = vld [vmem:[%s3 + $0x4e0] sm:$0xff]
    %v1424 = vld [vmem:[%s3 + $0x4e8] sm:$0xf]
    %v1425 = vld [vmem:[%s3 + $0x4ec] sm:$0xff]
    %v1426 = vld [vmem:[%s3 + $0x4f4] sm:$0xff]
    %v1427 = vld [vmem:[%s3 + $0x4fc] sm:$0xf]
    %v1428 = vld [vmem:[%s3 + $0x500] sm:$0xff]
    %v1429 = vld [vmem:[%s3 + $0x508] sm:$0xff]
    %v1430 = vld [vmem:[%s3 + $0x510] sm:$0xf]
    %v1431 = vld [vmem:[%s3 + $0x514] sm:$0xff]
    %v1432 = vld [vmem:[%s3 + $0x51c] sm:$0xff]
    %v1433 = vld [vmem:[%s3 + $0x524] sm:$0xf]
    %v1434 = vld [vmem:[%s3 + $0x528] sm:$0xff]
    %v1435 = vld [vmem:[%s3 + $0x530] sm:$0xff]
    %v1436 = vld [vmem:[%s3 + $0x538] sm:$0xf]
    %v1437 = vld [vmem:[%s3 + $0x53c] sm:$0xff]
    %v1438 = vld [vmem:[%s3 + $0x544] sm:$0xff]
    %v1439 = vld [vmem:[%s3 + $0x54c] sm:$0xf]
    %v1440 = vld [vmem:[%s3 + $0x550] sm:$0xff]
    %v1441 = vld [vmem:[%s3 + $0x558] sm:$0xff]
    %v1442 = vld [vmem:[%s3 + $0x560] sm:$0xf]
    %v1443 = vld [vmem:[%s3 + $0x564] sm:$0xff]
    %v1444 = vld [vmem:[%s3 + $0x56c] sm:$0xff]
    %v1445 = vld [vmem:[%s3 + $0x574] sm:$0xf]
    %v1446 = vld [vmem:[%s3 + $0x578] sm:$0xff]
    %v1447 = vld [vmem:[%s3 + $0x580] sm:$0xff]
    %v1448 = vld [vmem:[%s3 + $0x588] sm:$0xf]
    %v1449 = vld [vmem:[%s3 + $0x58c] sm:$0xff]
    %v1450 = vld [vmem:[%s3 + $0x594] sm:$0xff]
    %v1451 = vld [vmem:[%s3 + $0x59c] sm:$0xf]
    %v1452 = vld [vmem:[%s3 + $0x5a0] sm:$0xff]
    %v1453 = vld [vmem:[%s3 + $0x5a8] sm:$0xff]
    %v1454 = vld [vmem:[%s3 + $0x5b0] sm:$0xf]
    %v1455 = vld [vmem:[%s3 + $0x5b4] sm:$0xff]
    %v1456 = vld [vmem:[%s3 + $0x5bc] sm:$0xff]
    %v1457 = vld [vmem:[%s3 + $0x5c4] sm:$0xf]
    %v1458 = vld [vmem:[%s3 + $0x5c8] sm:$0xff]
    %v1459 = vld [vmem:[%s3 + $0x5d0] sm:$0xff]
    %v1460 = vld [vmem:[%s3 + $0x5d8] sm:$0xf]
    %v1461 = vld [vmem:[%s3 + $0x5dc] sm:$0xff]
    %v1462 = vld [vmem:[%s3 + $0x5e4] sm:$0xff]
    %v1463 = vld [vmem:[%s3 + $0x5ec] sm:$0xf]
    %v1464 = vld [vmem:[%s3 + $0x5f0] sm:$0xff]
    %v1465 = vld [vmem:[%s3 + $0x5f8] sm:$0xff]
    %v1466 = vld [vmem:[%s3 + $0x600] sm:$0xf]
    %v1467 = vld [vmem:[%s3 + $0x604] sm:$0xff]
    %v1468 = vld [vmem:[%s3 + $0x60c] sm:$0xff]
    %v1469 = vld [vmem:[%s3 + $0x614] sm:$0xf]
    %v1470 = vld [vmem:[%s3 + $0x618] sm:$0xff]
    %v1471 = vld [vmem:[%s3 + $0x620] sm:$0xff]
    %v1472 = vld [vmem:[%s3 + $0x628] sm:$0xf]
    %v1473 = vld [vmem:[%s3 + $0x62c] sm:$0xff]
    %v1474 = vld [vmem:[%s3 + $0x634] sm:$0xff]
    %v1475 = vld [vmem:[%s3 + $0x63c] sm:$0xf]
    %v1476 = vpack.c.bf16 %v1157, %v1156
    %v1477 = vpack.c.bf16 %v1159, %v1158
    %v1478 = vpack.c.bf16 %v1161, %v1160
    %v1479 = vpack.c.bf16 %v1163, %v1162
    %v1480 = vpack.c.bf16 %v1165, %v1164
    %v1481 = vpack.c.bf16 %v1167, %v1166
    %v1482 = vpack.c.bf16 %v1169, %v1168
    %v1483 = vpack.c.bf16 %v1171, %v1170
    %v1484 = vpack.c.bf16 %v1173, %v1172
    %v1485 = vpack.c.bf16 %v1175, %v1174
    %v1486 = vpack.c.bf16 %v1177, %v1176
    %v1487 = vpack.c.bf16 %v1179, %v1178
    %v1488 = vpack.c.bf16 %v1181, %v1180
    %v1489 = vpack.c.bf16 %v1183, %v1182
    %v1490 = vpack.c.bf16 %v1185, %v1184
    %v1491 = vpack.c.bf16 %v1187, %v1186
    %v1492 = vpack.c.bf16 %v1189, %v1188
    %v1493 = vpack.c.bf16 %v1191, %v1190
    %v1494 = vpack.c.bf16 %v1193, %v1192
    %v1495 = vpack.c.bf16 %v1195, %v1194
    %v1496 = vpack.c.bf16 %v1197, %v1196
    %v1497 = vpack.c.bf16 %v1199, %v1198
    %v1498 = vpack.c.bf16 %v1201, %v1200
    %v1499 = vpack.c.bf16 %v1203, %v1202
    %v1500 = vpack.c.bf16 %v1205, %v1204
    %v1501 = vpack.c.bf16 %v1207, %v1206
    %v1502 = vpack.c.bf16 %v1209, %v1208
    %v1503 = vpack.c.bf16 %v1211, %v1210
    %v1504 = vpack.c.bf16 %v1213, %v1212
    %v1505 = vpack.c.bf16 %v1215, %v1214
    %v1506 = vpack.c.bf16 %v1217, %v1216
    %v1507 = vpack.c.bf16 %v1219, %v1218
    %v1508 = vpack.c.bf16 %v1221, %v1220
    %v1509 = vpack.c.bf16 %v1223, %v1222
    %v1510 = vpack.c.bf16 %v1225, %v1224
    %v1511 = vpack.c.bf16 %v1227, %v1226
    %v1512 = vpack.c.bf16 %v1229, %v1228
    %v1513 = vpack.c.bf16 %v1231, %v1230
    %v1514 = vpack.c.bf16 %v1233, %v1232
    %v1515 = vpack.c.bf16 %v1235, %v1234
    %v1516 = vld [vmem:[%s4] sm:$0xff]
    %v1517 = vld [vmem:[%s4 + $0x8] sm:$0xff]
    %v1518 = vld [vmem:[%s4 + $0x10] sm:$0xff]
    %v1519 = vld [vmem:[%s4 + $0x18] sm:$0xff]
    %v1520 = vld [vmem:[%s4 + $0x20] sm:$0xff]
    %v1521 = vld [vmem:[%s4 + $0x28] sm:$0xff]
    %v1522 = vld [vmem:[%s4 + $0x30] sm:$0xff]
    %v1523 = vld [vmem:[%s4 + $0x38] sm:$0xff]
    %v1524 = vld [vmem:[%s4 + $0x40] sm:$0xff]
    %v1525 = vld [vmem:[%s4 + $0x48] sm:$0xff]
    %v1526 = vld [vmem:[%s4 + $0x50] sm:$0xff]
    %v1527 = vld [vmem:[%s4 + $0x58] sm:$0xff]
    %v1528 = vld [vmem:[%s4 + $0x60] sm:$0xff]
    %v1529 = vld [vmem:[%s4 + $0x68] sm:$0xff]
    %v1530 = vld [vmem:[%s4 + $0x70] sm:$0xff]
    %v1531 = vld [vmem:[%s4 + $0x78] sm:$0xff]
    %v1532 = vld [vmem:[%s4 + $0x80] sm:$0xff]
    %v1533 = vld [vmem:[%s4 + $0x88] sm:$0xff]
    %v1534 = vld [vmem:[%s4 + $0x90] sm:$0xff]
    %v1535 = vld [vmem:[%s4 + $0x98] sm:$0xff]
    %v1536 = vld [vmem:[%s4 + $0xa0] sm:$0xff]
    %v1537 = vld [vmem:[%s4 + $0xa8] sm:$0xff]
    %v1538 = vld [vmem:[%s4 + $0xb0] sm:$0xff]
    %v1539 = vld [vmem:[%s4 + $0xb8] sm:$0xff]
    %v1540 = vld [vmem:[%s4 + $0xc0] sm:$0xff]
    %v1541 = vld [vmem:[%s4 + $0xc8] sm:$0xff]
    %v1542 = vld [vmem:[%s4 + $0xd0] sm:$0xff]
    %v1543 = vld [vmem:[%s4 + $0xd8] sm:$0xff]
    %v1544 = vld [vmem:[%s4 + $0xe0] sm:$0xff]
    %v1545 = vld [vmem:[%s4 + $0xe8] sm:$0xff]
    %v1546 = vld [vmem:[%s4 + $0xf0] sm:$0xff]
    %v1547 = vld [vmem:[%s4 + $0xf8] sm:$0xff]
    %v1548 = vld [vmem:[%s4 + $0x100] sm:$0xff]
    %v1549 = vld [vmem:[%s4 + $0x108] sm:$0xff]
    %v1550 = vld [vmem:[%s4 + $0x110] sm:$0xff]
    %v1551 = vld [vmem:[%s4 + $0x118] sm:$0xff]
    %v1552 = vld [vmem:[%s4 + $0x120] sm:$0xff]
    %v1553 = vld [vmem:[%s4 + $0x128] sm:$0xff]
    %v1554 = vld [vmem:[%s4 + $0x130] sm:$0xff]
    %v1555 = vld [vmem:[%s4 + $0x138] sm:$0xff]
    %v1556 = vld [vmem:[%s4 + $0x140] sm:$0xff]
    %v1557 = vld [vmem:[%s4 + $0x148] sm:$0xff]
    %v1558 = vld [vmem:[%s4 + $0x150] sm:$0xff]
    %v1559 = vld [vmem:[%s4 + $0x158] sm:$0xff]
    %v1560 = vld [vmem:[%s4 + $0x160] sm:$0xff]
    %v1561 = vld [vmem:[%s4 + $0x168] sm:$0xff]
    %v1562 = vld [vmem:[%s4 + $0x170] sm:$0xff]
    %v1563 = vld [vmem:[%s4 + $0x178] sm:$0xff]
    %v1564 = vld [vmem:[%s4 + $0x180] sm:$0xff]
    %v1565 = vld [vmem:[%s4 + $0x188] sm:$0xff]
    %v1566 = vld [vmem:[%s4 + $0x190] sm:$0xff]
    %v1567 = vld [vmem:[%s4 + $0x198] sm:$0xff]
    %v1568 = vld [vmem:[%s4 + $0x1a0] sm:$0xff]
    %v1569 = vld [vmem:[%s4 + $0x1a8] sm:$0xff]
    %v1570 = vld [vmem:[%s4 + $0x1b0] sm:$0xff]
    %v1571 = vld [vmem:[%s4 + $0x1b8] sm:$0xff]
    %v1572 = vld [vmem:[%s4 + $0x1c0] sm:$0xff]
    %v1573 = vld [vmem:[%s4 + $0x1c8] sm:$0xff]
    %v1574 = vld [vmem:[%s4 + $0x1d0] sm:$0xff]
    %v1575 = vld [vmem:[%s4 + $0x1d8] sm:$0xff]
    %v1576 = vld [vmem:[%s4 + $0x1e0] sm:$0xff]
    %v1577 = vld [vmem:[%s4 + $0x1e8] sm:$0xff]
    %v1578 = vld [vmem:[%s4 + $0x1f0] sm:$0xff]
    %v1579 = vld [vmem:[%s4 + $0x1f8] sm:$0xff]
    %v1580 = vld [vmem:[%s4 + $0x200] sm:$0xff]
    %v1581 = vld [vmem:[%s4 + $0x208] sm:$0xff]
    %v1582 = vld [vmem:[%s4 + $0x210] sm:$0xff]
    %v1583 = vld [vmem:[%s4 + $0x218] sm:$0xff]
    %v1584 = vld [vmem:[%s4 + $0x220] sm:$0xff]
    %v1585 = vld [vmem:[%s4 + $0x228] sm:$0xff]
    %v1586 = vld [vmem:[%s4 + $0x230] sm:$0xff]
    %v1587 = vld [vmem:[%s4 + $0x238] sm:$0xff]
    %v1588 = vld [vmem:[%s4 + $0x240] sm:$0xff]
    %v1589 = vld [vmem:[%s4 + $0x248] sm:$0xff]
    %v1590 = vld [vmem:[%s4 + $0x250] sm:$0xff]
    %v1591 = vld [vmem:[%s4 + $0x258] sm:$0xff]
    %v1592 = vld [vmem:[%s4 + $0x260] sm:$0xff]
    %v1593 = vld [vmem:[%s4 + $0x268] sm:$0xff]
    %v1594 = vld [vmem:[%s4 + $0x270] sm:$0xff]
    %v1595 = vld [vmem:[%s4 + $0x278] sm:$0xff]
    %1597 = vset.pattern.permute.xlu0 0
    %1598 = vperm.xlu0 %1597, %v1516
    %v1599 = vpop.permute.xlu0 %1598
    %1602 = vset.pattern.permute.xlu0 0
    %1603 = vperm.xlu0 %1602, %v1517
    %v1604 = vpop.permute.xlu0 %1603
    %1607 = vset.pattern.permute.xlu0 0
    %1608 = vperm.xlu0 %1607, %v1518
    %v1609 = vpop.permute.xlu0 %1608
    %1612 = vset.pattern.permute.xlu0 0
    %1613 = vperm.xlu0 %1612, %v1519
    %v1614 = vpop.permute.xlu0 %1613
    %1617 = vset.pattern.permute.xlu0 0
    %1618 = vperm.xlu0 %1617, %v1520
    %v1619 = vpop.permute.xlu0 %1618
    %1622 = vset.pattern.permute.xlu0 0
    %1623 = vperm.xlu0 %1622, %v1521
    %v1624 = vpop.permute.xlu0 %1623
    %1627 = vset.pattern.permute.xlu0 0
    %1628 = vperm.xlu0 %1627, %v1522
    %v1629 = vpop.permute.xlu0 %1628
    %1632 = vset.pattern.permute.xlu0 0
    %1633 = vperm.xlu0 %1632, %v1523
    %v1634 = vpop.permute.xlu0 %1633
    %1637 = vset.pattern.permute.xlu0 0
    %1638 = vperm.xlu0 %1637, %v1524
    %v1639 = vpop.permute.xlu0 %1638
    %1642 = vset.pattern.permute.xlu0 0
    %1643 = vperm.xlu0 %1642, %v1525
    %v1644 = vpop.permute.xlu0 %1643
    %1647 = vset.pattern.permute.xlu0 0
    %1648 = vperm.xlu0 %1647, %v1526
    %v1649 = vpop.permute.xlu0 %1648
    %1652 = vset.pattern.permute.xlu0 0
    %1653 = vperm.xlu0 %1652, %v1527
    %v1654 = vpop.permute.xlu0 %1653
    %1657 = vset.pattern.permute.xlu0 0
    %1658 = vperm.xlu0 %1657, %v1528
    %v1659 = vpop.permute.xlu0 %1658
    %1662 = vset.pattern.permute.xlu0 0
    %1663 = vperm.xlu0 %1662, %v1529
    %v1664 = vpop.permute.xlu0 %1663
    %1667 = vset.pattern.permute.xlu0 0
    %1668 = vperm.xlu0 %1667, %v1530
    %v1669 = vpop.permute.xlu0 %1668
    %1672 = vset.pattern.permute.xlu0 0
    %1673 = vperm.xlu0 %1672, %v1531
    %v1674 = vpop.permute.xlu0 %1673
    %1677 = vset.pattern.permute.xlu0 0
    %1678 = vperm.xlu0 %1677, %v1532
    %v1679 = vpop.permute.xlu0 %1678
    %1682 = vset.pattern.permute.xlu0 0
    %1683 = vperm.xlu0 %1682, %v1533
    %v1684 = vpop.permute.xlu0 %1683
    %1687 = vset.pattern.permute.xlu0 0
    %1688 = vperm.xlu0 %1687, %v1534
    %v1689 = vpop.permute.xlu0 %1688
    %1692 = vset.pattern.permute.xlu0 0
    %1693 = vperm.xlu0 %1692, %v1535
    %v1694 = vpop.permute.xlu0 %1693
    %1697 = vset.pattern.permute.xlu0 0
    %1698 = vperm.xlu0 %1697, %v1536
    %v1699 = vpop.permute.xlu0 %1698
    %1702 = vset.pattern.permute.xlu0 0
    %1703 = vperm.xlu0 %1702, %v1537
    %v1704 = vpop.permute.xlu0 %1703
    %1707 = vset.pattern.permute.xlu0 0
    %1708 = vperm.xlu0 %1707, %v1538
    %v1709 = vpop.permute.xlu0 %1708
    %1712 = vset.pattern.permute.xlu0 0
    %1713 = vperm.xlu0 %1712, %v1539
    %v1714 = vpop.permute.xlu0 %1713
    %1717 = vset.pattern.permute.xlu0 0
    %1718 = vperm.xlu0 %1717, %v1540
    %v1719 = vpop.permute.xlu0 %1718
    %1722 = vset.pattern.permute.xlu0 0
    %1723 = vperm.xlu0 %1722, %v1541
    %v1724 = vpop.permute.xlu0 %1723
    %1727 = vset.pattern.permute.xlu0 0
    %1728 = vperm.xlu0 %1727, %v1542
    %v1729 = vpop.permute.xlu0 %1728
    %1732 = vset.pattern.permute.xlu0 0
    %1733 = vperm.xlu0 %1732, %v1543
    %v1734 = vpop.permute.xlu0 %1733
    %1737 = vset.pattern.permute.xlu0 0
    %1738 = vperm.xlu0 %1737, %v1544
    %v1739 = vpop.permute.xlu0 %1738
    %1742 = vset.pattern.permute.xlu0 0
    %1743 = vperm.xlu0 %1742, %v1545
    %v1744 = vpop.permute.xlu0 %1743
    %1747 = vset.pattern.permute.xlu0 0
    %1748 = vperm.xlu0 %1747, %v1546
    %v1749 = vpop.permute.xlu0 %1748
    %1752 = vset.pattern.permute.xlu0 0
    %1753 = vperm.xlu0 %1752, %v1547
    %v1754 = vpop.permute.xlu0 %1753
    %1757 = vset.pattern.permute.xlu0 0
    %1758 = vperm.xlu0 %1757, %v1548
    %v1759 = vpop.permute.xlu0 %1758
    %1762 = vset.pattern.permute.xlu0 0
    %1763 = vperm.xlu0 %1762, %v1549
    %v1764 = vpop.permute.xlu0 %1763
    %1767 = vset.pattern.permute.xlu0 0
    %1768 = vperm.xlu0 %1767, %v1550
    %v1769 = vpop.permute.xlu0 %1768
    %1772 = vset.pattern.permute.xlu0 0
    %1773 = vperm.xlu0 %1772, %v1551
    %v1774 = vpop.permute.xlu0 %1773
    %1777 = vset.pattern.permute.xlu0 0
    %1778 = vperm.xlu0 %1777, %v1552
    %v1779 = vpop.permute.xlu0 %1778
    %1782 = vset.pattern.permute.xlu0 0
    %1783 = vperm.xlu0 %1782, %v1553
    %v1784 = vpop.permute.xlu0 %1783
    %1787 = vset.pattern.permute.xlu0 0
    %1788 = vperm.xlu0 %1787, %v1554
    %v1789 = vpop.permute.xlu0 %1788
    %1792 = vset.pattern.permute.xlu0 0
    %1793 = vperm.xlu0 %1792, %v1555
    %v1794 = vpop.permute.xlu0 %1793
    %1797 = vset.pattern.permute.xlu0 0
    %1798 = vperm.xlu0 %1797, %v1556
    %v1799 = vpop.permute.xlu0 %1798
    %1802 = vset.pattern.permute.xlu0 0
    %1803 = vperm.xlu0 %1802, %v1557
    %v1804 = vpop.permute.xlu0 %1803
    %1807 = vset.pattern.permute.xlu0 0
    %1808 = vperm.xlu0 %1807, %v1558
    %v1809 = vpop.permute.xlu0 %1808
    %1812 = vset.pattern.permute.xlu0 0
    %1813 = vperm.xlu0 %1812, %v1559
    %v1814 = vpop.permute.xlu0 %1813
    %1817 = vset.pattern.permute.xlu0 0
    %1818 = vperm.xlu0 %1817, %v1560
    %v1819 = vpop.permute.xlu0 %1818
    %1822 = vset.pattern.permute.xlu0 0
    %1823 = vperm.xlu0 %1822, %v1561
    %v1824 = vpop.permute.xlu0 %1823
    %1827 = vset.pattern.permute.xlu0 0
    %1828 = vperm.xlu0 %1827, %v1562
    %v1829 = vpop.permute.xlu0 %1828
    %1832 = vset.pattern.permute.xlu0 0
    %1833 = vperm.xlu0 %1832, %v1563
    %v1834 = vpop.permute.xlu0 %1833
    %1837 = vset.pattern.permute.xlu0 0
    %1838 = vperm.xlu0 %1837, %v1564
    %v1839 = vpop.permute.xlu0 %1838
    %1842 = vset.pattern.permute.xlu0 0
    %1843 = vperm.xlu0 %1842, %v1565
    %v1844 = vpop.permute.xlu0 %1843
    %1847 = vset.pattern.permute.xlu0 0
    %1848 = vperm.xlu0 %1847, %v1566
    %v1849 = vpop.permute.xlu0 %1848
    %1852 = vset.pattern.permute.xlu0 0
    %1853 = vperm.xlu0 %1852, %v1567
    %v1854 = vpop.permute.xlu0 %1853
    %1857 = vset.pattern.permute.xlu0 0
    %1858 = vperm.xlu0 %1857, %v1568
    %v1859 = vpop.permute.xlu0 %1858
    %1862 = vset.pattern.permute.xlu0 0
    %1863 = vperm.xlu0 %1862, %v1569
    %v1864 = vpop.permute.xlu0 %1863
    %1867 = vset.pattern.permute.xlu0 0
    %1868 = vperm.xlu0 %1867, %v1570
    %v1869 = vpop.permute.xlu0 %1868
    %1872 = vset.pattern.permute.xlu0 0
    %1873 = vperm.xlu0 %1872, %v1571
    %v1874 = vpop.permute.xlu0 %1873
    %1877 = vset.pattern.permute.xlu0 0
    %1878 = vperm.xlu0 %1877, %v1572
    %v1879 = vpop.permute.xlu0 %1878
    %1882 = vset.pattern.permute.xlu0 0
    %1883 = vperm.xlu0 %1882, %v1573
    %v1884 = vpop.permute.xlu0 %1883
    %1887 = vset.pattern.permute.xlu0 0
    %1888 = vperm.xlu0 %1887, %v1574
    %v1889 = vpop.permute.xlu0 %1888
    %1892 = vset.pattern.permute.xlu0 0
    %1893 = vperm.xlu0 %1892, %v1575
    %v1894 = vpop.permute.xlu0 %1893
    %1897 = vset.pattern.permute.xlu0 0
    %1898 = vperm.xlu0 %1897, %v1576
    %v1899 = vpop.permute.xlu0 %1898
    %1902 = vset.pattern.permute.xlu0 0
    %1903 = vperm.xlu0 %1902, %v1577
    %v1904 = vpop.permute.xlu0 %1903
    %1907 = vset.pattern.permute.xlu0 0
    %1908 = vperm.xlu0 %1907, %v1578
    %v1909 = vpop.permute.xlu0 %1908
    %1912 = vset.pattern.permute.xlu0 0
    %1913 = vperm.xlu0 %1912, %v1579
    %v1914 = vpop.permute.xlu0 %1913
    %1917 = vset.pattern.permute.xlu0 0
    %1918 = vperm.xlu0 %1917, %v1580
    %v1919 = vpop.permute.xlu0 %1918
    %1922 = vset.pattern.permute.xlu0 0
    %1923 = vperm.xlu0 %1922, %v1581
    %v1924 = vpop.permute.xlu0 %1923
    %1927 = vset.pattern.permute.xlu0 0
    %1928 = vperm.xlu0 %1927, %v1582
    %v1929 = vpop.permute.xlu0 %1928
    %1932 = vset.pattern.permute.xlu0 0
    %1933 = vperm.xlu0 %1932, %v1583
    %v1934 = vpop.permute.xlu0 %1933
    %1937 = vset.pattern.permute.xlu0 0
    %1938 = vperm.xlu0 %1937, %v1584
    %v1939 = vpop.permute.xlu0 %1938
    %1942 = vset.pattern.permute.xlu0 0
    %1943 = vperm.xlu0 %1942, %v1585
    %v1944 = vpop.permute.xlu0 %1943
    %1947 = vset.pattern.permute.xlu0 0
    %1948 = vperm.xlu0 %1947, %v1586
    %v1949 = vpop.permute.xlu0 %1948
    %1952 = vset.pattern.permute.xlu0 0
    %1953 = vperm.xlu0 %1952, %v1587
    %v1954 = vpop.permute.xlu0 %1953
    %1957 = vset.pattern.permute.xlu0 0
    %1958 = vperm.xlu0 %1957, %v1588
    %v1959 = vpop.permute.xlu0 %1958
    %1962 = vset.pattern.permute.xlu0 0
    %1963 = vperm.xlu0 %1962, %v1589
    %v1964 = vpop.permute.xlu0 %1963
    %1967 = vset.pattern.permute.xlu0 0
    %1968 = vperm.xlu0 %1967, %v1590
    %v1969 = vpop.permute.xlu0 %1968
    %1972 = vset.pattern.permute.xlu0 0
    %1973 = vperm.xlu0 %1972, %v1591
    %v1974 = vpop.permute.xlu0 %1973
    %1977 = vset.pattern.permute.xlu0 0
    %1978 = vperm.xlu0 %1977, %v1592
    %v1979 = vpop.permute.xlu0 %1978
    %1982 = vset.pattern.permute.xlu0 0
    %1983 = vperm.xlu0 %1982, %v1593
    %v1984 = vpop.permute.xlu0 %1983
    %1987 = vset.pattern.permute.xlu0 0
    %1988 = vperm.xlu0 %1987, %v1594
    %v1989 = vpop.permute.xlu0 %1988
    %1992 = vset.pattern.permute.xlu0 0
    %1993 = vperm.xlu0 %1992, %v1595
    %v1994 = vpop.permute.xlu0 %1993
    %v2236 = vunpack.c.l.b16 %v1236
    %v2237 = vunpack.c.h.b16 %v1236
    %v2238 = vunpack.c.l.b16 %v1237
    %v2239 = vunpack.c.h.b16 %v1237
    %v2240 = vunpack.c.l.b16 %v1238
    %v2241 = vunpack.c.l.b16 %v1239
    %v2242 = vunpack.c.h.b16 %v1239
    %v2243 = vunpack.c.l.b16 %v1240
    %v2244 = vunpack.c.h.b16 %v1240
    %v2245 = vunpack.c.l.b16 %v1241
    %v2246 = vunpack.c.l.b16 %v1242
    %v2247 = vunpack.c.h.b16 %v1242
    %v2248 = vunpack.c.l.b16 %v1243
    %v2249 = vunpack.c.h.b16 %v1243
    %v2250 = vunpack.c.l.b16 %v1244
    %v2251 = vunpack.c.l.b16 %v1245
    %v2252 = vunpack.c.h.b16 %v1245
    %v2253 = vunpack.c.l.b16 %v1246
    %v2254 = vunpack.c.h.b16 %v1246
    %v2255 = vunpack.c.l.b16 %v1247
    %v2256 = vunpack.c.l.b16 %v1248
    %v2257 = vunpack.c.h.b16 %v1248
    %v2258 = vunpack.c.l.b16 %v1249
    %v2259 = vunpack.c.h.b16 %v1249
    %v2260 = vunpack.c.l.b16 %v1250
    %v2261 = vunpack.c.l.b16 %v1251
    %v2262 = vunpack.c.h.b16 %v1251
    %v2263 = vunpack.c.l.b16 %v1252
    %v2264 = vunpack.c.h.b16 %v1252
    %v2265 = vunpack.c.l.b16 %v1253
    %v2266 = vunpack.c.l.b16 %v1254
    %v2267 = vunpack.c.h.b16 %v1254
    %v2268 = vunpack.c.l.b16 %v1255
    %v2269 = vunpack.c.h.b16 %v1255
    %v2270 = vunpack.c.l.b16 %v1256
    %v2271 = vunpack.c.l.b16 %v1257
    %v2272 = vunpack.c.h.b16 %v1257
    %v2273 = vunpack.c.l.b16 %v1258
    %v2274 = vunpack.c.h.b16 %v1258
    %v2275 = vunpack.c.l.b16 %v1259
    %v2276 = vunpack.c.l.b16 %v1260
    %v2277 = vunpack.c.h.b16 %v1260
    %v2278 = vunpack.c.l.b16 %v1261
    %v2279 = vunpack.c.h.b16 %v1261
    %v2280 = vunpack.c.l.b16 %v1262
    %v2281 = vunpack.c.l.b16 %v1263
    %v2282 = vunpack.c.h.b16 %v1263
    %v2283 = vunpack.c.l.b16 %v1264
    %v2284 = vunpack.c.h.b16 %v1264
    %v2285 = vunpack.c.l.b16 %v1265
    %v2286 = vunpack.c.l.b16 %v1266
    %v2287 = vunpack.c.h.b16 %v1266
    %v2288 = vunpack.c.l.b16 %v1267
    %v2289 = vunpack.c.h.b16 %v1267
    %v2290 = vunpack.c.l.b16 %v1268
    %v2291 = vunpack.c.l.b16 %v1269
    %v2292 = vunpack.c.h.b16 %v1269
    %v2293 = vunpack.c.l.b16 %v1270
    %v2294 = vunpack.c.h.b16 %v1270
    %v2295 = vunpack.c.l.b16 %v1271
    %v2296 = vunpack.c.l.b16 %v1272
    %v2297 = vunpack.c.h.b16 %v1272
    %v2298 = vunpack.c.l.b16 %v1273
    %v2299 = vunpack.c.h.b16 %v1273
    %v2300 = vunpack.c.l.b16 %v1274
    %v2301 = vunpack.c.l.b16 %v1275
    %v2302 = vunpack.c.h.b16 %v1275
    %v2303 = vunpack.c.l.b16 %v1276
    %v2304 = vunpack.c.h.b16 %v1276
    %v2305 = vunpack.c.l.b16 %v1277
    %v2306 = vunpack.c.l.b16 %v1278
    %v2307 = vunpack.c.h.b16 %v1278
    %v2308 = vunpack.c.l.b16 %v1279
    %v2309 = vunpack.c.h.b16 %v1279
    %v2310 = vunpack.c.l.b16 %v1280
    %v2311 = vunpack.c.l.b16 %v1281
    %v2312 = vunpack.c.h.b16 %v1281
    %v2313 = vunpack.c.l.b16 %v1282
    %v2314 = vunpack.c.h.b16 %v1282
    %v2315 = vunpack.c.l.b16 %v1283
    %v2316 = vunpack.c.l.b16 %v1284
    %v2317 = vunpack.c.h.b16 %v1284
    %v2318 = vunpack.c.l.b16 %v1285
    %v2319 = vunpack.c.h.b16 %v1285
    %v2320 = vunpack.c.l.b16 %v1286
    %v2321 = vunpack.c.l.b16 %v1287
    %v2322 = vunpack.c.h.b16 %v1287
    %v2323 = vunpack.c.l.b16 %v1288
    %v2324 = vunpack.c.h.b16 %v1288
    %v2325 = vunpack.c.l.b16 %v1289
    %v2326 = vunpack.c.l.b16 %v1290
    %v2327 = vunpack.c.h.b16 %v1290
    %v2328 = vunpack.c.l.b16 %v1291
    %v2329 = vunpack.c.h.b16 %v1291
    %v2330 = vunpack.c.l.b16 %v1292
    %v2331 = vunpack.c.l.b16 %v1293
    %v2332 = vunpack.c.h.b16 %v1293
    %v2333 = vunpack.c.l.b16 %v1294
    %v2334 = vunpack.c.h.b16 %v1294
    %v2335 = vunpack.c.l.b16 %v1295
    %v2336 = vunpack.c.l.b16 %v1296
    %v2337 = vunpack.c.h.b16 %v1296
    %v2338 = vunpack.c.l.b16 %v1297
    %v2339 = vunpack.c.h.b16 %v1297
    %v2340 = vunpack.c.l.b16 %v1298
    %v2341 = vunpack.c.l.b16 %v1299
    %v2342 = vunpack.c.h.b16 %v1299
    %v2343 = vunpack.c.l.b16 %v1300
    %v2344 = vunpack.c.h.b16 %v1300
    %v2345 = vunpack.c.l.b16 %v1301
    %v2346 = vunpack.c.l.b16 %v1302
    %v2347 = vunpack.c.h.b16 %v1302
    %v2348 = vunpack.c.l.b16 %v1303
    %v2349 = vunpack.c.h.b16 %v1303
    %v2350 = vunpack.c.l.b16 %v1304
    %v2351 = vunpack.c.l.b16 %v1305
    %v2352 = vunpack.c.h.b16 %v1305
    %v2353 = vunpack.c.l.b16 %v1306
    %v2354 = vunpack.c.h.b16 %v1306
    %v2355 = vunpack.c.l.b16 %v1307
    %v2356 = vunpack.c.l.b16 %v1308
    %v2357 = vunpack.c.h.b16 %v1308
    %v2358 = vunpack.c.l.b16 %v1309
    %v2359 = vunpack.c.h.b16 %v1309
    %v2360 = vunpack.c.l.b16 %v1310
    %v2361 = vunpack.c.l.b16 %v1311
    %v2362 = vunpack.c.h.b16 %v1311
    %v2363 = vunpack.c.l.b16 %v1312
    %v2364 = vunpack.c.h.b16 %v1312
    %v2365 = vunpack.c.l.b16 %v1313
    %v2366 = vunpack.c.l.b16 %v1314
    %v2367 = vunpack.c.h.b16 %v1314
    %v2368 = vunpack.c.l.b16 %v1315
    %v2369 = vunpack.c.h.b16 %v1315
    %v2370 = vunpack.c.l.b16 %v1316
    %v2371 = vunpack.c.l.b16 %v1317
    %v2372 = vunpack.c.h.b16 %v1317
    %v2373 = vunpack.c.l.b16 %v1318
    %v2374 = vunpack.c.h.b16 %v1318
    %v2375 = vunpack.c.l.b16 %v1319
    %v2376 = vunpack.c.l.b16 %v1320
    %v2377 = vunpack.c.h.b16 %v1320
    %v2378 = vunpack.c.l.b16 %v1321
    %v2379 = vunpack.c.h.b16 %v1321
    %v2380 = vunpack.c.l.b16 %v1322
    %v2381 = vunpack.c.l.b16 %v1323
    %v2382 = vunpack.c.h.b16 %v1323
    %v2383 = vunpack.c.l.b16 %v1324
    %v2384 = vunpack.c.h.b16 %v1324
    %v2385 = vunpack.c.l.b16 %v1325
    %v2386 = vunpack.c.l.b16 %v1326
    %v2387 = vunpack.c.h.b16 %v1326
    %v2388 = vunpack.c.l.b16 %v1327
    %v2389 = vunpack.c.h.b16 %v1327
    %v2390 = vunpack.c.l.b16 %v1328
    %v2391 = vunpack.c.l.b16 %v1329
    %v2392 = vunpack.c.h.b16 %v1329
    %v2393 = vunpack.c.l.b16 %v1330
    %v2394 = vunpack.c.h.b16 %v1330
    %v2395 = vunpack.c.l.b16 %v1331
    %v2396 = vunpack.c.l.b16 %v1332
    %v2397 = vunpack.c.h.b16 %v1332
    %v2398 = vunpack.c.l.b16 %v1333
    %v2399 = vunpack.c.h.b16 %v1333
    %v2400 = vunpack.c.l.b16 %v1334
    %v2401 = vunpack.c.l.b16 %v1335
    %v2402 = vunpack.c.h.b16 %v1335
    %v2403 = vunpack.c.l.b16 %v1336
    %v2404 = vunpack.c.h.b16 %v1336
    %v2405 = vunpack.c.l.b16 %v1337
    %v2406 = vunpack.c.l.b16 %v1338
    %v2407 = vunpack.c.h.b16 %v1338
    %v2408 = vunpack.c.l.b16 %v1339
    %v2409 = vunpack.c.h.b16 %v1339
    %v2410 = vunpack.c.l.b16 %v1340
    %v2411 = vunpack.c.l.b16 %v1341
    %v2412 = vunpack.c.h.b16 %v1341
    %v2413 = vunpack.c.l.b16 %v1342
    %v2414 = vunpack.c.h.b16 %v1342
    %v2415 = vunpack.c.l.b16 %v1343
    %v2416 = vunpack.c.l.b16 %v1344
    %v2417 = vunpack.c.h.b16 %v1344
    %v2418 = vunpack.c.l.b16 %v1345
    %v2419 = vunpack.c.h.b16 %v1345
    %v2420 = vunpack.c.l.b16 %v1346
    %v2421 = vunpack.c.l.b16 %v1347
    %v2422 = vunpack.c.h.b16 %v1347
    %v2423 = vunpack.c.l.b16 %v1348
    %v2424 = vunpack.c.h.b16 %v1348
    %v2425 = vunpack.c.l.b16 %v1349
    %v2426 = vunpack.c.l.b16 %v1350
    %v2427 = vunpack.c.h.b16 %v1350
    %v2428 = vunpack.c.l.b16 %v1351
    %v2429 = vunpack.c.h.b16 %v1351
    %v2430 = vunpack.c.l.b16 %v1352
    %v2431 = vunpack.c.l.b16 %v1353
    %v2432 = vunpack.c.h.b16 %v1353
    %v2433 = vunpack.c.l.b16 %v1354
    %v2434 = vunpack.c.h.b16 %v1354
    %v2435 = vunpack.c.l.b16 %v1355
    %v2436 = vunpack.c.l.b16 %v1356
    %v2437 = vunpack.c.h.b16 %v1356
    %v2438 = vunpack.c.l.b16 %v1357
    %v2439 = vunpack.c.h.b16 %v1357
    %v2440 = vunpack.c.l.b16 %v1358
    %v2441 = vunpack.c.l.b16 %v1359
    %v2442 = vunpack.c.h.b16 %v1359
    %v2443 = vunpack.c.l.b16 %v1360
    %v2444 = vunpack.c.h.b16 %v1360
    %v2445 = vunpack.c.l.b16 %v1361
    %v2446 = vunpack.c.l.b16 %v1362
    %v2447 = vunpack.c.h.b16 %v1362
    %v2448 = vunpack.c.l.b16 %v1363
    %v2449 = vunpack.c.h.b16 %v1363
    %v2450 = vunpack.c.l.b16 %v1364
    %v2451 = vunpack.c.l.b16 %v1365
    %v2452 = vunpack.c.h.b16 %v1365
    %v2453 = vunpack.c.l.b16 %v1366
    %v2454 = vunpack.c.h.b16 %v1366
    %v2455 = vunpack.c.l.b16 %v1367
    %v2456 = vunpack.c.l.b16 %v1368
    %v2457 = vunpack.c.h.b16 %v1368
    %v2458 = vunpack.c.l.b16 %v1369
    %v2459 = vunpack.c.h.b16 %v1369
    %v2460 = vunpack.c.l.b16 %v1370
    %v2461 = vunpack.c.l.b16 %v1371
    %v2462 = vunpack.c.h.b16 %v1371
    %v2463 = vunpack.c.l.b16 %v1372
    %v2464 = vunpack.c.h.b16 %v1372
    %v2465 = vunpack.c.l.b16 %v1373
    %v2466 = vunpack.c.l.b16 %v1374
    %v2467 = vunpack.c.h.b16 %v1374
    %v2468 = vunpack.c.l.b16 %v1375
    %v2469 = vunpack.c.h.b16 %v1375
    %v2470 = vunpack.c.l.b16 %v1376
    %v2471 = vunpack.c.l.b16 %v1377
    %v2472 = vunpack.c.h.b16 %v1377
    %v2473 = vunpack.c.l.b16 %v1378
    %v2474 = vunpack.c.h.b16 %v1378
    %v2475 = vunpack.c.l.b16 %v1379
    %v2476 = vunpack.c.l.b16 %v1380
    %v2477 = vunpack.c.h.b16 %v1380
    %v2478 = vunpack.c.l.b16 %v1381
    %v2479 = vunpack.c.h.b16 %v1381
    %v2480 = vunpack.c.l.b16 %v1382
    %v2481 = vunpack.c.l.b16 %v1383
    %v2482 = vunpack.c.h.b16 %v1383
    %v2483 = vunpack.c.l.b16 %v1384
    %v2484 = vunpack.c.h.b16 %v1384
    %v2485 = vunpack.c.l.b16 %v1385
    %v2486 = vunpack.c.l.b16 %v1386
    %v2487 = vunpack.c.h.b16 %v1386
    %v2488 = vunpack.c.l.b16 %v1387
    %v2489 = vunpack.c.h.b16 %v1387
    %v2490 = vunpack.c.l.b16 %v1388
    %v2491 = vunpack.c.l.b16 %v1389
    %v2492 = vunpack.c.h.b16 %v1389
    %v2493 = vunpack.c.l.b16 %v1390
    %v2494 = vunpack.c.h.b16 %v1390
    %v2495 = vunpack.c.l.b16 %v1391
    %v2496 = vunpack.c.l.b16 %v1392
    %v2497 = vunpack.c.h.b16 %v1392
    %v2498 = vunpack.c.l.b16 %v1393
    %v2499 = vunpack.c.h.b16 %v1393
    %v2500 = vunpack.c.l.b16 %v1394
    %v2501 = vunpack.c.l.b16 %v1395
    %v2502 = vunpack.c.h.b16 %v1395
    %v2503 = vunpack.c.l.b16 %v1396
    %v2504 = vunpack.c.h.b16 %v1396
    %v2505 = vunpack.c.l.b16 %v1397
    %v2506 = vunpack.c.l.b16 %v1398
    %v2507 = vunpack.c.h.b16 %v1398
    %v2508 = vunpack.c.l.b16 %v1399
    %v2509 = vunpack.c.h.b16 %v1399
    %v2510 = vunpack.c.l.b16 %v1400
    %v2511 = vunpack.c.l.b16 %v1401
    %v2512 = vunpack.c.h.b16 %v1401
    %v2513 = vunpack.c.l.b16 %v1402
    %v2514 = vunpack.c.h.b16 %v1402
    %v2515 = vunpack.c.l.b16 %v1403
    %v2516 = vunpack.c.l.b16 %v1404
    %v2517 = vunpack.c.h.b16 %v1404
    %v2518 = vunpack.c.l.b16 %v1405
    %v2519 = vunpack.c.h.b16 %v1405
    %v2520 = vunpack.c.l.b16 %v1406
    %v2521 = vunpack.c.l.b16 %v1407
    %v2522 = vunpack.c.h.b16 %v1407
    %v2523 = vunpack.c.l.b16 %v1408
    %v2524 = vunpack.c.h.b16 %v1408
    %v2525 = vunpack.c.l.b16 %v1409
    %v2526 = vunpack.c.l.b16 %v1410
    %v2527 = vunpack.c.h.b16 %v1410
    %v2528 = vunpack.c.l.b16 %v1411
    %v2529 = vunpack.c.h.b16 %v1411
    %v2530 = vunpack.c.l.b16 %v1412
    %v2531 = vunpack.c.l.b16 %v1413
    %v2532 = vunpack.c.h.b16 %v1413
    %v2533 = vunpack.c.l.b16 %v1414
    %v2534 = vunpack.c.h.b16 %v1414
    %v2535 = vunpack.c.l.b16 %v1415
    %v2536 = vunpack.c.l.b16 %v1416
    %v2537 = vunpack.c.h.b16 %v1416
    %v2538 = vunpack.c.l.b16 %v1417
    %v2539 = vunpack.c.h.b16 %v1417
    %v2540 = vunpack.c.l.b16 %v1418
    %v2541 = vunpack.c.l.b16 %v1419
    %v2542 = vunpack.c.h.b16 %v1419
    %v2543 = vunpack.c.l.b16 %v1420
    %v2544 = vunpack.c.h.b16 %v1420
    %v2545 = vunpack.c.l.b16 %v1421
    %v2546 = vunpack.c.l.b16 %v1422
    %v2547 = vunpack.c.h.b16 %v1422
    %v2548 = vunpack.c.l.b16 %v1423
    %v2549 = vunpack.c.h.b16 %v1423
    %v2550 = vunpack.c.l.b16 %v1424
    %v2551 = vunpack.c.l.b16 %v1425
    %v2552 = vunpack.c.h.b16 %v1425
    %v2553 = vunpack.c.l.b16 %v1426
    %v2554 = vunpack.c.h.b16 %v1426
    %v2555 = vunpack.c.l.b16 %v1427
    %v2556 = vunpack.c.l.b16 %v1428
    %v2557 = vunpack.c.h.b16 %v1428
    %v2558 = vunpack.c.l.b16 %v1429
    %v2559 = vunpack.c.h.b16 %v1429
    %v2560 = vunpack.c.l.b16 %v1430
    %v2561 = vunpack.c.l.b16 %v1431
    %v2562 = vunpack.c.h.b16 %v1431
    %v2563 = vunpack.c.l.b16 %v1432
    %v2564 = vunpack.c.h.b16 %v1432
    %v2565 = vunpack.c.l.b16 %v1433
    %v2566 = vunpack.c.l.b16 %v1434
    %v2567 = vunpack.c.h.b16 %v1434
    %v2568 = vunpack.c.l.b16 %v1435
    %v2569 = vunpack.c.h.b16 %v1435
    %v2570 = vunpack.c.l.b16 %v1436
    %v2571 = vunpack.c.l.b16 %v1437
    %v2572 = vunpack.c.h.b16 %v1437
    %v2573 = vunpack.c.l.b16 %v1438
    %v2574 = vunpack.c.h.b16 %v1438
    %v2575 = vunpack.c.l.b16 %v1439
    %v2576 = vunpack.c.l.b16 %v1440
    %v2577 = vunpack.c.h.b16 %v1440
    %v2578 = vunpack.c.l.b16 %v1441
    %v2579 = vunpack.c.h.b16 %v1441
    %v2580 = vunpack.c.l.b16 %v1442
    %v2581 = vunpack.c.l.b16 %v1443
    %v2582 = vunpack.c.h.b16 %v1443
    %v2583 = vunpack.c.l.b16 %v1444
    %v2584 = vunpack.c.h.b16 %v1444
    %v2585 = vunpack.c.l.b16 %v1445
    %v2586 = vunpack.c.l.b16 %v1446
    %v2587 = vunpack.c.h.b16 %v1446
    %v2588 = vunpack.c.l.b16 %v1447
    %v2589 = vunpack.c.h.b16 %v1447
    %v2590 = vunpack.c.l.b16 %v1448
    %v2591 = vunpack.c.l.b16 %v1449
    %v2592 = vunpack.c.h.b16 %v1449
    %v2593 = vunpack.c.l.b16 %v1450
    %v2594 = vunpack.c.h.b16 %v1450
    %v2595 = vunpack.c.l.b16 %v1451
    %v2596 = vunpack.c.l.b16 %v1452
    %v2597 = vunpack.c.h.b16 %v1452
    %v2598 = vunpack.c.l.b16 %v1453
    %v2599 = vunpack.c.h.b16 %v1453
    %v2600 = vunpack.c.l.b16 %v1454
    %v2601 = vunpack.c.l.b16 %v1455
    %v2602 = vunpack.c.h.b16 %v1455
    %v2603 = vunpack.c.l.b16 %v1456
    %v2604 = vunpack.c.h.b16 %v1456
    %v2605 = vunpack.c.l.b16 %v1457
    %v2606 = vunpack.c.l.b16 %v1458
    %v2607 = vunpack.c.h.b16 %v1458
    %v2608 = vunpack.c.l.b16 %v1459
    %v2609 = vunpack.c.h.b16 %v1459
    %v2610 = vunpack.c.l.b16 %v1460
    %v2611 = vunpack.c.l.b16 %v1461
    %v2612 = vunpack.c.h.b16 %v1461
    %v2613 = vunpack.c.l.b16 %v1462
    %v2614 = vunpack.c.h.b16 %v1462
    %v2615 = vunpack.c.l.b16 %v1463
    %v2616 = vunpack.c.l.b16 %v1464
    %v2617 = vunpack.c.h.b16 %v1464
    %v2618 = vunpack.c.l.b16 %v1465
    %v2619 = vunpack.c.h.b16 %v1465
    %v2620 = vunpack.c.l.b16 %v1466
    %v2621 = vunpack.c.l.b16 %v1467
    %v2622 = vunpack.c.h.b16 %v1467
    %v2623 = vunpack.c.l.b16 %v1468
    %v2624 = vunpack.c.h.b16 %v1468
    %v2625 = vunpack.c.l.b16 %v1469
    %v2626 = vunpack.c.l.b16 %v1470
    %v2627 = vunpack.c.h.b16 %v1470
    %v2628 = vunpack.c.l.b16 %v1471
    %v2629 = vunpack.c.h.b16 %v1471
    %v2630 = vunpack.c.l.b16 %v1472
    %v2631 = vunpack.c.l.b16 %v1473
    %v2632 = vunpack.c.h.b16 %v1473
    %v2633 = vunpack.c.l.b16 %v1474
    %v2634 = vunpack.c.h.b16 %v1474
    %v2635 = vunpack.c.l.b16 %v1475
    %v2636 = vpack.c.b16 %v2241, %v2236
    %v2637 = vpack.c.b16 %v2242, %v2237
    %v2638 = vpack.c.b16 %v2243, %v2238
    %v2639 = vpack.c.b16 %v2244, %v2239
    %v2640 = vpack.c.b16 %v2245, %v2240
    %v2641 = vpack.c.b16 %v2251, %v2246
    %v2642 = vpack.c.b16 %v2252, %v2247
    %v2643 = vpack.c.b16 %v2253, %v2248
    %v2644 = vpack.c.b16 %v2254, %v2249
    %v2645 = vpack.c.b16 %v2255, %v2250
    %v2646 = vpack.c.b16 %v2261, %v2256
    %v2647 = vpack.c.b16 %v2262, %v2257
    %v2648 = vpack.c.b16 %v2263, %v2258
    %v2649 = vpack.c.b16 %v2264, %v2259
    %v2650 = vpack.c.b16 %v2265, %v2260
    %v2651 = vpack.c.b16 %v2271, %v2266
    %v2652 = vpack.c.b16 %v2272, %v2267
    %v2653 = vpack.c.b16 %v2273, %v2268
    %v2654 = vpack.c.b16 %v2274, %v2269
    %v2655 = vpack.c.b16 %v2275, %v2270
    %v2656 = vpack.c.b16 %v2281, %v2276
    %v2657 = vpack.c.b16 %v2282, %v2277
    %v2658 = vpack.c.b16 %v2283, %v2278
    %v2659 = vpack.c.b16 %v2284, %v2279
    %v2660 = vpack.c.b16 %v2285, %v2280
    %v2661 = vpack.c.b16 %v2291, %v2286
    %v2662 = vpack.c.b16 %v2292, %v2287
    %v2663 = vpack.c.b16 %v2293, %v2288
    %v2664 = vpack.c.b16 %v2294, %v2289
    %v2665 = vpack.c.b16 %v2295, %v2290
    %v2666 = vpack.c.b16 %v2301, %v2296
    %v2667 = vpack.c.b16 %v2302, %v2297
    %v2668 = vpack.c.b16 %v2303, %v2298
    %v2669 = vpack.c.b16 %v2304, %v2299
    %v2670 = vpack.c.b16 %v2305, %v2300
    %v2671 = vpack.c.b16 %v2311, %v2306
    %v2672 = vpack.c.b16 %v2312, %v2307
    %v2673 = vpack.c.b16 %v2313, %v2308
    %v2674 = vpack.c.b16 %v2314, %v2309
    %v2675 = vpack.c.b16 %v2315, %v2310
    %v2676 = vpack.c.b16 %v2321, %v2316
    %v2677 = vpack.c.b16 %v2322, %v2317
    %v2678 = vpack.c.b16 %v2323, %v2318
    %v2679 = vpack.c.b16 %v2324, %v2319
    %v2680 = vpack.c.b16 %v2325, %v2320
    %v2681 = vpack.c.b16 %v2331, %v2326
    %v2682 = vpack.c.b16 %v2332, %v2327
    %v2683 = vpack.c.b16 %v2333, %v2328
    %v2684 = vpack.c.b16 %v2334, %v2329
    %v2685 = vpack.c.b16 %v2335, %v2330
    %v2686 = vpack.c.b16 %v2341, %v2336
    %v2687 = vpack.c.b16 %v2342, %v2337
    %v2688 = vpack.c.b16 %v2343, %v2338
    %v2689 = vpack.c.b16 %v2344, %v2339
    %v2690 = vpack.c.b16 %v2345, %v2340
    %v2691 = vpack.c.b16 %v2351, %v2346
    %v2692 = vpack.c.b16 %v2352, %v2347
    %v2693 = vpack.c.b16 %v2353, %v2348
    %v2694 = vpack.c.b16 %v2354, %v2349
    %v2695 = vpack.c.b16 %v2355, %v2350
    %v2696 = vpack.c.b16 %v2361, %v2356
    %v2697 = vpack.c.b16 %v2362, %v2357
    %v2698 = vpack.c.b16 %v2363, %v2358
    %v2699 = vpack.c.b16 %v2364, %v2359
    %v2700 = vpack.c.b16 %v2365, %v2360
    %v2701 = vpack.c.b16 %v2371, %v2366
    %v2702 = vpack.c.b16 %v2372, %v2367
    %v2703 = vpack.c.b16 %v2373, %v2368
    %v2704 = vpack.c.b16 %v2374, %v2369
    %v2705 = vpack.c.b16 %v2375, %v2370
    %v2706 = vpack.c.b16 %v2381, %v2376
    %v2707 = vpack.c.b16 %v2382, %v2377
    %v2708 = vpack.c.b16 %v2383, %v2378
    %v2709 = vpack.c.b16 %v2384, %v2379
    %v2710 = vpack.c.b16 %v2385, %v2380
    %v2711 = vpack.c.b16 %v2391, %v2386
    %v2712 = vpack.c.b16 %v2392, %v2387
    %v2713 = vpack.c.b16 %v2393, %v2388
    %v2714 = vpack.c.b16 %v2394, %v2389
    %v2715 = vpack.c.b16 %v2395, %v2390
    %v2716 = vpack.c.b16 %v2401, %v2396
    %v2717 = vpack.c.b16 %v2402, %v2397
    %v2718 = vpack.c.b16 %v2403, %v2398
    %v2719 = vpack.c.b16 %v2404, %v2399
    %v2720 = vpack.c.b16 %v2405, %v2400
    %v2721 = vpack.c.b16 %v2411, %v2406
    %v2722 = vpack.c.b16 %v2412, %v2407
    %v2723 = vpack.c.b16 %v2413, %v2408
    %v2724 = vpack.c.b16 %v2414, %v2409
    %v2725 = vpack.c.b16 %v2415, %v2410
    %v2726 = vpack.c.b16 %v2421, %v2416
    %v2727 = vpack.c.b16 %v2422, %v2417
    %v2728 = vpack.c.b16 %v2423, %v2418
    %v2729 = vpack.c.b16 %v2424, %v2419
    %v2730 = vpack.c.b16 %v2425, %v2420
    %v2731 = vpack.c.b16 %v2431, %v2426
    %v2732 = vpack.c.b16 %v2432, %v2427
    %v2733 = vpack.c.b16 %v2433, %v2428
    %v2734 = vpack.c.b16 %v2434, %v2429
    %v2735 = vpack.c.b16 %v2435, %v2430
    %v2736 = vpack.c.b16 %v2441, %v2436
    %v2737 = vpack.c.b16 %v2442, %v2437
    %v2738 = vpack.c.b16 %v2443, %v2438
    %v2739 = vpack.c.b16 %v2444, %v2439
    %v2740 = vpack.c.b16 %v2445, %v2440
    %v2741 = vpack.c.b16 %v2451, %v2446
    %v2742 = vpack.c.b16 %v2452, %v2447
    %v2743 = vpack.c.b16 %v2453, %v2448
    %v2744 = vpack.c.b16 %v2454, %v2449
    %v2745 = vpack.c.b16 %v2455, %v2450
    %v2746 = vpack.c.b16 %v2461, %v2456
    %v2747 = vpack.c.b16 %v2462, %v2457
    %v2748 = vpack.c.b16 %v2463, %v2458
    %v2749 = vpack.c.b16 %v2464, %v2459
    %v2750 = vpack.c.b16 %v2465, %v2460
    %v2751 = vpack.c.b16 %v2471, %v2466
    %v2752 = vpack.c.b16 %v2472, %v2467
    %v2753 = vpack.c.b16 %v2473, %v2468
    %v2754 = vpack.c.b16 %v2474, %v2469
    %v2755 = vpack.c.b16 %v2475, %v2470
    %v2756 = vpack.c.b16 %v2481, %v2476
    %v2757 = vpack.c.b16 %v2482, %v2477
    %v2758 = vpack.c.b16 %v2483, %v2478
    %v2759 = vpack.c.b16 %v2484, %v2479
    %v2760 = vpack.c.b16 %v2485, %v2480
    %v2761 = vpack.c.b16 %v2491, %v2486
    %v2762 = vpack.c.b16 %v2492, %v2487
    %v2763 = vpack.c.b16 %v2493, %v2488
    %v2764 = vpack.c.b16 %v2494, %v2489
    %v2765 = vpack.c.b16 %v2495, %v2490
    %v2766 = vpack.c.b16 %v2501, %v2496
    %v2767 = vpack.c.b16 %v2502, %v2497
    %v2768 = vpack.c.b16 %v2503, %v2498
    %v2769 = vpack.c.b16 %v2504, %v2499
    %v2770 = vpack.c.b16 %v2505, %v2500
    %v2771 = vpack.c.b16 %v2511, %v2506
    %v2772 = vpack.c.b16 %v2512, %v2507
    %v2773 = vpack.c.b16 %v2513, %v2508
    %v2774 = vpack.c.b16 %v2514, %v2509
    %v2775 = vpack.c.b16 %v2515, %v2510
    %v2776 = vpack.c.b16 %v2521, %v2516
    %v2777 = vpack.c.b16 %v2522, %v2517
    %v2778 = vpack.c.b16 %v2523, %v2518
    %v2779 = vpack.c.b16 %v2524, %v2519
    %v2780 = vpack.c.b16 %v2525, %v2520
    %v2781 = vpack.c.b16 %v2531, %v2526
    %v2782 = vpack.c.b16 %v2532, %v2527
    %v2783 = vpack.c.b16 %v2533, %v2528
    %v2784 = vpack.c.b16 %v2534, %v2529
    %v2785 = vpack.c.b16 %v2535, %v2530
    %v2786 = vpack.c.b16 %v2541, %v2536
    %v2787 = vpack.c.b16 %v2542, %v2537
    %v2788 = vpack.c.b16 %v2543, %v2538
    %v2789 = vpack.c.b16 %v2544, %v2539
    %v2790 = vpack.c.b16 %v2545, %v2540
    %v2791 = vpack.c.b16 %v2551, %v2546
    %v2792 = vpack.c.b16 %v2552, %v2547
    %v2793 = vpack.c.b16 %v2553, %v2548
    %v2794 = vpack.c.b16 %v2554, %v2549
    %v2795 = vpack.c.b16 %v2555, %v2550
    %v2796 = vpack.c.b16 %v2561, %v2556
    %v2797 = vpack.c.b16 %v2562, %v2557
    %v2798 = vpack.c.b16 %v2563, %v2558
    %v2799 = vpack.c.b16 %v2564, %v2559
    %v2800 = vpack.c.b16 %v2565, %v2560
    %v2801 = vpack.c.b16 %v2571, %v2566
    %v2802 = vpack.c.b16 %v2572, %v2567
    %v2803 = vpack.c.b16 %v2573, %v2568
    %v2804 = vpack.c.b16 %v2574, %v2569
    %v2805 = vpack.c.b16 %v2575, %v2570
    %v2806 = vpack.c.b16 %v2581, %v2576
    %v2807 = vpack.c.b16 %v2582, %v2577
    %v2808 = vpack.c.b16 %v2583, %v2578
    %v2809 = vpack.c.b16 %v2584, %v2579
    %v2810 = vpack.c.b16 %v2585, %v2580
    %v2811 = vpack.c.b16 %v2591, %v2586
    %v2812 = vpack.c.b16 %v2592, %v2587
    %v2813 = vpack.c.b16 %v2593, %v2588
    %v2814 = vpack.c.b16 %v2594, %v2589
    %v2815 = vpack.c.b16 %v2595, %v2590
    %v2816 = vpack.c.b16 %v2601, %v2596
    %v2817 = vpack.c.b16 %v2602, %v2597
    %v2818 = vpack.c.b16 %v2603, %v2598
    %v2819 = vpack.c.b16 %v2604, %v2599
    %v2820 = vpack.c.b16 %v2605, %v2600
    %v2821 = vpack.c.b16 %v2611, %v2606
    %v2822 = vpack.c.b16 %v2612, %v2607
    %v2823 = vpack.c.b16 %v2613, %v2608
    %v2824 = vpack.c.b16 %v2614, %v2609
    %v2825 = vpack.c.b16 %v2615, %v2610
    %v2826 = vpack.c.b16 %v2621, %v2616
    %v2827 = vpack.c.b16 %v2622, %v2617
    %v2828 = vpack.c.b16 %v2623, %v2618
    %v2829 = vpack.c.b16 %v2624, %v2619
    %v2830 = vpack.c.b16 %v2625, %v2620
    %v2831 = vpack.c.b16 %v2631, %v2626
    %v2832 = vpack.c.b16 %v2632, %v2627
    %v2833 = vpack.c.b16 %v2633, %v2628
    %v2834 = vpack.c.b16 %v2634, %v2629
    %v2835 = vpack.c.b16 %v2635, %v2630
    %3036 = vmatprep.subr.bf16.mxu0 0
    %3037 = vmatpush1.bf16.msra.mxu0 %v1476
    %3038 = vmatprep.subr.bf16.mxu0 0
    %3039 = vmatpush1.bf16.msra.mxu0 %v1477
    %3040 = vmatprep.subr.bf16.mxu0 0
    %3041 = vmatpush1.bf16.msra.mxu0 %v1478
    %3042 = vmatprep.subr.bf16.mxu0 0
    %3043 = vmatpush1.bf16.msra.mxu0 %v1479
    %3044 = vmatprep.subr.bf16.mxu0 0
    %3045 = vmatpush1.bf16.msra.mxu0 %v1480
    %3046 = vmatprep.subr.bf16.mxu0 0
    %3047 = vmatpush1.bf16.msra.mxu0 %v1481
    %3048 = vmatprep.subr.bf16.mxu0 0
    %3049 = vmatpush1.bf16.msra.mxu0 %v1482
    %3050 = vmatprep.subr.bf16.mxu0 0
    %3051 = vmatpush1.bf16.msra.mxu0 %v1483
    %3052 = vmatprep.subr.bf16.mxu0 0
    %3053 = vmatpush1.bf16.msra.mxu0 %v1484
    %3054 = vmatprep.subr.bf16.mxu0 0
    %3055 = vmatpush1.bf16.msra.mxu0 %v1485
    %3056 = vmatprep.subr.bf16.mxu0 0
    %3057 = vmatpush1.bf16.msra.mxu0 %v1486
    %3058 = vmatprep.subr.bf16.mxu0 0
    %3059 = vmatpush1.bf16.msra.mxu0 %v1487
    %3060 = vmatprep.subr.bf16.mxu0 0
    %3061 = vmatpush1.bf16.msra.mxu0 %v1488
    %3062 = vmatprep.subr.bf16.mxu0 0
    %3063 = vmatpush1.bf16.msra.mxu0 %v1489
    %3064 = vmatprep.subr.bf16.mxu0 0
    %3065 = vmatpush1.bf16.msra.mxu0 %v1490
    %3066 = vmatprep.subr.bf16.mxu0 0
    %3067 = vmatpush1.bf16.msra.mxu0 %v1491
    %3068 = vmatprep.mubr.bf16.mxu0 %v2637
    %3069 = vmatmul.mubr.bf16.gmra.mrb[0].mxu0 %v2636
    %v3070 = vpop.f32.mrb[0].mxu0
    %v3071 = vadd.f32 %v1599, %v3070
    %v3072 = vpop.f32.mrb[0].mxu0
    %v3073 = vpop.f32.mrb[0].mxu0
    %v3074 = vadd.f32 %v1604, %v3073
    %v3075 = vpop.f32.mrb[0].mxu0
    %3076 = vmatprep.mubr.bf16.mxu0 %v2642
    %3077 = vmatmul.mubr.bf16.gmra.mrb[0].mxu0 %v2641
    %v3078 = vpop.f32.mrb[0].mxu0
    %v3079 = vadd.f32 %v1609, %v3078
    %v3080 = vpop.f32.mrb[0].mxu0
    %v3081 = vpop.f32.mrb[0].mxu0
    %v3082 = vadd.f32 %v1614, %v3081
    %v3083 = vpop.f32.mrb[0].mxu0
    %3084 = vmatprep.mubr.bf16.mxu0 %v2647
    %3085 = vmatmul.mubr.bf16.gmra.mrb[0].mxu0 %v2646
    %v3086 = vpop.f32.mrb[0].mxu0
    %v3087 = vadd.f32 %v1619, %v3086
    %v3088 = vpop.f32.mrb[0].mxu0
    %v3089 = vpop.f32.mrb[0].mxu0
    %v3090 = vadd.f32 %v1624, %v3089
    %v3091 = vpop.f32.mrb[0].mxu0
    %3092 = vmatprep.mubr.bf16.mxu0 %v2652
    %3093 = vmatmul.mubr.bf16.gmra.mrb[0].mxu0 %v2651
    %v3094 = vpop.f32.mrb[0].mxu0
    %v3095 = vadd.f32 %v1629, %v3094
    %v3096 = vpop.f32.mrb[0].mxu0
    %v3097 = vpop.f32.mrb[0].mxu0
    %v3098 = vadd.f32 %v1634, %v3097
    %v3099 = vpop.f32.mrb[0].mxu0
    %3100 = vmatprep.mubr.bf16.mxu0 %v2657
    %3101 = vmatmul.mubr.bf16.gmra.mrb[0].mxu0 %v2656
    %v3102 = vpop.f32.mrb[0].mxu0
    %v3103 = vadd.f32 %v1639, %v3102
    %v3104 = vpop.f32.mrb[0].mxu0
    %v3105 = vpop.f32.mrb[0].mxu0
    %v3106 = vadd.f32 %v1644, %v3105
    %v3107 = vpop.f32.mrb[0].mxu0
    %3108 = vmatprep.mubr.bf16.mxu0 %v2662
    %3109 = vmatmul.mubr.bf16.gmra.mrb[0].mxu0 %v2661
    %v3110 = vpop.f32.mrb[0].mxu0
    %v3111 = vadd.f32 %v1649, %v3110
    %v3112 = vpop.f32.mrb[0].mxu0
    %v3113 = vpop.f32.mrb[0].mxu0
    %v3114 = vadd.f32 %v1654, %v3113
    %v3115 = vpop.f32.mrb[0].mxu0
    %3116 = vmatprep.mubr.bf16.mxu0 %v2667
    %3117 = vmatmul.mubr.bf16.gmra.mrb[0].mxu0 %v2666
    %v3118 = vpop.f32.mrb[0].mxu0
    %v3119 = vadd.f32 %v1659, %v3118
    %v3120 = vpop.f32.mrb[0].mxu0
    %v3121 = vpop.f32.mrb[0].mxu0
    %v3122 = vadd.f32 %v1664, %v3121
    %v3123 = vpop.f32.mrb[0].mxu0
    %3124 = vmatprep.mubr.bf16.mxu0 %v2672
    %3125 = vmatmul.mubr.bf16.gmra.mrb[0].mxu0 %v2671
    %v3126 = vpop.f32.mrb[0].mxu0
    %v3127 = vadd.f32 %v1669, %v3126
    %v3128 = vpop.f32.mrb[0].mxu0
    %v3129 = vpop.f32.mrb[0].mxu0
    %v3130 = vadd.f32 %v1674, %v3129
    %v3131 = vpop.f32.mrb[0].mxu0
    %3132 = vmatprep.mubr.bf16.mxu0 %v2677
    %3133 = vmatmul.mubr.bf16.gmra.mrb[0].mxu0 %v2676
    %v3134 = vpop.f32.mrb[0].mxu0
    %v3135 = vadd.f32 %v1679, %v3134
    %v3136 = vpop.f32.mrb[0].mxu0
    %v3137 = vpop.f32.mrb[0].mxu0
    %v3138 = vadd.f32 %v1684, %v3137
    %v3139 = vpop.f32.mrb[0].mxu0
    %3140 = vmatprep.mubr.bf16.mxu0 %v2682
    %3141 = vmatmul.mubr.bf16.gmra.mrb[0].mxu0 %v2681
    %v3142 = vpop.f32.mrb[0].mxu0
    %v3143 = vadd.f32 %v1689, %v3142
    %v3144 = vpop.f32.mrb[0].mxu0
    %v3145 = vpop.f32.mrb[0].mxu0
    %v3146 = vadd.f32 %v1694, %v3145
    %v3147 = vpop.f32.mrb[0].mxu0
    %3148 = vmatprep.mubr.bf16.mxu0 %v2687
    %3149 = vmatmul.mubr.bf16.gmra.mrb[0].mxu0 %v2686
    %v3150 = vpop.f32.mrb[0].mxu0
    %v3151 = vadd.f32 %v1699, %v3150
    %v3152 = vpop.f32.mrb[0].mxu0
    %v3153 = vpop.f32.mrb[0].mxu0
    %v3154 = vadd.f32 %v1704, %v3153
    %v3155 = vpop.f32.mrb[0].mxu0
    %3156 = vmatprep.mubr.bf16.mxu0 %v2692
    %3157 = vmatmul.mubr.bf16.gmra.mrb[0].mxu0 %v2691
    %v3158 = vpop.f32.mrb[0].mxu0
    %v3159 = vadd.f32 %v1709, %v3158
    %v3160 = vpop.f32.mrb[0].mxu0
    %v3161 = vpop.f32.mrb[0].mxu0
    %v3162 = vadd.f32 %v1714, %v3161
    %v3163 = vpop.f32.mrb[0].mxu0
    %3164 = vmatprep.mubr.bf16.mxu0 %v2697
    %3165 = vmatmul.mubr.bf16.gmra.mrb[0].mxu0 %v2696
    %v3166 = vpop.f32.mrb[0].mxu0
    %v3167 = vadd.f32 %v1719, %v3166
    %v3168 = vpop.f32.mrb[0].mxu0
    %v3169 = vpop.f32.mrb[0].mxu0
    %v3170 = vadd.f32 %v1724, %v3169
    %v3171 = vpop.f32.mrb[0].mxu0
    %3172 = vmatprep.mubr.bf16.mxu0 %v2702
    %3173 = vmatmul.mubr.bf16.gmra.mrb[0].mxu0 %v2701
    %v3174 = vpop.f32.mrb[0].mxu0
    %v3175 = vadd.f32 %v1729, %v3174
    %v3176 = vpop.f32.mrb[0].mxu0
    %v3177 = vpop.f32.mrb[0].mxu0
    %v3178 = vadd.f32 %v1734, %v3177
    %v3179 = vpop.f32.mrb[0].mxu0
    %3180 = vmatprep.mubr.bf16.mxu0 %v2707
    %3181 = vmatmul.mubr.bf16.gmra.mrb[0].mxu0 %v2706
    %v3182 = vpop.f32.mrb[0].mxu0
    %v3183 = vadd.f32 %v1739, %v3182
    %v3184 = vpop.f32.mrb[0].mxu0
    %v3185 = vpop.f32.mrb[0].mxu0
    %v3186 = vadd.f32 %v1744, %v3185
    %v3187 = vpop.f32.mrb[0].mxu0
    %3188 = vmatprep.mubr.bf16.mxu0 %v2712
    %3189 = vmatmul.mubr.bf16.gmra.mrb[0].mxu0 %v2711
    %v3190 = vpop.f32.mrb[0].mxu0
    %v3191 = vadd.f32 %v1749, %v3190
    %v3192 = vpop.f32.mrb[0].mxu0
    %v3193 = vpop.f32.mrb[0].mxu0
    %v3194 = vadd.f32 %v1754, %v3193
    %v3195 = vpop.f32.mrb[0].mxu0
    %3196 = vmatprep.mubr.bf16.mxu0 %v2717
    %3197 = vmatmul.mubr.bf16.gmra.mrb[0].mxu0 %v2716
    %v3198 = vpop.f32.mrb[0].mxu0
    %v3199 = vadd.f32 %v1759, %v3198
    %v3200 = vpop.f32.mrb[0].mxu0
    %v3201 = vpop.f32.mrb[0].mxu0
    %v3202 = vadd.f32 %v1764, %v3201
    %v3203 = vpop.f32.mrb[0].mxu0
    %3204 = vmatprep.mubr.bf16.mxu0 %v2722
    %3205 = vmatmul.mubr.bf16.gmra.mrb[0].mxu0 %v2721
    %v3206 = vpop.f32.mrb[0].mxu0
    %v3207 = vadd.f32 %v1769, %v3206
    %v3208 = vpop.f32.mrb[0].mxu0
    %v3209 = vpop.f32.mrb[0].mxu0
    %v3210 = vadd.f32 %v1774, %v3209
    %v3211 = vpop.f32.mrb[0].mxu0
    %3212 = vmatprep.mubr.bf16.mxu0 %v2727
    %3213 = vmatmul.mubr.bf16.gmra.mrb[0].mxu0 %v2726
    %v3214 = vpop.f32.mrb[0].mxu0
    %v3215 = vadd.f32 %v1779, %v3214
    %v3216 = vpop.f32.mrb[0].mxu0
    %v3217 = vpop.f32.mrb[0].mxu0
    %v3218 = vadd.f32 %v1784, %v3217
    %v3219 = vpop.f32.mrb[0].mxu0
    %3220 = vmatprep.mubr.bf16.mxu0 %v2732
    %3221 = vmatmul.mubr.bf16.gmra.mrb[0].mxu0 %v2731
    %v3222 = vpop.f32.mrb[0].mxu0
    %v3223 = vadd.f32 %v1789, %v3222
    %v3224 = vpop.f32.mrb[0].mxu0
    %v3225 = vpop.f32.mrb[0].mxu0
    %v3226 = vadd.f32 %v1794, %v3225
    %v3227 = vpop.f32.mrb[0].mxu0
    %3228 = vmatprep.mubr.bf16.mxu0 %v2737
    %3229 = vmatmul.mubr.bf16.gmra.mrb[0].mxu0 %v2736
    %v3230 = vpop.f32.mrb[0].mxu0
    %v3231 = vadd.f32 %v1799, %v3230
    %v3232 = vpop.f32.mrb[0].mxu0
    %v3233 = vpop.f32.mrb[0].mxu0
    %v3234 = vadd.f32 %v1804, %v3233
    %v3235 = vpop.f32.mrb[0].mxu0
    %3236 = vmatprep.mubr.bf16.mxu0 %v2742
    %3237 = vmatmul.mubr.bf16.gmra.mrb[0].mxu0 %v2741
    %v3238 = vpop.f32.mrb[0].mxu0
    %v3239 = vadd.f32 %v1809, %v3238
    %v3240 = vpop.f32.mrb[0].mxu0
    %v3241 = vpop.f32.mrb[0].mxu0
    %v3242 = vadd.f32 %v1814, %v3241
    %v3243 = vpop.f32.mrb[0].mxu0
    %3244 = vmatprep.mubr.bf16.mxu0 %v2747
    %3245 = vmatmul.mubr.bf16.gmra.mrb[0].mxu0 %v2746
    %v3246 = vpop.f32.mrb[0].mxu0
    %v3247 = vadd.f32 %v1819, %v3246
    %v3248 = vpop.f32.mrb[0].mxu0
    %v3249 = vpop.f32.mrb[0].mxu0
    %v3250 = vadd.f32 %v1824, %v3249
    %v3251 = vpop.f32.mrb[0].mxu0
    %3252 = vmatprep.mubr.bf16.mxu0 %v2752
    %3253 = vmatmul.mubr.bf16.gmra.mrb[0].mxu0 %v2751
    %v3254 = vpop.f32.mrb[0].mxu0
    %v3255 = vadd.f32 %v1829, %v3254
    %v3256 = vpop.f32.mrb[0].mxu0
    %v3257 = vpop.f32.mrb[0].mxu0
    %v3258 = vadd.f32 %v1834, %v3257
    %v3259 = vpop.f32.mrb[0].mxu0
    %3260 = vmatprep.mubr.bf16.mxu0 %v2757
    %3261 = vmatmul.mubr.bf16.gmra.mrb[0].mxu0 %v2756
    %v3262 = vpop.f32.mrb[0].mxu0
    %v3263 = vadd.f32 %v1839, %v3262
    %v3264 = vpop.f32.mrb[0].mxu0
    %v3265 = vpop.f32.mrb[0].mxu0
    %v3266 = vadd.f32 %v1844, %v3265
    %v3267 = vpop.f32.mrb[0].mxu0
    %3268 = vmatprep.mubr.bf16.mxu0 %v2762
    %3269 = vmatmul.mubr.bf16.gmra.mrb[0].mxu0 %v2761
    %v3270 = vpop.f32.mrb[0].mxu0
    %v3271 = vadd.f32 %v1849, %v3270
    %v3272 = vpop.f32.mrb[0].mxu0
    %v3273 = vpop.f32.mrb[0].mxu0
    %v3274 = vadd.f32 %v1854, %v3273
    %v3275 = vpop.f32.mrb[0].mxu0
    %3276 = vmatprep.mubr.bf16.mxu0 %v2767
    %3277 = vmatmul.mubr.bf16.gmra.mrb[0].mxu0 %v2766
    %v3278 = vpop.f32.mrb[0].mxu0
    %v3279 = vadd.f32 %v1859, %v3278
    %v3280 = vpop.f32.mrb[0].mxu0
    %v3281 = vpop.f32.mrb[0].mxu0
    %v3282 = vadd.f32 %v1864, %v3281
    %v3283 = vpop.f32.mrb[0].mxu0
    %3284 = vmatprep.mubr.bf16.mxu0 %v2772
    %3285 = vmatmul.mubr.bf16.gmra.mrb[0].mxu0 %v2771
    %v3286 = vpop.f32.mrb[0].mxu0
    %v3287 = vadd.f32 %v1869, %v3286
    %v3288 = vpop.f32.mrb[0].mxu0
    %v3289 = vpop.f32.mrb[0].mxu0
    %v3290 = vadd.f32 %v1874, %v3289
    %v3291 = vpop.f32.mrb[0].mxu0
    %3292 = vmatprep.mubr.bf16.mxu0 %v2777
    %3293 = vmatmul.mubr.bf16.gmra.mrb[0].mxu0 %v2776
    %v3294 = vpop.f32.mrb[0].mxu0
    %v3295 = vadd.f32 %v1879, %v3294
    %v3296 = vpop.f32.mrb[0].mxu0
    %v3297 = vpop.f32.mrb[0].mxu0
    %v3298 = vadd.f32 %v1884, %v3297
    %v3299 = vpop.f32.mrb[0].mxu0
    %3300 = vmatprep.mubr.bf16.mxu0 %v2782
    %3301 = vmatmul.mubr.bf16.gmra.mrb[0].mxu0 %v2781
    %v3302 = vpop.f32.mrb[0].mxu0
    %v3303 = vadd.f32 %v1889, %v3302
    %v3304 = vpop.f32.mrb[0].mxu0
    %v3305 = vpop.f32.mrb[0].mxu0
    %v3306 = vadd.f32 %v1894, %v3305
    %v3307 = vpop.f32.mrb[0].mxu0
    %3308 = vmatprep.mubr.bf16.mxu0 %v2787
    %3309 = vmatmul.mubr.bf16.gmra.mrb[0].mxu0 %v2786
    %v3310 = vpop.f32.mrb[0].mxu0
    %v3311 = vadd.f32 %v1899, %v3310
    %v3312 = vpop.f32.mrb[0].mxu0
    %v3313 = vpop.f32.mrb[0].mxu0
    %v3314 = vadd.f32 %v1904, %v3313
    %v3315 = vpop.f32.mrb[0].mxu0
    %3316 = vmatprep.mubr.bf16.mxu0 %v2792
    %3317 = vmatmul.mubr.bf16.gmra.mrb[0].mxu0 %v2791
    %v3318 = vpop.f32.mrb[0].mxu0
    %v3319 = vadd.f32 %v1909, %v3318
    %v3320 = vpop.f32.mrb[0].mxu0
    %v3321 = vpop.f32.mrb[0].mxu0
    %v3322 = vadd.f32 %v1914, %v3321
    %v3323 = vpop.f32.mrb[0].mxu0
    %3324 = vmatprep.mubr.bf16.mxu0 %v2797
    %3325 = vmatmul.mubr.bf16.gmra.mrb[0].mxu0 %v2796
    %v3326 = vpop.f32.mrb[0].mxu0
    %v3327 = vadd.f32 %v1919, %v3326
    %v3328 = vpop.f32.mrb[0].mxu0
    %v3329 = vpop.f32.mrb[0].mxu0
    %v3330 = vadd.f32 %v1924, %v3329
    %v3331 = vpop.f32.mrb[0].mxu0
    %3332 = vmatprep.mubr.bf16.mxu0 %v2802
    %3333 = vmatmul.mubr.bf16.gmra.mrb[0].mxu0 %v2801
    %v3334 = vpop.f32.mrb[0].mxu0
    %v3335 = vadd.f32 %v1929, %v3334
    %v3336 = vpop.f32.mrb[0].mxu0
    %v3337 = vpop.f32.mrb[0].mxu0
    %v3338 = vadd.f32 %v1934, %v3337
    %v3339 = vpop.f32.mrb[0].mxu0
    %3340 = vmatprep.mubr.bf16.mxu0 %v2807
    %3341 = vmatmul.mubr.bf16.gmra.mrb[0].mxu0 %v2806
    %v3342 = vpop.f32.mrb[0].mxu0
    %v3343 = vadd.f32 %v1939, %v3342
    %v3344 = vpop.f32.mrb[0].mxu0
    %v3345 = vpop.f32.mrb[0].mxu0
    %v3346 = vadd.f32 %v1944, %v3345
    %v3347 = vpop.f32.mrb[0].mxu0
    %3348 = vmatprep.mubr.bf16.mxu0 %v2812
    %3349 = vmatmul.mubr.bf16.gmra.mrb[0].mxu0 %v2811
    %v3350 = vpop.f32.mrb[0].mxu0
    %v3351 = vadd.f32 %v1949, %v3350
    %v3352 = vpop.f32.mrb[0].mxu0
    %v3353 = vpop.f32.mrb[0].mxu0
    %v3354 = vadd.f32 %v1954, %v3353
    %v3355 = vpop.f32.mrb[0].mxu0
    %3356 = vmatprep.mubr.bf16.mxu0 %v2817
    %3357 = vmatmul.mubr.bf16.gmra.mrb[0].mxu0 %v2816
    %v3358 = vpop.f32.mrb[0].mxu0
    %v3359 = vadd.f32 %v1959, %v3358
    %v3360 = vpop.f32.mrb[0].mxu0
    %v3361 = vpop.f32.mrb[0].mxu0
    %v3362 = vadd.f32 %v1964, %v3361
    %v3363 = vpop.f32.mrb[0].mxu0
    %3364 = vmatprep.mubr.bf16.mxu0 %v2822
    %3365 = vmatmul.mubr.bf16.gmra.mrb[0].mxu0 %v2821
    %v3366 = vpop.f32.mrb[0].mxu0
    %v3367 = vadd.f32 %v1969, %v3366
    %v3368 = vpop.f32.mrb[0].mxu0
    %v3369 = vpop.f32.mrb[0].mxu0
    %v3370 = vadd.f32 %v1974, %v3369
    %v3371 = vpop.f32.mrb[0].mxu0
    %3372 = vmatprep.mubr.bf16.mxu0 %v2827
    %3373 = vmatmul.mubr.bf16.gmra.mrb[0].mxu0 %v2826
    %v3374 = vpop.f32.mrb[0].mxu0
    %v3375 = vadd.f32 %v1979, %v3374
    %v3376 = vpop.f32.mrb[0].mxu0
    %v3377 = vpop.f32.mrb[0].mxu0
    %v3378 = vadd.f32 %v1984, %v3377
    %v3379 = vpop.f32.mrb[0].mxu0
    %3380 = vmatprep.mubr.bf16.mxu0 %v2832
    %3381 = vmatmul.mubr.bf16.gmra.mrb[0].mxu0 %v2831
    %v3382 = vpop.f32.mrb[0].mxu0
    %v3383 = vadd.f32 %v1989, %v3382
    %v3384 = vpop.f32.mrb[0].mxu0
    %v3385 = vpop.f32.mrb[0].mxu0
    %v3386 = vadd.f32 %v1994, %v3385
    %v3387 = vpop.f32.mrb[0].mxu0
    %3388 = vdwg.mxu0
    %3389 = vmatprep.subr.bf16.mxu0 0
    %3390 = vmatpush1.bf16.msra.mxu0 %v1492
    %3391 = vmatprep.subr.bf16.mxu0 0
    %3392 = vmatpush1.bf16.msra.mxu0 %v1493
    %3393 = vmatprep.subr.bf16.mxu0 0
    %3394 = vmatpush1.bf16.msra.mxu0 %v1494
    %3395 = vmatprep.subr.bf16.mxu0 0
    %3396 = vmatpush1.bf16.msra.mxu0 %v1495
    %3397 = vmatprep.subr.bf16.mxu0 0
    %3398 = vmatpush1.bf16.msra.mxu0 %v1496
    %3399 = vmatprep.subr.bf16.mxu0 0
    %3400 = vmatpush1.bf16.msra.mxu0 %v1497
    %3401 = vmatprep.subr.bf16.mxu0 0
    %3402 = vmatpush1.bf16.msra.mxu0 %v1498
    %3403 = vmatprep.subr.bf16.mxu0 0
    %3404 = vmatpush1.bf16.msra.mxu0 %v1499
    %3405 = vmatprep.subr.bf16.mxu0 0
    %3406 = vmatpush1.bf16.msra.mxu0 %v1500
    %3407 = vmatprep.subr.bf16.mxu0 0
    %3408 = vmatpush1.bf16.msra.mxu0 %v1501
    %3409 = vmatprep.subr.bf16.mxu0 0
    %3410 = vmatpush1.bf16.msra.mxu0 %v1502
    %3411 = vmatprep.subr.bf16.mxu0 0
    %3412 = vmatpush1.bf16.msra.mxu0 %v1503
    %3413 = vmatprep.subr.bf16.mxu0 0
    %3414 = vmatpush1.bf16.msra.mxu0 %v1504
    %3415 = vmatprep.subr.bf16.mxu0 0
    %3416 = vmatpush1.bf16.msra.mxu0 %v1505
    %3417 = vmatprep.subr.bf16.mxu0 0
    %3418 = vmatpush1.bf16.msra.mxu0 %v1506
    %3419 = vmatprep.subr.bf16.mxu0 0
    %3420 = vmatpush1.bf16.msra.mxu0 %v1507
    %3421 = vmatprep.mubr.bf16.mxu0 %v2639
    %3422 = vmatmul.mubr.bf16.gmra.mrb[0].mxu0 %v2638
    %v3423 = vpop.f32.mrb[0].mxu0
    %v3424 = vadd.f32 %v3071, %v3423
    %v3425 = vpop.f32.mrb[0].mxu0
    %v3426 = vpop.f32.mrb[0].mxu0
    %v3427 = vadd.f32 %v3074, %v3426
    %v3428 = vpop.f32.mrb[0].mxu0
    %3429 = vmatprep.mubr.bf16.mxu0 %v2644
    %3430 = vmatmul.mubr.bf16.gmra.mrb[0].mxu0 %v2643
    %v3431 = vpop.f32.mrb[0].mxu0
    %v3432 = vadd.f32 %v3079, %v3431
    %v3433 = vpop.f32.mrb[0].mxu0
    %v3434 = vpop.f32.mrb[0].mxu0
    %v3435 = vadd.f32 %v3082, %v3434
    %v3436 = vpop.f32.mrb[0].mxu0
    %3437 = vmatprep.mubr.bf16.mxu0 %v2649
    %3438 = vmatmul.mubr.bf16.gmra.mrb[0].mxu0 %v2648
    %v3439 = vpop.f32.mrb[0].mxu0
    %v3440 = vadd.f32 %v3087, %v3439
    %v3441 = vpop.f32.mrb[0].mxu0
    %v3442 = vpop.f32.mrb[0].mxu0
    %v3443 = vadd.f32 %v3090, %v3442
    %v3444 = vpop.f32.mrb[0].mxu0
    %3445 = vmatprep.mubr.bf16.mxu0 %v2654
    %3446 = vmatmul.mubr.bf16.gmra.mrb[0].mxu0 %v2653
    %v3447 = vpop.f32.mrb[0].mxu0
    %v3448 = vadd.f32 %v3095, %v3447
    %v3449 = vpop.f32.mrb[0].mxu0
    %v3450 = vpop.f32.mrb[0].mxu0
    %v3451 = vadd.f32 %v3098, %v3450
    %v3452 = vpop.f32.mrb[0].mxu0
    %3453 = vmatprep.mubr.bf16.mxu0 %v2659
    %3454 = vmatmul.mubr.bf16.gmra.mrb[0].mxu0 %v2658
    %v3455 = vpop.f32.mrb[0].mxu0
    %v3456 = vadd.f32 %v3103, %v3455
    %v3457 = vpop.f32.mrb[0].mxu0
    %v3458 = vpop.f32.mrb[0].mxu0
    %v3459 = vadd.f32 %v3106, %v3458
    %v3460 = vpop.f32.mrb[0].mxu0
    %3461 = vmatprep.mubr.bf16.mxu0 %v2664
    %3462 = vmatmul.mubr.bf16.gmra.mrb[0].mxu0 %v2663
    %v3463 = vpop.f32.mrb[0].mxu0
    %v3464 = vadd.f32 %v3111, %v3463
    %v3465 = vpop.f32.mrb[0].mxu0
    %v3466 = vpop.f32.mrb[0].mxu0
    %v3467 = vadd.f32 %v3114, %v3466
    %v3468 = vpop.f32.mrb[0].mxu0
    %3469 = vmatprep.mubr.bf16.mxu0 %v2669
    %3470 = vmatmul.mubr.bf16.gmra.mrb[0].mxu0 %v2668
    %v3471 = vpop.f32.mrb[0].mxu0
    %v3472 = vadd.f32 %v3119, %v3471
    %v3473 = vpop.f32.mrb[0].mxu0
    %v3474 = vpop.f32.mrb[0].mxu0
    %v3475 = vadd.f32 %v3122, %v3474
    %v3476 = vpop.f32.mrb[0].mxu0
    %3477 = vmatprep.mubr.bf16.mxu0 %v2674
    %3478 = vmatmul.mubr.bf16.gmra.mrb[0].mxu0 %v2673
    %v3479 = vpop.f32.mrb[0].mxu0
    %v3480 = vadd.f32 %v3127, %v3479
    %v3481 = vpop.f32.mrb[0].mxu0
    %v3482 = vpop.f32.mrb[0].mxu0
    %v3483 = vadd.f32 %v3130, %v3482
    %v3484 = vpop.f32.mrb[0].mxu0
    %3485 = vmatprep.mubr.bf16.mxu0 %v2679
    %3486 = vmatmul.mubr.bf16.gmra.mrb[0].mxu0 %v2678
    %v3487 = vpop.f32.mrb[0].mxu0
    %v3488 = vadd.f32 %v3135, %v3487
    %v3489 = vpop.f32.mrb[0].mxu0
    %v3490 = vpop.f32.mrb[0].mxu0
    %v3491 = vadd.f32 %v3138, %v3490
    %v3492 = vpop.f32.mrb[0].mxu0
    %3493 = vmatprep.mubr.bf16.mxu0 %v2684
    %3494 = vmatmul.mubr.bf16.gmra.mrb[0].mxu0 %v2683
    %v3495 = vpop.f32.mrb[0].mxu0
    %v3496 = vadd.f32 %v3143, %v3495
    %v3497 = vpop.f32.mrb[0].mxu0
    %v3498 = vpop.f32.mrb[0].mxu0
    %v3499 = vadd.f32 %v3146, %v3498
    %v3500 = vpop.f32.mrb[0].mxu0
    %3501 = vmatprep.mubr.bf16.mxu0 %v2689
    %3502 = vmatmul.mubr.bf16.gmra.mrb[0].mxu0 %v2688
    %v3503 = vpop.f32.mrb[0].mxu0
    %v3504 = vadd.f32 %v3151, %v3503
    %v3505 = vpop.f32.mrb[0].mxu0
    %v3506 = vpop.f32.mrb[0].mxu0
    %v3507 = vadd.f32 %v3154, %v3506
    %v3508 = vpop.f32.mrb[0].mxu0
    %3509 = vmatprep.mubr.bf16.mxu0 %v2694
    %3510 = vmatmul.mubr.bf16.gmra.mrb[0].mxu0 %v2693
    %v3511 = vpop.f32.mrb[0].mxu0
    %v3512 = vadd.f32 %v3159, %v3511
    %v3513 = vpop.f32.mrb[0].mxu0
    %v3514 = vpop.f32.mrb[0].mxu0
    %v3515 = vadd.f32 %v3162, %v3514
    %v3516 = vpop.f32.mrb[0].mxu0
    %3517 = vmatprep.mubr.bf16.mxu0 %v2699
    %3518 = vmatmul.mubr.bf16.gmra.mrb[0].mxu0 %v2698
    %v3519 = vpop.f32.mrb[0].mxu0
    %v3520 = vadd.f32 %v3167, %v3519
    %v3521 = vpop.f32.mrb[0].mxu0
    %v3522 = vpop.f32.mrb[0].mxu0
    %v3523 = vadd.f32 %v3170, %v3522
    %v3524 = vpop.f32.mrb[0].mxu0
    %3525 = vmatprep.mubr.bf16.mxu0 %v2704
    %3526 = vmatmul.mubr.bf16.gmra.mrb[0].mxu0 %v2703
    %v3527 = vpop.f32.mrb[0].mxu0
    %v3528 = vadd.f32 %v3175, %v3527
    %v3529 = vpop.f32.mrb[0].mxu0
    %v3530 = vpop.f32.mrb[0].mxu0
    %v3531 = vadd.f32 %v3178, %v3530
    %v3532 = vpop.f32.mrb[0].mxu0
    %3533 = vmatprep.mubr.bf16.mxu0 %v2709
    %3534 = vmatmul.mubr.bf16.gmra.mrb[0].mxu0 %v2708
    %v3535 = vpop.f32.mrb[0].mxu0
    %v3536 = vadd.f32 %v3183, %v3535
    %v3537 = vpop.f32.mrb[0].mxu0
    %v3538 = vpop.f32.mrb[0].mxu0
    %v3539 = vadd.f32 %v3186, %v3538
    %v3540 = vpop.f32.mrb[0].mxu0
    %3541 = vmatprep.mubr.bf16.mxu0 %v2714
    %3542 = vmatmul.mubr.bf16.gmra.mrb[0].mxu0 %v2713
    %v3543 = vpop.f32.mrb[0].mxu0
    %v3544 = vadd.f32 %v3191, %v3543
    %v3545 = vpop.f32.mrb[0].mxu0
    %v3546 = vpop.f32.mrb[0].mxu0
    %v3547 = vadd.f32 %v3194, %v3546
    %v3548 = vpop.f32.mrb[0].mxu0
    %3549 = vmatprep.mubr.bf16.mxu0 %v2719
    %3550 = vmatmul.mubr.bf16.gmra.mrb[0].mxu0 %v2718
    %v3551 = vpop.f32.mrb[0].mxu0
    %v3552 = vadd.f32 %v3199, %v3551
    %v3553 = vpop.f32.mrb[0].mxu0
    %v3554 = vpop.f32.mrb[0].mxu0
    %v3555 = vadd.f32 %v3202, %v3554
    %v3556 = vpop.f32.mrb[0].mxu0
    %3557 = vmatprep.mubr.bf16.mxu0 %v2724
    %3558 = vmatmul.mubr.bf16.gmra.mrb[0].mxu0 %v2723
    %v3559 = vpop.f32.mrb[0].mxu0
    %v3560 = vadd.f32 %v3207, %v3559
    %v3561 = vpop.f32.mrb[0].mxu0
    %v3562 = vpop.f32.mrb[0].mxu0
    %v3563 = vadd.f32 %v3210, %v3562
    %v3564 = vpop.f32.mrb[0].mxu0
    %3565 = vmatprep.mubr.bf16.mxu0 %v2729
    %3566 = vmatmul.mubr.bf16.gmra.mrb[0].mxu0 %v2728
    %v3567 = vpop.f32.mrb[0].mxu0
    %v3568 = vadd.f32 %v3215, %v3567
    %v3569 = vpop.f32.mrb[0].mxu0
    %v3570 = vpop.f32.mrb[0].mxu0
    %v3571 = vadd.f32 %v3218, %v3570
    %v3572 = vpop.f32.mrb[0].mxu0
    %3573 = vmatprep.mubr.bf16.mxu0 %v2734
    %3574 = vmatmul.mubr.bf16.gmra.mrb[0].mxu0 %v2733
    %v3575 = vpop.f32.mrb[0].mxu0
    %v3576 = vadd.f32 %v3223, %v3575
    %v3577 = vpop.f32.mrb[0].mxu0
    %v3578 = vpop.f32.mrb[0].mxu0
    %v3579 = vadd.f32 %v3226, %v3578
    %v3580 = vpop.f32.mrb[0].mxu0
    %3581 = vmatprep.mubr.bf16.mxu0 %v2739
    %3582 = vmatmul.mubr.bf16.gmra.mrb[0].mxu0 %v2738
    %v3583 = vpop.f32.mrb[0].mxu0
    %v3584 = vadd.f32 %v3231, %v3583
    %v3585 = vpop.f32.mrb[0].mxu0
    %v3586 = vpop.f32.mrb[0].mxu0
    %v3587 = vadd.f32 %v3234, %v3586
    %v3588 = vpop.f32.mrb[0].mxu0
    %3589 = vmatprep.mubr.bf16.mxu0 %v2744
    %3590 = vmatmul.mubr.bf16.gmra.mrb[0].mxu0 %v2743
    %v3591 = vpop.f32.mrb[0].mxu0
    %v3592 = vadd.f32 %v3239, %v3591
    %v3593 = vpop.f32.mrb[0].mxu0
    %v3594 = vpop.f32.mrb[0].mxu0
    %v3595 = vadd.f32 %v3242, %v3594
    %v3596 = vpop.f32.mrb[0].mxu0
    %3597 = vmatprep.mubr.bf16.mxu0 %v2749
    %3598 = vmatmul.mubr.bf16.gmra.mrb[0].mxu0 %v2748
    %v3599 = vpop.f32.mrb[0].mxu0
    %v3600 = vadd.f32 %v3247, %v3599
    %v3601 = vpop.f32.mrb[0].mxu0
    %v3602 = vpop.f32.mrb[0].mxu0
    %v3603 = vadd.f32 %v3250, %v3602
    %v3604 = vpop.f32.mrb[0].mxu0
    %3605 = vmatprep.mubr.bf16.mxu0 %v2754
    %3606 = vmatmul.mubr.bf16.gmra.mrb[0].mxu0 %v2753
    %v3607 = vpop.f32.mrb[0].mxu0
    %v3608 = vadd.f32 %v3255, %v3607
    %v3609 = vpop.f32.mrb[0].mxu0
    %v3610 = vpop.f32.mrb[0].mxu0
    %v3611 = vadd.f32 %v3258, %v3610
    %v3612 = vpop.f32.mrb[0].mxu0
    %3613 = vmatprep.mubr.bf16.mxu0 %v2759
    %3614 = vmatmul.mubr.bf16.gmra.mrb[0].mxu0 %v2758
    %v3615 = vpop.f32.mrb[0].mxu0
    %v3616 = vadd.f32 %v3263, %v3615
    %v3617 = vpop.f32.mrb[0].mxu0
    %v3618 = vpop.f32.mrb[0].mxu0
    %v3619 = vadd.f32 %v3266, %v3618
    %v3620 = vpop.f32.mrb[0].mxu0
    %3621 = vmatprep.mubr.bf16.mxu0 %v2764
    %3622 = vmatmul.mubr.bf16.gmra.mrb[0].mxu0 %v2763
    %v3623 = vpop.f32.mrb[0].mxu0
    %v3624 = vadd.f32 %v3271, %v3623
    %v3625 = vpop.f32.mrb[0].mxu0
    %v3626 = vpop.f32.mrb[0].mxu0
    %v3627 = vadd.f32 %v3274, %v3626
    %v3628 = vpop.f32.mrb[0].mxu0
    %3629 = vmatprep.mubr.bf16.mxu0 %v2769
    %3630 = vmatmul.mubr.bf16.gmra.mrb[0].mxu0 %v2768
    %v3631 = vpop.f32.mrb[0].mxu0
    %v3632 = vadd.f32 %v3279, %v3631
    %v3633 = vpop.f32.mrb[0].mxu0
    %v3634 = vpop.f32.mrb[0].mxu0
    %v3635 = vadd.f32 %v3282, %v3634
    %v3636 = vpop.f32.mrb[0].mxu0
    %3637 = vmatprep.mubr.bf16.mxu0 %v2774
    %3638 = vmatmul.mubr.bf16.gmra.mrb[0].mxu0 %v2773
    %v3639 = vpop.f32.mrb[0].mxu0
    %v3640 = vadd.f32 %v3287, %v3639
    %v3641 = vpop.f32.mrb[0].mxu0
    %v3642 = vpop.f32.mrb[0].mxu0
    %v3643 = vadd.f32 %v3290, %v3642
    %v3644 = vpop.f32.mrb[0].mxu0
    %3645 = vmatprep.mubr.bf16.mxu0 %v2779
    %3646 = vmatmul.mubr.bf16.gmra.mrb[0].mxu0 %v2778
    %v3647 = vpop.f32.mrb[0].mxu0
    %v3648 = vadd.f32 %v3295, %v3647
    %v3649 = vpop.f32.mrb[0].mxu0
    %v3650 = vpop.f32.mrb[0].mxu0
    %v3651 = vadd.f32 %v3298, %v3650
    %v3652 = vpop.f32.mrb[0].mxu0
    %3653 = vmatprep.mubr.bf16.mxu0 %v2784
    %3654 = vmatmul.mubr.bf16.gmra.mrb[0].mxu0 %v2783
    %v3655 = vpop.f32.mrb[0].mxu0
    %v3656 = vadd.f32 %v3303, %v3655
    %v3657 = vpop.f32.mrb[0].mxu0
    %v3658 = vpop.f32.mrb[0].mxu0
    %v3659 = vadd.f32 %v3306, %v3658
    %v3660 = vpop.f32.mrb[0].mxu0
    %3661 = vmatprep.mubr.bf16.mxu0 %v2789
    %3662 = vmatmul.mubr.bf16.gmra.mrb[0].mxu0 %v2788
    %v3663 = vpop.f32.mrb[0].mxu0
    %v3664 = vadd.f32 %v3311, %v3663
    %v3665 = vpop.f32.mrb[0].mxu0
    %v3666 = vpop.f32.mrb[0].mxu0
    %v3667 = vadd.f32 %v3314, %v3666
    %v3668 = vpop.f32.mrb[0].mxu0
    %3669 = vmatprep.mubr.bf16.mxu0 %v2794
    %3670 = vmatmul.mubr.bf16.gmra.mrb[0].mxu0 %v2793
    %v3671 = vpop.f32.mrb[0].mxu0
    %v3672 = vadd.f32 %v3319, %v3671
    %v3673 = vpop.f32.mrb[0].mxu0
    %v3674 = vpop.f32.mrb[0].mxu0
    %v3675 = vadd.f32 %v3322, %v3674
    %v3676 = vpop.f32.mrb[0].mxu0
    %3677 = vmatprep.mubr.bf16.mxu0 %v2799
    %3678 = vmatmul.mubr.bf16.gmra.mrb[0].mxu0 %v2798
    %v3679 = vpop.f32.mrb[0].mxu0
    %v3680 = vadd.f32 %v3327, %v3679
    %v3681 = vpop.f32.mrb[0].mxu0
    %v3682 = vpop.f32.mrb[0].mxu0
    %v3683 = vadd.f32 %v3330, %v3682
    %v3684 = vpop.f32.mrb[0].mxu0
    %3685 = vmatprep.mubr.bf16.mxu0 %v2804
    %3686 = vmatmul.mubr.bf16.gmra.mrb[0].mxu0 %v2803
    %v3687 = vpop.f32.mrb[0].mxu0
    %v3688 = vadd.f32 %v3335, %v3687
    %v3689 = vpop.f32.mrb[0].mxu0
    %v3690 = vpop.f32.mrb[0].mxu0
    %v3691 = vadd.f32 %v3338, %v3690
    %v3692 = vpop.f32.mrb[0].mxu0
    %3693 = vmatprep.mubr.bf16.mxu0 %v2809
    %3694 = vmatmul.mubr.bf16.gmra.mrb[0].mxu0 %v2808
    %v3695 = vpop.f32.mrb[0].mxu0
    %v3696 = vadd.f32 %v3343, %v3695
    %v3697 = vpop.f32.mrb[0].mxu0
    %v3698 = vpop.f32.mrb[0].mxu0
    %v3699 = vadd.f32 %v3346, %v3698
    %v3700 = vpop.f32.mrb[0].mxu0
    %3701 = vmatprep.mubr.bf16.mxu0 %v2814
    %3702 = vmatmul.mubr.bf16.gmra.mrb[0].mxu0 %v2813
    %v3703 = vpop.f32.mrb[0].mxu0
    %v3704 = vadd.f32 %v3351, %v3703
    %v3705 = vpop.f32.mrb[0].mxu0
    %v3706 = vpop.f32.mrb[0].mxu0
    %v3707 = vadd.f32 %v3354, %v3706
    %v3708 = vpop.f32.mrb[0].mxu0
    %3709 = vmatprep.mubr.bf16.mxu0 %v2819
    %3710 = vmatmul.mubr.bf16.gmra.mrb[0].mxu0 %v2818
    %v3711 = vpop.f32.mrb[0].mxu0
    %v3712 = vadd.f32 %v3359, %v3711
    %v3713 = vpop.f32.mrb[0].mxu0
    %v3714 = vpop.f32.mrb[0].mxu0
    %v3715 = vadd.f32 %v3362, %v3714
    %v3716 = vpop.f32.mrb[0].mxu0
    %3717 = vmatprep.mubr.bf16.mxu0 %v2824
    %3718 = vmatmul.mubr.bf16.gmra.mrb[0].mxu0 %v2823
    %v3719 = vpop.f32.mrb[0].mxu0
    %v3720 = vadd.f32 %v3367, %v3719
    %v3721 = vpop.f32.mrb[0].mxu0
    %v3722 = vpop.f32.mrb[0].mxu0
    %v3723 = vadd.f32 %v3370, %v3722
    %v3724 = vpop.f32.mrb[0].mxu0
    %3725 = vmatprep.mubr.bf16.mxu0 %v2829
    %3726 = vmatmul.mubr.bf16.gmra.mrb[0].mxu0 %v2828
    %v3727 = vpop.f32.mrb[0].mxu0
    %v3728 = vadd.f32 %v3375, %v3727
    %v3729 = vpop.f32.mrb[0].mxu0
    %v3730 = vpop.f32.mrb[0].mxu0
    %v3731 = vadd.f32 %v3378, %v3730
    %v3732 = vpop.f32.mrb[0].mxu0
    %3733 = vmatprep.mubr.bf16.mxu0 %v2834
    %3734 = vmatmul.mubr.bf16.gmra.mrb[0].mxu0 %v2833
    %v3735 = vpop.f32.mrb[0].mxu0
    %v3736 = vadd.f32 %v3383, %v3735
    %v3737 = vpop.f32.mrb[0].mxu0
    %v3738 = vpop.f32.mrb[0].mxu0
    %v3739 = vadd.f32 %v3386, %v3738
    %v3740 = vpop.f32.mrb[0].mxu0
    %3741 = vdwg.mxu0
    %3742 = vmatprep.subr.bf16.mxu0 0
    %3743 = vmatpush1.bf16.msra.mxu0 %v1508
    %3744 = vmatprep.subr.bf16.mxu0 0
    %3745 = vmatpush1.bf16.msra.mxu0 %v1509
    %3746 = vmatprep.subr.bf16.mxu0 0
    %3747 = vmatpush1.bf16.msra.mxu0 %v1510
    %3748 = vmatprep.subr.bf16.mxu0 0
    %3749 = vmatpush1.bf16.msra.mxu0 %v1511
    %3750 = vmatprep.subr.bf16.mxu0 0
    %3751 = vmatpush1.bf16.msra.mxu0 %v1512
    %3752 = vmatprep.subr.bf16.mxu0 0
    %3753 = vmatpush1.bf16.msra.mxu0 %v1513
    %3754 = vmatprep.subr.bf16.mxu0 0
    %3755 = vmatpush1.bf16.msra.mxu0 %v1514
    %3756 = vmatprep.subr.bf16.mxu0 0
    %3757 = vmatpush1.bf16.msra.mxu0 %v1515
    %3758 = vmatprep.subr.bf16.mxu0 0
    %3759 = vmatpush1.bf16.msra.mxu0 0
    %3760 = vmatprep.subr.bf16.mxu0 0
    %3761 = vmatpush1.bf16.msra.mxu0 0
    %3762 = vmatprep.subr.bf16.mxu0 0
    %3763 = vmatpush1.bf16.msra.mxu0 0
    %3764 = vmatprep.subr.bf16.mxu0 0
    %3765 = vmatpush1.bf16.msra.mxu0 0
    %3766 = vmatprep.subr.bf16.mxu0 0
    %3767 = vmatpush1.bf16.msra.mxu0 0
    %3768 = vmatprep.subr.bf16.mxu0 0
    %3769 = vmatpush1.bf16.msra.mxu0 0
    %3770 = vmatprep.subr.bf16.mxu0 0
    %3771 = vmatpush1.bf16.msra.mxu0 0
    %3772 = vmatprep.subr.bf16.mxu0 0
    %3773 = vmatpush1.bf16.msra.mxu0 0
    %3774 = vmatprep.mubr.bf16.mxu0 0
    %3775 = vmatmul.mubr.bf16.gmra.mrb[0].mxu0 %v2640
    %v3776 = vpop.f32.mrb[0].mxu0
    %v3777 = vadd.f32 %v3424, %v3776
    %v3778 = vpop.f32.mrb[0].mxu0
    %v3779 = vpop.f32.mrb[0].mxu0
    %v3780 = vadd.f32 %v3427, %v3779
    %v3781 = vpop.f32.mrb[0].mxu0
    %3782 = vmatprep.mubr.bf16.mxu0 0
    %3783 = vmatmul.mubr.bf16.gmra.mrb[0].mxu0 %v2645
    %v3784 = vpop.f32.mrb[0].mxu0
    %v3785 = vadd.f32 %v3432, %v3784
    %v3786 = vpop.f32.mrb[0].mxu0
    %v3787 = vpop.f32.mrb[0].mxu0
    %v3788 = vadd.f32 %v3435, %v3787
    %v3789 = vpop.f32.mrb[0].mxu0
    %3790 = vmatprep.mubr.bf16.mxu0 0
    %3791 = vmatmul.mubr.bf16.gmra.mrb[0].mxu0 %v2650
    %v3792 = vpop.f32.mrb[0].mxu0
    %v3793 = vadd.f32 %v3440, %v3792
    %v3794 = vpop.f32.mrb[0].mxu0
    %v3795 = vpop.f32.mrb[0].mxu0
    %v3796 = vadd.f32 %v3443, %v3795
    %v3797 = vpop.f32.mrb[0].mxu0
    %3798 = vmatprep.mubr.bf16.mxu0 0
    %3799 = vmatmul.mubr.bf16.gmra.mrb[0].mxu0 %v2655
    %v3800 = vpop.f32.mrb[0].mxu0
    %v3801 = vadd.f32 %v3448, %v3800
    %v3802 = vpop.f32.mrb[0].mxu0
    %v3803 = vpop.f32.mrb[0].mxu0
    %v3804 = vadd.f32 %v3451, %v3803
    %v3805 = vpop.f32.mrb[0].mxu0
    %3806 = vmatprep.mubr.bf16.mxu0 0
    %3807 = vmatmul.mubr.bf16.gmra.mrb[0].mxu0 %v2660
    %v3808 = vpop.f32.mrb[0].mxu0
    %v3809 = vadd.f32 %v3456, %v3808
    %v3810 = vpop.f32.mrb[0].mxu0
    %v3811 = vpop.f32.mrb[0].mxu0
    %v3812 = vadd.f32 %v3459, %v3811
    %v3813 = vpop.f32.mrb[0].mxu0
    %3814 = vmatprep.mubr.bf16.mxu0 0
    %3815 = vmatmul.mubr.bf16.gmra.mrb[0].mxu0 %v2665
    %v3816 = vpop.f32.mrb[0].mxu0
    %v3817 = vadd.f32 %v3464, %v3816
    %v3818 = vpop.f32.mrb[0].mxu0
    %v3819 = vpop.f32.mrb[0].mxu0
    %v3820 = vadd.f32 %v3467, %v3819
    %v3821 = vpop.f32.mrb[0].mxu0
    %3822 = vmatprep.mubr.bf16.mxu0 0
    %3823 = vmatmul.mubr.bf16.gmra.mrb[0].mxu0 %v2670
    %v3824 = vpop.f32.mrb[0].mxu0
    %v3825 = vadd.f32 %v3472, %v3824
    %v3826 = vpop.f32.mrb[0].mxu0
    %v3827 = vpop.f32.mrb[0].mxu0
    %v3828 = vadd.f32 %v3475, %v3827
    %v3829 = vpop.f32.mrb[0].mxu0
    %3830 = vmatprep.mubr.bf16.mxu0 0
    %3831 = vmatmul.mubr.bf16.gmra.mrb[0].mxu0 %v2675
    %v3832 = vpop.f32.mrb[0].mxu0
    %v3833 = vadd.f32 %v3480, %v3832
    %v3834 = vpop.f32.mrb[0].mxu0
    %v3835 = vpop.f32.mrb[0].mxu0
    %v3836 = vadd.f32 %v3483, %v3835
    %v3837 = vpop.f32.mrb[0].mxu0
    %3838 = vmatprep.mubr.bf16.mxu0 0
    %3839 = vmatmul.mubr.bf16.gmra.mrb[0].mxu0 %v2680
    %v3840 = vpop.f32.mrb[0].mxu0
    %v3841 = vadd.f32 %v3488, %v3840
    %v3842 = vpop.f32.mrb[0].mxu0
    %v3843 = vpop.f32.mrb[0].mxu0
    %v3844 = vadd.f32 %v3491, %v3843
    %v3845 = vpop.f32.mrb[0].mxu0
    %3846 = vmatprep.mubr.bf16.mxu0 0
    %3847 = vmatmul.mubr.bf16.gmra.mrb[0].mxu0 %v2685
    %v3848 = vpop.f32.mrb[0].mxu0
    %v3849 = vadd.f32 %v3496, %v3848
    %v3850 = vpop.f32.mrb[0].mxu0
    %v3851 = vpop.f32.mrb[0].mxu0
    %v3852 = vadd.f32 %v3499, %v3851
    %v3853 = vpop.f32.mrb[0].mxu0
    %3854 = vmatprep.mubr.bf16.mxu0 0
    %3855 = vmatmul.mubr.bf16.gmra.mrb[0].mxu0 %v2690
    %v3856 = vpop.f32.mrb[0].mxu0
    %v3857 = vadd.f32 %v3504, %v3856
    %v3858 = vpop.f32.mrb[0].mxu0
    %v3859 = vpop.f32.mrb[0].mxu0
    %v3860 = vadd.f32 %v3507, %v3859
    %v3861 = vpop.f32.mrb[0].mxu0
    %3862 = vmatprep.mubr.bf16.mxu0 0
    %3863 = vmatmul.mubr.bf16.gmra.mrb[0].mxu0 %v2695
    %v3864 = vpop.f32.mrb[0].mxu0
    %v3865 = vadd.f32 %v3512, %v3864
    %v3866 = vpop.f32.mrb[0].mxu0
    %v3867 = vpop.f32.mrb[0].mxu0
    %v3868 = vadd.f32 %v3515, %v3867
    %v3869 = vpop.f32.mrb[0].mxu0
    %3870 = vmatprep.mubr.bf16.mxu0 0
    %3871 = vmatmul.mubr.bf16.gmra.mrb[0].mxu0 %v2700
    %v3872 = vpop.f32.mrb[0].mxu0
    %v3873 = vadd.f32 %v3520, %v3872
    %v3874 = vpop.f32.mrb[0].mxu0
    %v3875 = vpop.f32.mrb[0].mxu0
    %v3876 = vadd.f32 %v3523, %v3875
    %v3877 = vpop.f32.mrb[0].mxu0
    %3878 = vmatprep.mubr.bf16.mxu0 0
    %3879 = vmatmul.mubr.bf16.gmra.mrb[0].mxu0 %v2705
    %v3880 = vpop.f32.mrb[0].mxu0
    %v3881 = vadd.f32 %v3528, %v3880
    %v3882 = vpop.f32.mrb[0].mxu0
    %v3883 = vpop.f32.mrb[0].mxu0
    %v3884 = vadd.f32 %v3531, %v3883
    %v3885 = vpop.f32.mrb[0].mxu0
    %3886 = vmatprep.mubr.bf16.mxu0 0
    %3887 = vmatmul.mubr.bf16.gmra.mrb[0].mxu0 %v2710
    %v3888 = vpop.f32.mrb[0].mxu0
    %v3889 = vadd.f32 %v3536, %v3888
    %v3890 = vpop.f32.mrb[0].mxu0
    %v3891 = vpop.f32.mrb[0].mxu0
    %v3892 = vadd.f32 %v3539, %v3891
    %v3893 = vpop.f32.mrb[0].mxu0
    %3894 = vmatprep.mubr.bf16.mxu0 0
    %3895 = vmatmul.mubr.bf16.gmra.mrb[0].mxu0 %v2715
    %v3896 = vpop.f32.mrb[0].mxu0
    %v3897 = vadd.f32 %v3544, %v3896
    %v3898 = vpop.f32.mrb[0].mxu0
    %v3899 = vpop.f32.mrb[0].mxu0
    %v3900 = vadd.f32 %v3547, %v3899
    %v3901 = vpop.f32.mrb[0].mxu0
    %3902 = vmatprep.mubr.bf16.mxu0 0
    %3903 = vmatmul.mubr.bf16.gmra.mrb[0].mxu0 %v2720
    %v3904 = vpop.f32.mrb[0].mxu0
    %v3905 = vadd.f32 %v3552, %v3904
    %v3906 = vpop.f32.mrb[0].mxu0
    %v3907 = vpop.f32.mrb[0].mxu0
    %v3908 = vadd.f32 %v3555, %v3907
    %v3909 = vpop.f32.mrb[0].mxu0
    %3910 = vmatprep.mubr.bf16.mxu0 0
    %3911 = vmatmul.mubr.bf16.gmra.mrb[0].mxu0 %v2725
    %v3912 = vpop.f32.mrb[0].mxu0
    %v3913 = vadd.f32 %v3560, %v3912
    %v3914 = vpop.f32.mrb[0].mxu0
    %v3915 = vpop.f32.mrb[0].mxu0
    %v3916 = vadd.f32 %v3563, %v3915
    %v3917 = vpop.f32.mrb[0].mxu0
    %3918 = vmatprep.mubr.bf16.mxu0 0
    %3919 = vmatmul.mubr.bf16.gmra.mrb[0].mxu0 %v2730
    %v3920 = vpop.f32.mrb[0].mxu0
    %v3921 = vadd.f32 %v3568, %v3920
    %v3922 = vpop.f32.mrb[0].mxu0
    %v3923 = vpop.f32.mrb[0].mxu0
    %v3924 = vadd.f32 %v3571, %v3923
    %v3925 = vpop.f32.mrb[0].mxu0
    %3926 = vmatprep.mubr.bf16.mxu0 0
    %3927 = vmatmul.mubr.bf16.gmra.mrb[0].mxu0 %v2735
    %v3928 = vpop.f32.mrb[0].mxu0
    %v3929 = vadd.f32 %v3576, %v3928
    %v3930 = vpop.f32.mrb[0].mxu0
    %v3931 = vpop.f32.mrb[0].mxu0
    %v3932 = vadd.f32 %v3579, %v3931
    %v3933 = vpop.f32.mrb[0].mxu0
    %3934 = vmatprep.mubr.bf16.mxu0 0
    %3935 = vmatmul.mubr.bf16.gmra.mrb[0].mxu0 %v2740
    %v3936 = vpop.f32.mrb[0].mxu0
    %v3937 = vadd.f32 %v3584, %v3936
    %v3938 = vpop.f32.mrb[0].mxu0
    %v3939 = vpop.f32.mrb[0].mxu0
    %v3940 = vadd.f32 %v3587, %v3939
    %v3941 = vpop.f32.mrb[0].mxu0
    %3942 = vmatprep.mubr.bf16.mxu0 0
    %3943 = vmatmul.mubr.bf16.gmra.mrb[0].mxu0 %v2745
    %v3944 = vpop.f32.mrb[0].mxu0
    %v3945 = vadd.f32 %v3592, %v3944
    %v3946 = vpop.f32.mrb[0].mxu0
    %v3947 = vpop.f32.mrb[0].mxu0
    %v3948 = vadd.f32 %v3595, %v3947
    %v3949 = vpop.f32.mrb[0].mxu0
    %3950 = vmatprep.mubr.bf16.mxu0 0
    %3951 = vmatmul.mubr.bf16.gmra.mrb[0].mxu0 %v2750
    %v3952 = vpop.f32.mrb[0].mxu0
    %v3953 = vadd.f32 %v3600, %v3952
    %v3954 = vpop.f32.mrb[0].mxu0
    %v3955 = vpop.f32.mrb[0].mxu0
    %v3956 = vadd.f32 %v3603, %v3955
    %v3957 = vpop.f32.mrb[0].mxu0
    %3958 = vmatprep.mubr.bf16.mxu0 0
    %3959 = vmatmul.mubr.bf16.gmra.mrb[0].mxu0 %v2755
    %v3960 = vpop.f32.mrb[0].mxu0
    %v3961 = vadd.f32 %v3608, %v3960
    %v3962 = vpop.f32.mrb[0].mxu0
    %v3963 = vpop.f32.mrb[0].mxu0
    %v3964 = vadd.f32 %v3611, %v3963
    %v3965 = vpop.f32.mrb[0].mxu0
    %3966 = vmatprep.mubr.bf16.mxu0 0
    %3967 = vmatmul.mubr.bf16.gmra.mrb[0].mxu0 %v2760
    %v3968 = vpop.f32.mrb[0].mxu0
    %v3969 = vadd.f32 %v3616, %v3968
    %v3970 = vpop.f32.mrb[0].mxu0
    %v3971 = vpop.f32.mrb[0].mxu0
    %v3972 = vadd.f32 %v3619, %v3971
    %v3973 = vpop.f32.mrb[0].mxu0
    %3974 = vmatprep.mubr.bf16.mxu0 0
    %3975 = vmatmul.mubr.bf16.gmra.mrb[0].mxu0 %v2765
    %v3976 = vpop.f32.mrb[0].mxu0
    %v3977 = vadd.f32 %v3624, %v3976
    %v3978 = vpop.f32.mrb[0].mxu0
    %v3979 = vpop.f32.mrb[0].mxu0
    %v3980 = vadd.f32 %v3627, %v3979
    %v3981 = vpop.f32.mrb[0].mxu0
    %3982 = vmatprep.mubr.bf16.mxu0 0
    %3983 = vmatmul.mubr.bf16.gmra.mrb[0].mxu0 %v2770
    %v3984 = vpop.f32.mrb[0].mxu0
    %v3985 = vadd.f32 %v3632, %v3984
    %v3986 = vpop.f32.mrb[0].mxu0
    %v3987 = vpop.f32.mrb[0].mxu0
    %v3988 = vadd.f32 %v3635, %v3987
    %v3989 = vpop.f32.mrb[0].mxu0
    %3990 = vmatprep.mubr.bf16.mxu0 0
    %3991 = vmatmul.mubr.bf16.gmra.mrb[0].mxu0 %v2775
    %v3992 = vpop.f32.mrb[0].mxu0
    %v3993 = vadd.f32 %v3640, %v3992
    %v3994 = vpop.f32.mrb[0].mxu0
    %v3995 = vpop.f32.mrb[0].mxu0
    %v3996 = vadd.f32 %v3643, %v3995
    %v3997 = vpop.f32.mrb[0].mxu0
    %3998 = vmatprep.mubr.bf16.mxu0 0
    %3999 = vmatmul.mubr.bf16.gmra.mrb[0].mxu0 %v2780
    %v4000 = vpop.f32.mrb[0].mxu0
    %v4001 = vadd.f32 %v3648, %v4000
    %v4002 = vpop.f32.mrb[0].mxu0
    %v4003 = vpop.f32.mrb[0].mxu0
    %v4004 = vadd.f32 %v3651, %v4003
    %v4005 = vpop.f32.mrb[0].mxu0
    %4006 = vmatprep.mubr.bf16.mxu0 0
    %4007 = vmatmul.mubr.bf16.gmra.mrb[0].mxu0 %v2785
    %v4008 = vpop.f32.mrb[0].mxu0
    %v4009 = vadd.f32 %v3656, %v4008
    %v4010 = vpop.f32.mrb[0].mxu0
    %v4011 = vpop.f32.mrb[0].mxu0
    %v4012 = vadd.f32 %v3659, %v4011
    %v4013 = vpop.f32.mrb[0].mxu0
    %4014 = vmatprep.mubr.bf16.mxu0 0
    %4015 = vmatmul.mubr.bf16.gmra.mrb[0].mxu0 %v2790
    %v4016 = vpop.f32.mrb[0].mxu0
    %v4017 = vadd.f32 %v3664, %v4016
    %v4018 = vpop.f32.mrb[0].mxu0
    %v4019 = vpop.f32.mrb[0].mxu0
    %v4020 = vadd.f32 %v3667, %v4019
    %v4021 = vpop.f32.mrb[0].mxu0
    %4022 = vmatprep.mubr.bf16.mxu0 0
    %4023 = vmatmul.mubr.bf16.gmra.mrb[0].mxu0 %v2795
    %v4024 = vpop.f32.mrb[0].mxu0
    %v4025 = vadd.f32 %v3672, %v4024
    %v4026 = vpop.f32.mrb[0].mxu0
    %v4027 = vpop.f32.mrb[0].mxu0
    %v4028 = vadd.f32 %v3675, %v4027
    %v4029 = vpop.f32.mrb[0].mxu0
    %4030 = vmatprep.mubr.bf16.mxu0 0
    %4031 = vmatmul.mubr.bf16.gmra.mrb[0].mxu0 %v2800
    %v4032 = vpop.f32.mrb[0].mxu0
    %v4033 = vadd.f32 %v3680, %v4032
    %v4034 = vpop.f32.mrb[0].mxu0
    %v4035 = vpop.f32.mrb[0].mxu0
    %v4036 = vadd.f32 %v3683, %v4035
    %v4037 = vpop.f32.mrb[0].mxu0
    %4038 = vmatprep.mubr.bf16.mxu0 0
    %4039 = vmatmul.mubr.bf16.gmra.mrb[0].mxu0 %v2805
    %v4040 = vpop.f32.mrb[0].mxu0
    %v4041 = vadd.f32 %v3688, %v4040
    %v4042 = vpop.f32.mrb[0].mxu0
    %v4043 = vpop.f32.mrb[0].mxu0
    %v4044 = vadd.f32 %v3691, %v4043
    %v4045 = vpop.f32.mrb[0].mxu0
    %4046 = vmatprep.mubr.bf16.mxu0 0
    %4047 = vmatmul.mubr.bf16.gmra.mrb[0].mxu0 %v2810
    %v4048 = vpop.f32.mrb[0].mxu0
    %v4049 = vadd.f32 %v3696, %v4048
    %v4050 = vpop.f32.mrb[0].mxu0
    %v4051 = vpop.f32.mrb[0].mxu0
    %v4052 = vadd.f32 %v3699, %v4051
    %v4053 = vpop.f32.mrb[0].mxu0
    %4054 = vmatprep.mubr.bf16.mxu0 0
    %4055 = vmatmul.mubr.bf16.gmra.mrb[0].mxu0 %v2815
    %v4056 = vpop.f32.mrb[0].mxu0
    %v4057 = vadd.f32 %v3704, %v4056
    %v4058 = vpop.f32.mrb[0].mxu0
    %v4059 = vpop.f32.mrb[0].mxu0
    %v4060 = vadd.f32 %v3707, %v4059
    %v4061 = vpop.f32.mrb[0].mxu0
    %4062 = vmatprep.mubr.bf16.mxu0 0
    %4063 = vmatmul.mubr.bf16.gmra.mrb[0].mxu0 %v2820
    %v4064 = vpop.f32.mrb[0].mxu0
    %v4065 = vadd.f32 %v3712, %v4064
    %v4066 = vpop.f32.mrb[0].mxu0
    %v4067 = vpop.f32.mrb[0].mxu0
    %v4068 = vadd.f32 %v3715, %v4067
    %v4069 = vpop.f32.mrb[0].mxu0
    %4070 = vmatprep.mubr.bf16.mxu0 0
    %4071 = vmatmul.mubr.bf16.gmra.mrb[0].mxu0 %v2825
    %v4072 = vpop.f32.mrb[0].mxu0
    %v4073 = vadd.f32 %v3720, %v4072
    %v4074 = vpop.f32.mrb[0].mxu0
    %v4075 = vpop.f32.mrb[0].mxu0
    %v4076 = vadd.f32 %v3723, %v4075
    %v4077 = vpop.f32.mrb[0].mxu0
    %4078 = vmatprep.mubr.bf16.mxu0 0
    %4079 = vmatmul.mubr.bf16.gmra.mrb[0].mxu0 %v2830
    %v4080 = vpop.f32.mrb[0].mxu0
    %v4081 = vadd.f32 %v3728, %v4080
    %v4082 = vpop.f32.mrb[0].mxu0
    %v4083 = vpop.f32.mrb[0].mxu0
    %v4084 = vadd.f32 %v3731, %v4083
    %v4085 = vpop.f32.mrb[0].mxu0
    %4086 = vmatprep.mubr.bf16.mxu0 0
    %4087 = vmatmul.mubr.bf16.gmra.mrb[0].mxu0 %v2835
    %v4088 = vpop.f32.mrb[0].mxu0
    %v4089 = vadd.f32 %v3736, %v4088
    %v4090 = vpop.f32.mrb[0].mxu0
    %v4091 = vpop.f32.mrb[0].mxu0
    %v4092 = vadd.f32 %v3739, %v4091
    %v4093 = vpop.f32.mrb[0].mxu0
    %4094 = vdwg.mxu0
    %v4095 = vmax.f32 %v3777, 0.0
    %v4096 = vmax.f32 %v3780, 0.0
    %v4097 = vmax.f32 %v3785, 0.0
    %v4098 = vmax.f32 %v3788, 0.0
    %v4099 = vmax.f32 %v3793, 0.0
    %v4100 = vmax.f32 %v3796, 0.0
    %v4101 = vmax.f32 %v3801, 0.0
    %v4102 = vmax.f32 %v3804, 0.0
    %v4103 = vmax.f32 %v3809, 0.0
    %v4104 = vmax.f32 %v3812, 0.0
    %v4105 = vmax.f32 %v3817, 0.0
    %v4106 = vmax.f32 %v3820, 0.0
    %v4107 = vmax.f32 %v3825, 0.0
    %v4108 = vmax.f32 %v3828, 0.0
    %v4109 = vmax.f32 %v3833, 0.0
    %v4110 = vmax.f32 %v3836, 0.0
    %v4111 = vmax.f32 %v3841, 0.0
    %v4112 = vmax.f32 %v3844, 0.0
    %v4113 = vmax.f32 %v3849, 0.0
    %v4114 = vmax.f32 %v3852, 0.0
    %v4115 = vmax.f32 %v3857, 0.0
    %v4116 = vmax.f32 %v3860, 0.0
    %v4117 = vmax.f32 %v3865, 0.0
    %v4118 = vmax.f32 %v3868, 0.0
    %v4119 = vmax.f32 %v3873, 0.0
    %v4120 = vmax.f32 %v3876, 0.0
    %v4121 = vmax.f32 %v3881, 0.0
    %v4122 = vmax.f32 %v3884, 0.0
    %v4123 = vmax.f32 %v3889, 0.0
    %v4124 = vmax.f32 %v3892, 0.0
    %v4125 = vmax.f32 %v3897, 0.0
    %v4126 = vmax.f32 %v3900, 0.0
    %v4127 = vmax.f32 %v3905, 0.0
    %v4128 = vmax.f32 %v3908, 0.0
    %v4129 = vmax.f32 %v3913, 0.0
    %v4130 = vmax.f32 %v3916, 0.0
    %v4131 = vmax.f32 %v3921, 0.0
    %v4132 = vmax.f32 %v3924, 0.0
    %v4133 = vmax.f32 %v3929, 0.0
    %v4134 = vmax.f32 %v3932, 0.0
    %v4135 = vmax.f32 %v3937, 0.0
    %v4136 = vmax.f32 %v3940, 0.0
    %v4137 = vmax.f32 %v3945, 0.0
    %v4138 = vmax.f32 %v3948, 0.0
    %v4139 = vmax.f32 %v3953, 0.0
    %v4140 = vmax.f32 %v3956, 0.0
    %v4141 = vmax.f32 %v3961, 0.0
    %v4142 = vmax.f32 %v3964, 0.0
    %v4143 = vmax.f32 %v3969, 0.0
    %v4144 = vmax.f32 %v3972, 0.0
    %v4145 = vmax.f32 %v3977, 0.0
    %v4146 = vmax.f32 %v3980, 0.0
    %v4147 = vmax.f32 %v3985, 0.0
    %v4148 = vmax.f32 %v3988, 0.0
    %v4149 = vmax.f32 %v3993, 0.0
    %v4150 = vmax.f32 %v3996, 0.0
    %v4151 = vmax.f32 %v4001, 0.0
    %v4152 = vmax.f32 %v4004, 0.0
    %v4153 = vmax.f32 %v4009, 0.0
    %v4154 = vmax.f32 %v4012, 0.0
    %v4155 = vmax.f32 %v4017, 0.0
    %v4156 = vmax.f32 %v4020, 0.0
    %v4157 = vmax.f32 %v4025, 0.0
    %v4158 = vmax.f32 %v4028, 0.0
    %v4159 = vmax.f32 %v4033, 0.0
    %v4160 = vmax.f32 %v4036, 0.0
    %v4161 = vmax.f32 %v4041, 0.0
    %v4162 = vmax.f32 %v4044, 0.0
    %v4163 = vmax.f32 %v4049, 0.0
    %v4164 = vmax.f32 %v4052, 0.0
    %v4165 = vmax.f32 %v4057, 0.0
    %v4166 = vmax.f32 %v4060, 0.0
    %v4167 = vmax.f32 %v4065, 0.0
    %v4168 = vmax.f32 %v4068, 0.0
    %v4169 = vmax.f32 %v4073, 0.0
    %v4170 = vmax.f32 %v4076, 0.0
    %v4171 = vmax.f32 %v4081, 0.0
    %v4172 = vmax.f32 %v4084, 0.0
    %v4173 = vmax.f32 %v4089, 0.0
    %v4174 = vmax.f32 %v4092, 0.0
    %v4175 = vld [vmem:[%s5] sm:$0xff]
    %v4176 = vld [vmem:[%s5 + $0x8] sm:$0xff]
    %v4177 = vld [vmem:[%s5 + $0x10] sm:$0xff]
    %v4178 = vld [vmem:[%s5 + $0x18] sm:$0xff]
    %v4179 = vld [vmem:[%s5 + $0x20] sm:$0xff]
    %v4180 = vld [vmem:[%s5 + $0x28] sm:$0xff]
    %v4181 = vld [vmem:[%s5 + $0x30] sm:$0xff]
    %v4182 = vld [vmem:[%s5 + $0x38] sm:$0xff]
    %v4183 = vld [vmem:[%s5 + $0x40] sm:$0xff]
    %v4184 = vld [vmem:[%s5 + $0x48] sm:$0xff]
    %v4185 = vld [vmem:[%s5 + $0x50] sm:$0xff]
    %v4186 = vld [vmem:[%s5 + $0x58] sm:$0xff]
    %v4187 = vld [vmem:[%s5 + $0x60] sm:$0xff]
    %v4188 = vld [vmem:[%s5 + $0x68] sm:$0xff]
    %v4189 = vld [vmem:[%s5 + $0x70] sm:$0xff]
    %v4190 = vld [vmem:[%s5 + $0x78] sm:$0xff]
    %v4191 = vld [vmem:[%s5 + $0x80] sm:$0xff]
    %v4192 = vld [vmem:[%s5 + $0x88] sm:$0xff]
    %v4193 = vld [vmem:[%s5 + $0x90] sm:$0xff]
    %v4194 = vld [vmem:[%s5 + $0x98] sm:$0xff]
    %v4195 = vld [vmem:[%s5 + $0xa0] sm:$0xff]
    %v4196 = vld [vmem:[%s5 + $0xa8] sm:$0xff]
    %v4197 = vld [vmem:[%s5 + $0xb0] sm:$0xff]
    %v4198 = vld [vmem:[%s5 + $0xb8] sm:$0xff]
    %v4199 = vld [vmem:[%s5 + $0xc0] sm:$0xff]
    %v4200 = vld [vmem:[%s5 + $0xc8] sm:$0xff]
    %v4201 = vld [vmem:[%s5 + $0xd0] sm:$0xff]
    %v4202 = vld [vmem:[%s5 + $0xd8] sm:$0xff]
    %v4203 = vld [vmem:[%s5 + $0xe0] sm:$0xff]
    %v4204 = vld [vmem:[%s5 + $0xe8] sm:$0xff]
    %v4205 = vld [vmem:[%s5 + $0xf0] sm:$0xff]
    %v4206 = vld [vmem:[%s5 + $0xf8] sm:$0xff]
    %v4207 = vld [vmem:[%s5 + $0x100] sm:$0xff]
    %v4208 = vld [vmem:[%s5 + $0x108] sm:$0xff]
    %v4209 = vld [vmem:[%s5 + $0x110] sm:$0xff]
    %v4210 = vld [vmem:[%s5 + $0x118] sm:$0xff]
    %v4211 = vld [vmem:[%s5 + $0x120] sm:$0xff]
    %v4212 = vld [vmem:[%s5 + $0x128] sm:$0xff]
    %v4213 = vld [vmem:[%s5 + $0x130] sm:$0xff]
    %v4214 = vld [vmem:[%s5 + $0x138] sm:$0xff]
    %v4215 = vld [vmem:[%s5 + $0x140] sm:$0xff]
    %v4216 = vld [vmem:[%s5 + $0x148] sm:$0xff]
    %v4217 = vld [vmem:[%s5 + $0x150] sm:$0xff]
    %v4218 = vld [vmem:[%s5 + $0x158] sm:$0xff]
    %v4219 = vld [vmem:[%s5 + $0x160] sm:$0xff]
    %v4220 = vld [vmem:[%s5 + $0x168] sm:$0xff]
    %v4221 = vld [vmem:[%s5 + $0x170] sm:$0xff]
    %v4222 = vld [vmem:[%s5 + $0x178] sm:$0xff]
    %v4223 = vld [vmem:[%s5 + $0x180] sm:$0xff]
    %v4224 = vld [vmem:[%s5 + $0x188] sm:$0xff]
    %v4225 = vld [vmem:[%s5 + $0x190] sm:$0xff]
    %v4226 = vld [vmem:[%s5 + $0x198] sm:$0xff]
    %v4227 = vld [vmem:[%s5 + $0x1a0] sm:$0xff]
    %v4228 = vld [vmem:[%s5 + $0x1a8] sm:$0xff]
    %v4229 = vld [vmem:[%s5 + $0x1b0] sm:$0xff]
    %v4230 = vld [vmem:[%s5 + $0x1b8] sm:$0xff]
    %v4231 = vld [vmem:[%s5 + $0x1c0] sm:$0xff]
    %v4232 = vld [vmem:[%s5 + $0x1c8] sm:$0xff]
    %v4233 = vld [vmem:[%s5 + $0x1d0] sm:$0xff]
    %v4234 = vld [vmem:[%s5 + $0x1d8] sm:$0xff]
    %v4235 = vld [vmem:[%s5 + $0x1e0] sm:$0xff]
    %v4236 = vld [vmem:[%s5 + $0x1e8] sm:$0xff]
    %v4237 = vld [vmem:[%s5 + $0x1f0] sm:$0xff]
    %v4238 = vld [vmem:[%s5 + $0x1f8] sm:$0xff]
    %v4239 = vld [vmem:[%s5 + $0x200] sm:$0xff]
    %v4240 = vld [vmem:[%s5 + $0x208] sm:$0xff]
    %v4241 = vld [vmem:[%s5 + $0x210] sm:$0xff]
    %v4242 = vld [vmem:[%s5 + $0x218] sm:$0xff]
    %v4243 = vld [vmem:[%s5 + $0x220] sm:$0xff]
    %v4244 = vld [vmem:[%s5 + $0x228] sm:$0xff]
    %v4245 = vld [vmem:[%s5 + $0x230] sm:$0xff]
    %v4246 = vld [vmem:[%s5 + $0x238] sm:$0xff]
    %v4247 = vld [vmem:[%s5 + $0x240] sm:$0xff]
    %v4248 = vld [vmem:[%s5 + $0x248] sm:$0xff]
    %v4249 = vld [vmem:[%s5 + $0x250] sm:$0xff]
    %v4250 = vld [vmem:[%s5 + $0x258] sm:$0xff]
    %v4251 = vld [vmem:[%s5 + $0x260] sm:$0xff]
    %v4252 = vld [vmem:[%s5 + $0x268] sm:$0xff]
    %v4253 = vld [vmem:[%s5 + $0x270] sm:$0xff]
    %v4254 = vld [vmem:[%s5 + $0x278] sm:$0xff]
    %4256 = vset.pattern.permute.xlu0 0
    %4257 = vperm.xlu0 %4256, %v4175
    %v4258 = vpop.permute.xlu0 %4257
    %4261 = vset.pattern.permute.xlu0 0
    %4262 = vperm.xlu0 %4261, %v4176
    %v4263 = vpop.permute.xlu0 %4262
    %4266 = vset.pattern.permute.xlu0 0
    %4267 = vperm.xlu0 %4266, %v4177
    %v4268 = vpop.permute.xlu0 %4267
    %4271 = vset.pattern.permute.xlu0 0
    %4272 = vperm.xlu0 %4271, %v4178
    %v4273 = vpop.permute.xlu0 %4272
    %4276 = vset.pattern.permute.xlu0 0
    %4277 = vperm.xlu0 %4276, %v4179
    %v4278 = vpop.permute.xlu0 %4277
    %4281 = vset.pattern.permute.xlu0 0
    %4282 = vperm.xlu0 %4281, %v4180
    %v4283 = vpop.permute.xlu0 %4282
    %4286 = vset.pattern.permute.xlu0 0
    %4287 = vperm.xlu0 %4286, %v4181
    %v4288 = vpop.permute.xlu0 %4287
    %4291 = vset.pattern.permute.xlu0 0
    %4292 = vperm.xlu0 %4291, %v4182
    %v4293 = vpop.permute.xlu0 %4292
    %4296 = vset.pattern.permute.xlu0 0
    %4297 = vperm.xlu0 %4296, %v4183
    %v4298 = vpop.permute.xlu0 %4297
    %4301 = vset.pattern.permute.xlu0 0
    %4302 = vperm.xlu0 %4301, %v4184
    %v4303 = vpop.permute.xlu0 %4302
    %4306 = vset.pattern.permute.xlu0 0
    %4307 = vperm.xlu0 %4306, %v4185
    %v4308 = vpop.permute.xlu0 %4307
    %4311 = vset.pattern.permute.xlu0 0
    %4312 = vperm.xlu0 %4311, %v4186
    %v4313 = vpop.permute.xlu0 %4312
    %4316 = vset.pattern.permute.xlu0 0
    %4317 = vperm.xlu0 %4316, %v4187
    %v4318 = vpop.permute.xlu0 %4317
    %4321 = vset.pattern.permute.xlu0 0
    %4322 = vperm.xlu0 %4321, %v4188
    %v4323 = vpop.permute.xlu0 %4322
    %4326 = vset.pattern.permute.xlu0 0
    %4327 = vperm.xlu0 %4326, %v4189
    %v4328 = vpop.permute.xlu0 %4327
    %4331 = vset.pattern.permute.xlu0 0
    %4332 = vperm.xlu0 %4331, %v4190
    %v4333 = vpop.permute.xlu0 %4332
    %4336 = vset.pattern.permute.xlu0 0
    %4337 = vperm.xlu0 %4336, %v4191
    %v4338 = vpop.permute.xlu0 %4337
    %4341 = vset.pattern.permute.xlu0 0
    %4342 = vperm.xlu0 %4341, %v4192
    %v4343 = vpop.permute.xlu0 %4342
    %4346 = vset.pattern.permute.xlu0 0
    %4347 = vperm.xlu0 %4346, %v4193
    %v4348 = vpop.permute.xlu0 %4347
    %4351 = vset.pattern.permute.xlu0 0
    %4352 = vperm.xlu0 %4351, %v4194
    %v4353 = vpop.permute.xlu0 %4352
    %4356 = vset.pattern.permute.xlu0 0
    %4357 = vperm.xlu0 %4356, %v4195
    %v4358 = vpop.permute.xlu0 %4357
    %4361 = vset.pattern.permute.xlu0 0
    %4362 = vperm.xlu0 %4361, %v4196
    %v4363 = vpop.permute.xlu0 %4362
    %4366 = vset.pattern.permute.xlu0 0
    %4367 = vperm.xlu0 %4366, %v4197
    %v4368 = vpop.permute.xlu0 %4367
    %4371 = vset.pattern.permute.xlu0 0
    %4372 = vperm.xlu0 %4371, %v4198
    %v4373 = vpop.permute.xlu0 %4372
    %4376 = vset.pattern.permute.xlu0 0
    %4377 = vperm.xlu0 %4376, %v4199
    %v4378 = vpop.permute.xlu0 %4377
    %4381 = vset.pattern.permute.xlu0 0
    %4382 = vperm.xlu0 %4381, %v4200
    %v4383 = vpop.permute.xlu0 %4382
    %4386 = vset.pattern.permute.xlu0 0
    %4387 = vperm.xlu0 %4386, %v4201
    %v4388 = vpop.permute.xlu0 %4387
    %4391 = vset.pattern.permute.xlu0 0
    %4392 = vperm.xlu0 %4391, %v4202
    %v4393 = vpop.permute.xlu0 %4392
    %4396 = vset.pattern.permute.xlu0 0
    %4397 = vperm.xlu0 %4396, %v4203
    %v4398 = vpop.permute.xlu0 %4397
    %4401 = vset.pattern.permute.xlu0 0
    %4402 = vperm.xlu0 %4401, %v4204
    %v4403 = vpop.permute.xlu0 %4402
    %4406 = vset.pattern.permute.xlu0 0
    %4407 = vperm.xlu0 %4406, %v4205
    %v4408 = vpop.permute.xlu0 %4407
    %4411 = vset.pattern.permute.xlu0 0
    %4412 = vperm.xlu0 %4411, %v4206
    %v4413 = vpop.permute.xlu0 %4412
    %4416 = vset.pattern.permute.xlu0 0
    %4417 = vperm.xlu0 %4416, %v4207
    %v4418 = vpop.permute.xlu0 %4417
    %4421 = vset.pattern.permute.xlu0 0
    %4422 = vperm.xlu0 %4421, %v4208
    %v4423 = vpop.permute.xlu0 %4422
    %4426 = vset.pattern.permute.xlu0 0
    %4427 = vperm.xlu0 %4426, %v4209
    %v4428 = vpop.permute.xlu0 %4427
    %4431 = vset.pattern.permute.xlu0 0
    %4432 = vperm.xlu0 %4431, %v4210
    %v4433 = vpop.permute.xlu0 %4432
    %4436 = vset.pattern.permute.xlu0 0
    %4437 = vperm.xlu0 %4436, %v4211
    %v4438 = vpop.permute.xlu0 %4437
    %4441 = vset.pattern.permute.xlu0 0
    %4442 = vperm.xlu0 %4441, %v4212
    %v4443 = vpop.permute.xlu0 %4442
    %4446 = vset.pattern.permute.xlu0 0
    %4447 = vperm.xlu0 %4446, %v4213
    %v4448 = vpop.permute.xlu0 %4447
    %4451 = vset.pattern.permute.xlu0 0
    %4452 = vperm.xlu0 %4451, %v4214
    %v4453 = vpop.permute.xlu0 %4452
    %4456 = vset.pattern.permute.xlu0 0
    %4457 = vperm.xlu0 %4456, %v4215
    %v4458 = vpop.permute.xlu0 %4457
    %4461 = vset.pattern.permute.xlu0 0
    %4462 = vperm.xlu0 %4461, %v4216
    %v4463 = vpop.permute.xlu0 %4462
    %4466 = vset.pattern.permute.xlu0 0
    %4467 = vperm.xlu0 %4466, %v4217
    %v4468 = vpop.permute.xlu0 %4467
    %4471 = vset.pattern.permute.xlu0 0
    %4472 = vperm.xlu0 %4471, %v4218
    %v4473 = vpop.permute.xlu0 %4472
    %4476 = vset.pattern.permute.xlu0 0
    %4477 = vperm.xlu0 %4476, %v4219
    %v4478 = vpop.permute.xlu0 %4477
    %4481 = vset.pattern.permute.xlu0 0
    %4482 = vperm.xlu0 %4481, %v4220
    %v4483 = vpop.permute.xlu0 %4482
    %4486 = vset.pattern.permute.xlu0 0
    %4487 = vperm.xlu0 %4486, %v4221
    %v4488 = vpop.permute.xlu0 %4487
    %4491 = vset.pattern.permute.xlu0 0
    %4492 = vperm.xlu0 %4491, %v4222
    %v4493 = vpop.permute.xlu0 %4492
    %4496 = vset.pattern.permute.xlu0 0
    %4497 = vperm.xlu0 %4496, %v4223
    %v4498 = vpop.permute.xlu0 %4497
    %4501 = vset.pattern.permute.xlu0 0
    %4502 = vperm.xlu0 %4501, %v4224
    %v4503 = vpop.permute.xlu0 %4502
    %4506 = vset.pattern.permute.xlu0 0
    %4507 = vperm.xlu0 %4506, %v4225
    %v4508 = vpop.permute.xlu0 %4507
    %4511 = vset.pattern.permute.xlu0 0
    %4512 = vperm.xlu0 %4511, %v4226
    %v4513 = vpop.permute.xlu0 %4512
    %4516 = vset.pattern.permute.xlu0 0
    %4517 = vperm.xlu0 %4516, %v4227
    %v4518 = vpop.permute.xlu0 %4517
    %4521 = vset.pattern.permute.xlu0 0
    %4522 = vperm.xlu0 %4521, %v4228
    %v4523 = vpop.permute.xlu0 %4522
    %4526 = vset.pattern.permute.xlu0 0
    %4527 = vperm.xlu0 %4526, %v4229
    %v4528 = vpop.permute.xlu0 %4527
    %4531 = vset.pattern.permute.xlu0 0
    %4532 = vperm.xlu0 %4531, %v4230
    %v4533 = vpop.permute.xlu0 %4532
    %4536 = vset.pattern.permute.xlu0 0
    %4537 = vperm.xlu0 %4536, %v4231
    %v4538 = vpop.permute.xlu0 %4537
    %4541 = vset.pattern.permute.xlu0 0
    %4542 = vperm.xlu0 %4541, %v4232
    %v4543 = vpop.permute.xlu0 %4542
    %4546 = vset.pattern.permute.xlu0 0
    %4547 = vperm.xlu0 %4546, %v4233
    %v4548 = vpop.permute.xlu0 %4547
    %4551 = vset.pattern.permute.xlu0 0
    %4552 = vperm.xlu0 %4551, %v4234
    %v4553 = vpop.permute.xlu0 %4552
    %4556 = vset.pattern.permute.xlu0 0
    %4557 = vperm.xlu0 %4556, %v4235
    %v4558 = vpop.permute.xlu0 %4557
    %4561 = vset.pattern.permute.xlu0 0
    %4562 = vperm.xlu0 %4561, %v4236
    %v4563 = vpop.permute.xlu0 %4562
    %4566 = vset.pattern.permute.xlu0 0
    %4567 = vperm.xlu0 %4566, %v4237
    %v4568 = vpop.permute.xlu0 %4567
    %4571 = vset.pattern.permute.xlu0 0
    %4572 = vperm.xlu0 %4571, %v4238
    %v4573 = vpop.permute.xlu0 %4572
    %4576 = vset.pattern.permute.xlu0 0
    %4577 = vperm.xlu0 %4576, %v4239
    %v4578 = vpop.permute.xlu0 %4577
    %4581 = vset.pattern.permute.xlu0 0
    %4582 = vperm.xlu0 %4581, %v4240
    %v4583 = vpop.permute.xlu0 %4582
    %4586 = vset.pattern.permute.xlu0 0
    %4587 = vperm.xlu0 %4586, %v4241
    %v4588 = vpop.permute.xlu0 %4587
    %4591 = vset.pattern.permute.xlu0 0
    %4592 = vperm.xlu0 %4591, %v4242
    %v4593 = vpop.permute.xlu0 %4592
    %4596 = vset.pattern.permute.xlu0 0
    %4597 = vperm.xlu0 %4596, %v4243
    %v4598 = vpop.permute.xlu0 %4597
    %4601 = vset.pattern.permute.xlu0 0
    %4602 = vperm.xlu0 %4601, %v4244
    %v4603 = vpop.permute.xlu0 %4602
    %4606 = vset.pattern.permute.xlu0 0
    %4607 = vperm.xlu0 %4606, %v4245
    %v4608 = vpop.permute.xlu0 %4607
    %4611 = vset.pattern.permute.xlu0 0
    %4612 = vperm.xlu0 %4611, %v4246
    %v4613 = vpop.permute.xlu0 %4612
    %4616 = vset.pattern.permute.xlu0 0
    %4617 = vperm.xlu0 %4616, %v4247
    %v4618 = vpop.permute.xlu0 %4617
    %4621 = vset.pattern.permute.xlu0 0
    %4622 = vperm.xlu0 %4621, %v4248
    %v4623 = vpop.permute.xlu0 %4622
    %4626 = vset.pattern.permute.xlu0 0
    %4627 = vperm.xlu0 %4626, %v4249
    %v4628 = vpop.permute.xlu0 %4627
    %4631 = vset.pattern.permute.xlu0 0
    %4632 = vperm.xlu0 %4631, %v4250
    %v4633 = vpop.permute.xlu0 %4632
    %4636 = vset.pattern.permute.xlu0 0
    %4637 = vperm.xlu0 %4636, %v4251
    %v4638 = vpop.permute.xlu0 %4637
    %4641 = vset.pattern.permute.xlu0 0
    %4642 = vperm.xlu0 %4641, %v4252
    %v4643 = vpop.permute.xlu0 %4642
    %4646 = vset.pattern.permute.xlu0 0
    %4647 = vperm.xlu0 %4646, %v4253
    %v4648 = vpop.permute.xlu0 %4647
    %4651 = vset.pattern.permute.xlu0 0
    %4652 = vperm.xlu0 %4651, %v4254
    %v4653 = vpop.permute.xlu0 %4652
    %v4655 = vmul.f32 %v4258, %v4095
    %v4656 = vmul.f32 %v4263, %v4096
    %v4657 = vmul.f32 %v4268, %v4097
    %v4658 = vmul.f32 %v4273, %v4098
    %v4659 = vmul.f32 %v4278, %v4099
    %v4660 = vmul.f32 %v4283, %v4100
    %v4661 = vmul.f32 %v4288, %v4101
    %v4662 = vmul.f32 %v4293, %v4102
    %v4663 = vmul.f32 %v4298, %v4103
    %v4664 = vmul.f32 %v4303, %v4104
    %v4665 = vmul.f32 %v4308, %v4105
    %v4666 = vmul.f32 %v4313, %v4106
    %v4667 = vmul.f32 %v4318, %v4107
    %v4668 = vmul.f32 %v4323, %v4108
    %v4669 = vmul.f32 %v4328, %v4109
    %v4670 = vmul.f32 %v4333, %v4110
    %v4671 = vmul.f32 %v4338, %v4111
    %v4672 = vmul.f32 %v4343, %v4112
    %v4673 = vmul.f32 %v4348, %v4113
    %v4674 = vmul.f32 %v4353, %v4114
    %v4675 = vmul.f32 %v4358, %v4115
    %v4676 = vmul.f32 %v4363, %v4116
    %v4677 = vmul.f32 %v4368, %v4117
    %v4678 = vmul.f32 %v4373, %v4118
    %v4679 = vmul.f32 %v4378, %v4119
    %v4680 = vmul.f32 %v4383, %v4120
    %v4681 = vmul.f32 %v4388, %v4121
    %v4682 = vmul.f32 %v4393, %v4122
    %v4683 = vmul.f32 %v4398, %v4123
    %v4684 = vmul.f32 %v4403, %v4124
    %v4685 = vmul.f32 %v4408, %v4125
    %v4686 = vmul.f32 %v4413, %v4126
    %v4687 = vmul.f32 %v4418, %v4127
    %v4688 = vmul.f32 %v4423, %v4128
    %v4689 = vmul.f32 %v4428, %v4129
    %v4690 = vmul.f32 %v4433, %v4130
    %v4691 = vmul.f32 %v4438, %v4131
    %v4692 = vmul.f32 %v4443, %v4132
    %v4693 = vmul.f32 %v4448, %v4133
    %v4694 = vmul.f32 %v4453, %v4134
    %v4695 = vmul.f32 %v4458, %v4135
    %v4696 = vmul.f32 %v4463, %v4136
    %v4697 = vmul.f32 %v4468, %v4137
    %v4698 = vmul.f32 %v4473, %v4138
    %v4699 = vmul.f32 %v4478, %v4139
    %v4700 = vmul.f32 %v4483, %v4140
    %v4701 = vmul.f32 %v4488, %v4141
    %v4702 = vmul.f32 %v4493, %v4142
    %v4703 = vmul.f32 %v4498, %v4143
    %v4704 = vmul.f32 %v4503, %v4144
    %v4705 = vmul.f32 %v4508, %v4145
    %v4706 = vmul.f32 %v4513, %v4146
    %v4707 = vmul.f32 %v4518, %v4147
    %v4708 = vmul.f32 %v4523, %v4148
    %v4709 = vmul.f32 %v4528, %v4149
    %v4710 = vmul.f32 %v4533, %v4150
    %v4711 = vmul.f32 %v4538, %v4151
    %v4712 = vmul.f32 %v4543, %v4152
    %v4713 = vmul.f32 %v4548, %v4153
    %v4714 = vmul.f32 %v4553, %v4154
    %v4715 = vmul.f32 %v4558, %v4155
    %v4716 = vmul.f32 %v4563, %v4156
    %v4717 = vmul.f32 %v4568, %v4157
    %v4718 = vmul.f32 %v4573, %v4158
    %v4719 = vmul.f32 %v4578, %v4159
    %v4720 = vmul.f32 %v4583, %v4160
    %v4721 = vmul.f32 %v4588, %v4161
    %v4722 = vmul.f32 %v4593, %v4162
    %v4723 = vmul.f32 %v4598, %v4163
    %v4724 = vmul.f32 %v4603, %v4164
    %v4725 = vmul.f32 %v4608, %v4165
    %v4726 = vmul.f32 %v4613, %v4166
    %v4727 = vmul.f32 %v4618, %v4167
    %v4728 = vmul.f32 %v4623, %v4168
    %v4729 = vmul.f32 %v4628, %v4169
    %v4730 = vmul.f32 %v4633, %v4170
    %v4731 = vmul.f32 %v4638, %v4171
    %v4732 = vmul.f32 %v4643, %v4172
    %v4733 = vmul.f32 %v4648, %v4173
    %v4734 = vmul.f32 %v4653, %v4174
    %v4735 = vadd.f32 %v4655, %v4656
    %v4736 = vadd.f32 %v4735, %v4657
    %v4737 = vadd.f32 %v4736, %v4658
    %v4738 = vadd.f32 %v4737, %v4659
    %v4739 = vadd.f32 %v4738, %v4660
    %v4740 = vadd.f32 %v4739, %v4661
    %v4741 = vadd.f32 %v4740, %v4662
    %v4742 = vadd.f32 %v4741, %v4663
    %v4743 = vadd.f32 %v4742, %v4664
    %v4744 = vadd.f32 %v4743, %v4665
    %v4745 = vadd.f32 %v4744, %v4666
    %v4746 = vadd.f32 %v4745, %v4667
    %v4747 = vadd.f32 %v4746, %v4668
    %v4748 = vadd.f32 %v4747, %v4669
    %v4749 = vadd.f32 %v4748, %v4670
    %v4750 = vadd.f32 %v4749, %v4671
    %v4751 = vadd.f32 %v4750, %v4672
    %v4752 = vadd.f32 %v4751, %v4673
    %v4753 = vadd.f32 %v4752, %v4674
    %v4754 = vadd.f32 %v4753, %v4675
    %v4755 = vadd.f32 %v4754, %v4676
    %v4756 = vadd.f32 %v4755, %v4677
    %v4757 = vadd.f32 %v4756, %v4678
    %v4758 = vadd.f32 %v4757, %v4679
    %v4759 = vadd.f32 %v4758, %v4680
    %v4760 = vadd.f32 %v4759, %v4681
    %v4761 = vadd.f32 %v4760, %v4682
    %v4762 = vadd.f32 %v4761, %v4683
    %v4763 = vadd.f32 %v4762, %v4684
    %v4764 = vadd.f32 %v4763, %v4685
    %v4765 = vadd.f32 %v4764, %v4686
    %v4766 = vadd.f32 %v4765, %v4687
    %v4767 = vadd.f32 %v4766, %v4688
    %v4768 = vadd.f32 %v4767, %v4689
    %v4769 = vadd.f32 %v4768, %v4690
    %v4770 = vadd.f32 %v4769, %v4691
    %v4771 = vadd.f32 %v4770, %v4692
    %v4772 = vadd.f32 %v4771, %v4693
    %v4773 = vadd.f32 %v4772, %v4694
    %v4774 = vadd.f32 %v4773, %v4695
    %v4775 = vadd.f32 %v4774, %v4696
    %v4776 = vadd.f32 %v4775, %v4697
    %v4777 = vadd.f32 %v4776, %v4698
    %v4778 = vadd.f32 %v4777, %v4699
    %v4779 = vadd.f32 %v4778, %v4700
    %v4780 = vadd.f32 %v4779, %v4701
    %v4781 = vadd.f32 %v4780, %v4702
    %v4782 = vadd.f32 %v4781, %v4703
    %v4783 = vadd.f32 %v4782, %v4704
    %v4784 = vadd.f32 %v4783, %v4705
    %v4785 = vadd.f32 %v4784, %v4706
    %v4786 = vadd.f32 %v4785, %v4707
    %v4787 = vadd.f32 %v4786, %v4708
    %v4788 = vadd.f32 %v4787, %v4709
    %v4789 = vadd.f32 %v4788, %v4710
    %v4790 = vadd.f32 %v4789, %v4711
    %v4791 = vadd.f32 %v4790, %v4712
    %v4792 = vadd.f32 %v4791, %v4713
    %v4793 = vadd.f32 %v4792, %v4714
    %v4794 = vadd.f32 %v4793, %v4715
    %v4795 = vadd.f32 %v4794, %v4716
    %v4796 = vadd.f32 %v4795, %v4717
    %v4797 = vadd.f32 %v4796, %v4718
    %v4798 = vadd.f32 %v4797, %v4719
    %v4799 = vadd.f32 %v4798, %v4720
    %v4800 = vadd.f32 %v4799, %v4721
    %v4801 = vadd.f32 %v4800, %v4722
    %v4802 = vadd.f32 %v4801, %v4723
    %v4803 = vadd.f32 %v4802, %v4724
    %v4804 = vadd.f32 %v4803, %v4725
    %v4805 = vadd.f32 %v4804, %v4726
    %v4806 = vadd.f32 %v4805, %v4727
    %v4807 = vadd.f32 %v4806, %v4728
    %v4808 = vadd.f32 %v4807, %v4729
    %v4809 = vadd.f32 %v4808, %v4730
    %v4810 = vadd.f32 %v4809, %v4731
    %v4811 = vadd.f32 %v4810, %v4732
    %v4812 = vadd.f32 %v4811, %v4733
    %v4813 = vadd.f32 %v4812, %v4734
    %v4814 = vrot.slane %v4813, 4
    %v4815 = vadd.f32 %v4813, %v4814
    %v4816 = vrot.slane %v4815, 2
    %v4817 = vadd.f32 %v4815, %v4816
    %v4818 = vrot.slane %v4817, 1
    %v4819 = vadd.f32 %v4817, %v4818
    %s4820 = sld [smem:[#allocation2]]
    %v4821 = vstv %s4820
    %v4822 = vadd.f32 %v4819, %v4821
    %4823 = vst [vmem:[#allocation3] sm:$0x1] %v4822
    // Predicated region
    $region30: #{tpu_custom_call.1} parent=1 // pred_check
      _
    $region31: #{tpu_custom_call.1} parent=1 // pred_check_branch
      %4825 = sbr.rel (0) target = $region33
    $region32: #{tpu_custom_call.1} parent=1 // pred_region
      %s4827 = ssub.s32 16, 16
      %4828 = vsyncadd [#allocation4], %s4827
      %s4830 = sshll.u32 [#allocation3], 4
      %s4831 = int_to_ptr.vmem [resolvable:$true] %s4830
      %4833 = dma.vmem_to_hbm [thread:$0]  %s4831, 16, %s7, [#allocation4]
    $region33: #{tpu_custom_call.1} parent=1 // pred_fallthru
      _
    // Predicated region
    $region34: #{tpu_custom_call.1} parent=1 // pred_check
      _
    $region35: #{tpu_custom_call.1} parent=1 // pred_check_branch
      %4835 = sbr.rel (0) target = $region37
    $region36: #{tpu_custom_call.1} parent=1 // pred_region
      %4836 = dma.done [#allocation4], 16
    $region37: #{tpu_custom_call.1} parent=1 // pred_fallthru
      _
    %4837 = vsyncpa [#allocation4], 1

</llo_original>
